<compile_context>
chip_gen: v7x
topology: tpu7x:2x2x1
jax: 0.10.0
libtpu: 0.0.40
codegen_flags: <defaults>
</compile_context>

<pallas_src>
from functools import partial

import numpy as np

import jax
import jax.numpy as jnp
from jax import lax
from jax.experimental import pallas as pl
from jax.experimental.pallas import tpu as pltpu


C1, C2 = 6, 16          # conv output channels
L1 = C1 * 28            # conv1 out lanes  (168) : lane = co*28 + ox
L1P = C1 * 14           # pool1 out lanes  (84)  : lane = co*14 + px
L2 = C2 * 10            # conv2 out lanes  (160) : lane = co*10 + ox
L2P = C2 * 5            # pool2 out lanes  (80)  : lane = co*5  + px
FCP = 128               # fc width padded to one lane tile


# ------------------------------ fused kernel --------------------------------

def _lenet5_fused_kernel(x_ref, m1_ref, b1_ref, sy1_ref, sx1_ref,
                         m2_ref, b2_ref, sy2_ref, sx2_ref, g_ref,
                         w1_ref, fb1_ref, w2_ref, fb2_ref, w3_ref, fb3_ref,
                         o_ref):
    f32, bf16 = jnp.float32, jnp.bfloat16
    B = o_ref.shape[0]          # images per grid step
    R1 = B * 32                 # stacked conv1 rows (32/row-block, 28 valid)
    R2 = B * 16                 # stacked conv2 rows (16/row-block, 10 valid)

    x2d = x_ref[...]            # (B*32+16, 28) bf16, pre-padded in wrapper

    # ---- conv1 (1->6, 5x5, pad=2): 5 row-tap MXU matmuls over the stacked
    #      slab.  Per image only output rows 0..27 of each 32-row block are
    #      valid; the pool selectors never touch the garbage rows. ----
    acc1 = jnp.zeros((R1, L1), f32)
    for ky in range(5):
        acc1 = acc1 + jnp.dot(x2d[ky:ky + R1, :], m1_ref[ky],
                              preferred_element_type=f32)
    a1 = jnp.maximum(acc1 + b1_ref[...], 0.0).astype(bf16)      # (B*32, 168)

    # ---- maxpool1 2x2/2 via block-diagonal 0/1 selection matmuls ----
    ym = jnp.maximum(jnp.dot(sy1_ref[0], a1, preferred_element_type=f32),
                     jnp.dot(sy1_ref[1], a1, preferred_element_type=f32))
    ym = ym.astype(bf16)                                         # (B*16+8, 168)
    p1 = jnp.maximum(jnp.dot(ym, sx1_ref[0], preferred_element_type=f32),
                     jnp.dot(ym, sx1_ref[1], preferred_element_type=f32))
    p1 = p1.astype(bf16)          # (B*16+8, 84), lane = ci*14+px, 14 valid rows

    # ---- conv2 (6->16, 5x5, valid): 5 row-tap matmuls ----
    acc2 = jnp.zeros((R2, L2), f32)
    for ky in range(5):
        acc2 = acc2 + jnp.dot(p1[ky:ky + R2, :], m2_ref[ky],
                              preferred_element_type=f32)
    a2 = jnp.maximum(acc2 + b2_ref[...], 0.0).astype(bf16)       # (B*16, 160)

    # ---- maxpool2 ----
    ym2 = jnp.maximum(jnp.dot(sy2_ref[0], a2, preferred_element_type=f32),
                      jnp.dot(sy2_ref[1], a2, preferred_element_type=f32))
    ym2 = ym2.astype(bf16)                                       # (B*8, 160)
    p2 = jnp.maximum(jnp.dot(ym2, sx2_ref[0], preferred_element_type=f32),
                     jnp.dot(ym2, sx2_ref[1], preferred_element_type=f32))
    p2 = p2.astype(bf16)          # (B*8, 80), lane = co*5+px, 5 valid rows

    # ---- fc1 400->120 (padded to 128 lanes), batched (B,128):
    #      per tap py, gather row py of every image with a 0/1 selection
    #      matmul (keeps the shuffle on the idle MXU), then one
    #      (B,80)@(80,128) matmul. ----
    h = jnp.zeros((B, FCP), f32)
    for py in range(5):
        lhs = jnp.dot(g_ref[py], p2, preferred_element_type=f32).astype(bf16)
        h = h + jnp.dot(lhs, w1_ref[py * 80:(py + 1) * 80, :],
                        preferred_element_type=f32)
    h = jnp.maximum(h + fb1_ref[...], 0.0).astype(bf16)

    # ---- fc2 120->84 (padded), batched ----
    h = jnp.maximum(jnp.dot(h, w2_ref[...], preferred_element_type=f32)
                    + fb2_ref[...], 0.0).astype(bf16)

    # ---- fc3 84->10 (padded; pad lanes carry -1e30 bias so exp() == 0) ----
    logits = jnp.dot(h, w3_ref[...], preferred_element_type=f32) + fb3_ref[...]

    # ---- softmax(dim=1), fused epilogue (f32), lane-dense (B,128) store ----
    m = jnp.max(logits, axis=-1, keepdims=True)
    e = jnp.exp(logits - m)
    o_ref[...] = e / jnp.sum(e, axis=-1, keepdims=True)


# ------------------------------ wrapper --------------------------------------

def lenet5_predict(packed, x, batch_block=8):
    """x: (N, 1, 28, 28) float32 -> softmax probabilities (N, 10)."""
    n = x.shape[0]
    B = batch_block
    ngroups = -(-n // B)
    npad = ngroups * B
    hpad = B * 32 + 16          # stacked rows per group (+16: conv1 spill pad,
                                # keeps the bf16 block sublane-aligned)

    # Padding + f32->bf16 cast done once here (free XLA layout plumbing).
    xg = x.reshape(n, 28, 28)
    if npad != n:
        xg = jnp.pad(xg, ((0, npad - n), (0, 0), (0, 0)))
    xg = jnp.pad(xg, ((0, 0), (2, 2), (0, 0)))                  # (npad, 32, 28)
    xg = xg.reshape(ngroups, B * 32, 28)
    xg = jnp.pad(xg, ((0, 0), (0, 16), (0, 0)))                 # (ngroups, hpad, 28)
    xg = xg.reshape(ngroups * hpad, 28).astype(jnp.bfloat16)

    full2 = lambda i: (0, 0)
    full3 = lambda i: (0, 0, 0)
    out = pl.pallas_call(
        _lenet5_fused_kernel,
        out_shape=jax.ShapeDtypeStruct((npad, FCP), jnp.float32),
        grid=(ngroups,),
        in_specs=[
            pl.BlockSpec((hpad, 28), lambda i: (i, 0)),           # stacked imgs
            # constant weights (small, resident in VMEM; VMEM is not the
            # constraint here so default buffering is fine):
            pl.BlockSpec(packed["M1"].shape, full3),
            pl.BlockSpec(packed["b1row"].shape, full2),
            pl.BlockSpec(packed["SY1"].shape, full3),
            pl.BlockSpec(packed["SX1"].shape, full3),
            pl.BlockSpec(packed["M2"].shape, full3),
            pl.BlockSpec(packed["b2row"].shape, full2),
            pl.BlockSpec(packed["SY2"].shape, full3),
            pl.BlockSpec(packed["SX2"].shape, full3),
            pl.BlockSpec(packed["G"].shape, full3),
            pl.BlockSpec(packed["W1"].shape, full2),
            pl.BlockSpec(packed["fb1"].shape, full2),
            pl.BlockSpec(packed["W2"].shape, full2),
            pl.BlockSpec(packed["fb2"].shape, full2),
            pl.BlockSpec(packed["W3"].shape, full2),
            pl.BlockSpec(packed["fb3"].shape, full2),
        ],
        out_specs=pl.BlockSpec((B, FCP), lambda i: (i, 0)),       # lane-dense
        compiler_params=pltpu.CompilerParams(
            dimension_semantics=("parallel",)),                   # v7x: 2 TCs
    )(xg, packed["M1"], packed["b1row"], packed["SY1"], packed["SX1"],
      packed["M2"], packed["b2row"], packed["SY2"], packed["SX2"],
      packed["G"], packed["W1"], packed["fb1"], packed["W2"], packed["fb2"],
      packed["W3"], packed["fb3"])
    return out[:n, :10]


# --------------------------- parameter packing --------------------------------

def init_params(key):
    ks = jax.random.split(key, 10)
    s = 0.05
    return {
        "conv1_w": jax.random.normal(ks[0], (6, 1, 5, 5), jnp.float32) * s,
        "conv1_b": jax.random.normal(ks[1], (6,), jnp.float32) * s,
        "conv2_w": jax.random.normal(ks[2], (16, 6, 5, 5), jnp.float32) * s,
        "conv2_b": jax.random.normal(ks[3], (16,), jnp.float32) * s,
        "fc1_w": jax.random.normal(ks[4], (120, 400), jnp.float32) * s,
        "fc1_b": jax.random.normal(ks[5], (120,), jnp.float32) * s,
        "fc2_w": jax.random.normal(ks[6], (84, 120), jnp.float32) * s,
        "fc2_b": jax.random.normal(ks[7], (84,), jnp.float32) * s,
        "fc3_w": jax.random.normal(ks[8], (10, 84), jnp.float32) * s,
        "fc3_b": jax.random.normal(ks[9], (10,), jnp.float32) * s,
    }


def pack_params(p, batch_block):
    """One-time repack of torch-layout weights into kernel-friendly matrices."""
    B = batch_block
    w1 = np.asarray(p["conv1_w"], np.float32)
    b1 = np.asarray(p["conv1_b"], np.float32)
    w2 = np.asarray(p["conv2_w"], np.float32)
    b2 = np.asarray(p["conv2_b"], np.float32)
    f1w = np.asarray(p["fc1_w"], np.float32)
    f1b = np.asarray(p["fc1_b"], np.float32)
    f2w = np.asarray(p["fc2_w"], np.float32)
    f2b = np.asarray(p["fc2_b"], np.float32)
    f3w = np.asarray(p["fc3_w"], np.float32)
    f3b = np.asarray(p["fc3_b"], np.float32)

    # conv1 row-tap matrices: out lane = co*28 + ox; horizontal pad=2 folded in.
    M1 = np.zeros((5, 28, L1), np.float32)
    for ky in range(5):
        for co in range(C1):
            for ox in range(28):
                for kx in range(5):
                    x = ox + kx - 2
                    if 0 <= x < 28:
                        M1[ky, x, co * 28 + ox] = w1[co, 0, ky, kx]
    b1row = np.zeros((1, L1), np.float32)
    for co in range(C1):
        b1row[0, co * 28:(co + 1) * 28] = b1[co]

    # pool1 selectors. Row selector is block-diagonal over the B stacked
    # images: 32 conv rows / 16 pool rows (14 valid) per image; 8 trailing
    # zero rows so conv2's row taps never read out of range.
    SY1 = np.zeros((2, B * 16 + 8, B * 32), np.float32)
    for d in range(2):
        for b in range(B):
            for py in range(14):
                SY1[d, b * 16 + py, b * 32 + 2 * py + d] = 1.0
    SX1 = np.zeros((2, L1, L1P), np.float32)
    for d in range(2):
        for co in range(C1):
            for px in range(14):
                SX1[d, co * 28 + 2 * px + d, co * 14 + px] = 1.0

    # conv2 row-tap matrices: in lane = ci*14 + x, out lane = co*10 + ox.
    M2 = np.zeros((5, L1P, L2), np.float32)
    for ky in range(5):
        for co in range(C2):
            for ci in range(C1):
                for ox in range(10):
                    for kx in range(5):
                        M2[ky, ci * 14 + ox + kx, co * 10 + ox] = w2[co, ci, ky, kx]
    b2row = np.zeros((1, L2), np.float32)
    for co in range(C2):
        b2row[0, co * 10:(co + 1) * 10] = b2[co]

    # pool2 selectors: 16 conv2 rows / 8 pool rows (5 valid) per image.
    SY2 = np.zeros((2, B * 8, B * 16), np.float32)
    for d in range(2):
        for b in range(B):
            for py in range(5):
                SY2[d, b * 8 + py, b * 16 + 2 * py + d] = 1.0
    SX2 = np.zeros((2, L2, L2P), np.float32)
    for d in range(2):
        for co in range(C2):
            for px in range(5):
                SX2[d, co * 10 + 2 * px + d, co * 5 + px] = 1.0

    # fc1 row-gather selectors: G[py][b, b*8 + py] = 1 picks row py of every
    # image so fc1 runs as a batched (B,80)@(80,128) matmul per tap.
    G = np.zeros((5, B, B * 8), np.float32)
    for py in range(5):
        for b in range(B):
            G[py, b, b * 8 + py] = 1.0

    # fc1: rows match pooled2 layout (row = py*80 + co*5 + px); torch flatten
    # order (co*25 + py*5 + px) folded in; N padded 120->128.
    W1p = np.zeros((400, FCP), np.float32)
    for py in range(5):
        for co in range(C2):
            for px in range(5):
                W1p[py * 80 + co * 5 + px, :120] = f1w[:, co * 25 + py * 5 + px]
    fb1 = np.zeros((1, FCP), np.float32)
    fb1[0, :120] = f1b

    W2p = np.zeros((FCP, FCP), np.float32)
    W2p[:120, :84] = f2w.T
    fb2 = np.zeros((1, FCP), np.float32)
    fb2[0, :84] = f2b

    W3p = np.zeros((FCP, FCP), np.float32)
    W3p[:84, :10] = f3w.T
    fb3 = np.full((1, FCP), -1e30, np.float32)   # pad logits -> exp() == 0
    fb3[0, :10] = f3b

    bf = lambda a: jnp.asarray(a, jnp.bfloat16)
    fl = lambda a: jnp.asarray(a, jnp.float32)
    return {
        "M1": bf(M1), "b1row": fl(b1row), "SY1": bf(SY1), "SX1": bf(SX1),
        "M2": bf(M2), "b2row": fl(b2row), "SY2": bf(SY2), "SX2": bf(SX2),
        "G": bf(G),
        "W1": bf(W1p), "fb1": fl(fb1),
        "W2": bf(W2p), "fb2": fl(fb2),
        "W3": bf(W3p), "fb3": fl(fb3),
    }


# --------------------------- pure-JAX reference --------------------------------

def lenet5_ref(p, x):
    """Float32 reference: LeNet-5 forward + Softmax(dim=1)."""
    dn = ("NCHW", "OIHW", "NCHW")
    y = lax.conv_general_dilated(x, p["conv1_w"], (1, 1), ((2, 2), (2, 2)),
                                 dimension_numbers=dn)
    y = jax.nn.relu(y + p["conv1_b"][None, :, None, None])
    y = lax.reduce_window(y, -jnp.inf, lax.max, (1, 1, 2, 2), (1, 1, 2, 2),
                          "VALID")
    y = lax.conv_general_dilated(y, p["conv2_w"], (1, 1), ((0, 0), (0, 0)),
                                 dimension_numbers=dn)
    y = jax.nn.relu(y + p["conv2_b"][None, :, None, None])
    y = lax.reduce_window(y, -jnp.inf, lax.max, (1, 1, 2, 2), (1, 1, 2, 2),
                          "VALID")
    y = y.reshape(x.shape[0], -1)                       # torch flatten order
    y = jax.nn.relu(y @ p["fc1_w"].T + p["fc1_b"])
    y = jax.nn.relu(y @ p["fc2_w"].T + p["fc2_b"])
    logits = y @ p["fc3_w"].T + p["fc3_b"]
    return jax.nn.softmax(logits, axis=1)


# --------------------------------- main ---------------------------------------

if __name__ == "__main__":
    key = jax.random.PRNGKey(0)
    k_params, k_x = jax.random.split(key)
    params = init_params(k_params)

    B = 8                      # images per grid step (~fills v6e/v7x MXU rows)
    packed = pack_params(params, B)

    # LeNet-5 requires 28x28 single-channel inputs for the 400-dim flatten.
    n = 16                     # grid = (2,): even, keeps both v7x TCs busy
    x = jax.random.normal(k_x, (n, 1, 28, 28), jnp.float32)

    fwd = jax.jit(partial(lenet5_predict, batch_block=B))
    probs = jax.block_until_ready(fwd(packed, x))

    # sanity: shape, valid softmax rows, and agreement with f32 reference
    assert probs.shape == (n, 10)
    row_sums = jnp.sum(probs, axis=1)
    assert bool(jnp.all(jnp.abs(row_sums - 1.0) < 1e-4))
    assert bool(jnp.all(probs >= 0.0))
    ref = jax.jit(lenet5_ref)(params, x)
    err = float(jnp.max(jnp.abs(probs - ref)))
    assert err < 2e-2, f"max |probs - ref| = {err}"   # bf16 matmuls, f32 accum

    print("KERNEL_OK")
</pallas_src>

<mosaic_0001>
module attributes {stable_mosaic.version = 11 : i64} {
  func.func @_lenet5_fused_kernel(%arg0: i32, %arg1: memref<272x28xbf16, #tpu.memory_space<vmem>>, %arg2: memref<5x28x168xbf16, #tpu.memory_space<vmem>>, %arg3: memref<1x168xf32, #tpu.memory_space<vmem>>, %arg4: memref<2x136x256xbf16, #tpu.memory_space<vmem>>, %arg5: memref<2x168x84xbf16, #tpu.memory_space<vmem>>, %arg6: memref<5x84x160xbf16, #tpu.memory_space<vmem>>, %arg7: memref<1x160xf32, #tpu.memory_space<vmem>>, %arg8: memref<2x64x128xbf16, #tpu.memory_space<vmem>>, %arg9: memref<2x160x80xbf16, #tpu.memory_space<vmem>>, %arg10: memref<5x8x64xbf16, #tpu.memory_space<vmem>>, %arg11: memref<400x128xbf16, #tpu.memory_space<vmem>>, %arg12: memref<1x128xf32, #tpu.memory_space<vmem>>, %arg13: memref<128x128xbf16, #tpu.memory_space<vmem>>, %arg14: memref<1x128xf32, #tpu.memory_space<vmem>>, %arg15: memref<128x128xbf16, #tpu.memory_space<vmem>>, %arg16: memref<1x128xf32, #tpu.memory_space<vmem>>, %arg17: memref<8x128xf32, #tpu.memory_space<vmem>>) attributes {dimension_semantics = [#tpu.dimension_semantics<parallel>], iteration_bounds = array<i64: 2>, scalar_prefetch = 0 : i64, scratch_operands = 0 : i64, tpu.core_type = #tpu.core_type<tc>, window_params = [{transform_indices = @transform_0, window_bounds = array<i64: 272, 28>}, {pipeline_mode = #tpu.pipeline_mode<synchronous>, transform_indices = @transform_1, window_bounds = array<i64: 5, 28, 168>}, {pipeline_mode = #tpu.pipeline_mode<synchronous>, transform_indices = @transform_2, window_bounds = array<i64: 1, 168>}, {pipeline_mode = #tpu.pipeline_mode<synchronous>, transform_indices = @transform_3, window_bounds = array<i64: 2, 136, 256>}, {pipeline_mode = #tpu.pipeline_mode<synchronous>, transform_indices = @transform_4, window_bounds = array<i64: 2, 168, 84>}, {pipeline_mode = #tpu.pipeline_mode<synchronous>, transform_indices = @transform_5, window_bounds = array<i64: 5, 84, 160>}, {pipeline_mode = #tpu.pipeline_mode<synchronous>, transform_indices = @transform_6, window_bounds = array<i64: 1, 160>}, {pipeline_mode = #tpu.pipeline_mode<synchronous>, transform_indices = @transform_7, window_bounds = array<i64: 2, 64, 128>}, {pipeline_mode = #tpu.pipeline_mode<synchronous>, transform_indices = @transform_8, window_bounds = array<i64: 2, 160, 80>}, {pipeline_mode = #tpu.pipeline_mode<synchronous>, transform_indices = @transform_9, window_bounds = array<i64: 5, 8, 64>}, {pipeline_mode = #tpu.pipeline_mode<synchronous>, transform_indices = @transform_10, window_bounds = array<i64: 400, 128>}, {pipeline_mode = #tpu.pipeline_mode<synchronous>, transform_indices = @transform_11, window_bounds = array<i64: 1, 128>}, {pipeline_mode = #tpu.pipeline_mode<synchronous>, transform_indices = @transform_12, window_bounds = array<i64: 128, 128>}, {pipeline_mode = #tpu.pipeline_mode<synchronous>, transform_indices = @transform_13, window_bounds = array<i64: 1, 128>}, {pipeline_mode = #tpu.pipeline_mode<synchronous>, transform_indices = @transform_14, window_bounds = array<i64: 128, 128>}, {pipeline_mode = #tpu.pipeline_mode<synchronous>, transform_indices = @transform_15, window_bounds = array<i64: 1, 128>}, {transform_indices = @transform_16, window_bounds = array<i64: 8, 128>}]} {
    %c0 = arith.constant 0 : index
    %c0_0 = arith.constant 0 : index
    %0 = vector.load %arg1[%c0, %c0_0] : memref<272x28xbf16, #tpu.memory_space<vmem>>, vector<272x28xbf16>
    %cst = arith.constant 0.000000e+00 : f32
    %1 = vector.broadcast %cst : f32 to vector<256x168xf32>
    %2 = vector.extract_strided_slice %0 {offsets = [0, 0], sizes = [256, 28], strides = [1, 1]} : vector<272x28xbf16> to vector<256x28xbf16>
    %c0_1 = arith.constant 0 : index
    %c0_2 = arith.constant 0 : index
    %c0_3 = arith.constant 0 : index
    %3 = vector.load %arg2[%c0_1, %c0_2, %c0_3] : memref<5x28x168xbf16, #tpu.memory_space<vmem>>, vector<1x28x168xbf16>
    %4 = vector.shape_cast %3 : vector<1x28x168xbf16> to vector<28x168xbf16>
    %cst_4 = arith.constant dense<0.000000e+00> : vector<256x168xf32>
    %5 = tpu.matmul %2, %4, %cst_4 {dimension_numbers = #tpu.dot_dimension_numbers<[1], [0], [0], [1], [0, 0, 1, 1], [], []>} : vector<256x28xbf16>, vector<28x168xbf16>, vector<256x168xf32> -> vector<256x168xf32>
    %6 = arith.addf %1, %5 : vector<256x168xf32>
    %7 = vector.extract_strided_slice %0 {offsets = [1, 0], sizes = [256, 28], strides = [1, 1]} : vector<272x28xbf16> to vector<256x28xbf16>
    %c1 = arith.constant 1 : index
    %c0_5 = arith.constant 0 : index
    %c0_6 = arith.constant 0 : index
    %8 = vector.load %arg2[%c1, %c0_5, %c0_6] : memref<5x28x168xbf16, #tpu.memory_space<vmem>>, vector<1x28x168xbf16>
    %9 = vector.shape_cast %8 : vector<1x28x168xbf16> to vector<28x168xbf16>
    %cst_7 = arith.constant dense<0.000000e+00> : vector<256x168xf32>
    %10 = tpu.matmul %7, %9, %cst_7 {dimension_numbers = #tpu.dot_dimension_numbers<[1], [0], [0], [1], [0, 0, 1, 1], [], []>} : vector<256x28xbf16>, vector<28x168xbf16>, vector<256x168xf32> -> vector<256x168xf32>
    %11 = arith.addf %6, %10 : vector<256x168xf32>
    %12 = vector.extract_strided_slice %0 {offsets = [2, 0], sizes = [256, 28], strides = [1, 1]} : vector<272x28xbf16> to vector<256x28xbf16>
    %c2 = arith.constant 2 : index
    %c0_8 = arith.constant 0 : index
    %c0_9 = arith.constant 0 : index
    %13 = vector.load %arg2[%c2, %c0_8, %c0_9] : memref<5x28x168xbf16, #tpu.memory_space<vmem>>, vector<1x28x168xbf16>
    %14 = vector.shape_cast %13 : vector<1x28x168xbf16> to vector<28x168xbf16>
    %cst_10 = arith.constant dense<0.000000e+00> : vector<256x168xf32>
    %15 = tpu.matmul %12, %14, %cst_10 {dimension_numbers = #tpu.dot_dimension_numbers<[1], [0], [0], [1], [0, 0, 1, 1], [], []>} : vector<256x28xbf16>, vector<28x168xbf16>, vector<256x168xf32> -> vector<256x168xf32>
    %16 = arith.addf %11, %15 : vector<256x168xf32>
    %17 = vector.extract_strided_slice %0 {offsets = [3, 0], sizes = [256, 28], strides = [1, 1]} : vector<272x28xbf16> to vector<256x28xbf16>
    %c3 = arith.constant 3 : index
    %c0_11 = arith.constant 0 : index
    %c0_12 = arith.constant 0 : index
    %18 = vector.load %arg2[%c3, %c0_11, %c0_12] : memref<5x28x168xbf16, #tpu.memory_space<vmem>>, vector<1x28x168xbf16>
    %19 = vector.shape_cast %18 : vector<1x28x168xbf16> to vector<28x168xbf16>
    %cst_13 = arith.constant dense<0.000000e+00> : vector<256x168xf32>
    %20 = tpu.matmul %17, %19, %cst_13 {dimension_numbers = #tpu.dot_dimension_numbers<[1], [0], [0], [1], [0, 0, 1, 1], [], []>} : vector<256x28xbf16>, vector<28x168xbf16>, vector<256x168xf32> -> vector<256x168xf32>
    %21 = arith.addf %16, %20 : vector<256x168xf32>
    %22 = vector.extract_strided_slice %0 {offsets = [4, 0], sizes = [256, 28], strides = [1, 1]} : vector<272x28xbf16> to vector<256x28xbf16>
    %c4 = arith.constant 4 : index
    %c0_14 = arith.constant 0 : index
    %c0_15 = arith.constant 0 : index
    %23 = vector.load %arg2[%c4, %c0_14, %c0_15] : memref<5x28x168xbf16, #tpu.memory_space<vmem>>, vector<1x28x168xbf16>
    %24 = vector.shape_cast %23 : vector<1x28x168xbf16> to vector<28x168xbf16>
    %cst_16 = arith.constant dense<0.000000e+00> : vector<256x168xf32>
    %25 = tpu.matmul %22, %24, %cst_16 {dimension_numbers = #tpu.dot_dimension_numbers<[1], [0], [0], [1], [0, 0, 1, 1], [], []>} : vector<256x28xbf16>, vector<28x168xbf16>, vector<256x168xf32> -> vector<256x168xf32>
    %26 = arith.addf %21, %25 : vector<256x168xf32>
    %c0_17 = arith.constant 0 : index
    %c0_18 = arith.constant 0 : index
    %27 = vector.load %arg3[%c0_17, %c0_18] : memref<1x168xf32, #tpu.memory_space<vmem>>, vector<1x168xf32>
    %28 = vector.broadcast %27 : vector<1x168xf32> to vector<256x168xf32>
    %29 = arith.addf %26, %28 : vector<256x168xf32>
    %cst_19 = arith.constant 0.000000e+00 : f32
    %30 = vector.broadcast %cst_19 : f32 to vector<256x168xf32>
    %31 = arith.maximumf %29, %30 : vector<256x168xf32>
    %32 = arith.truncf %31 : vector<256x168xf32> to vector<256x168xbf16>
    %c0_20 = arith.constant 0 : index
    %c0_21 = arith.constant 0 : index
    %c0_22 = arith.constant 0 : index
    %33 = vector.load %arg4[%c0_20, %c0_21, %c0_22] : memref<2x136x256xbf16, #tpu.memory_space<vmem>>, vector<1x136x256xbf16>
    %34 = vector.shape_cast %33 : vector<1x136x256xbf16> to vector<136x256xbf16>
    %cst_23 = arith.constant dense<0.000000e+00> : vector<136x168xf32>
    %35 = tpu.matmul %34, %32, %cst_23 {dimension_numbers = #tpu.dot_dimension_numbers<[1], [0], [0], [1], [0, 0, 1, 1], [], []>} : vector<136x256xbf16>, vector<256x168xbf16>, vector<136x168xf32> -> vector<136x168xf32>
    %c1_24 = arith.constant 1 : index
    %c0_25 = arith.constant 0 : index
    %c0_26 = arith.constant 0 : index
    %36 = vector.load %arg4[%c1_24, %c0_25, %c0_26] : memref<2x136x256xbf16, #tpu.memory_space<vmem>>, vector<1x136x256xbf16>
    %37 = vector.shape_cast %36 : vector<1x136x256xbf16> to vector<136x256xbf16>
    %cst_27 = arith.constant dense<0.000000e+00> : vector<136x168xf32>
    %38 = tpu.matmul %37, %32, %cst_27 {dimension_numbers = #tpu.dot_dimension_numbers<[1], [0], [0], [1], [0, 0, 1, 1], [], []>} : vector<136x256xbf16>, vector<256x168xbf16>, vector<136x168xf32> -> vector<136x168xf32>
    %39 = arith.maximumf %35, %38 : vector<136x168xf32>
    %40 = arith.truncf %39 : vector<136x168xf32> to vector<136x168xbf16>
    %c0_28 = arith.constant 0 : index
    %c0_29 = arith.constant 0 : index
    %c0_30 = arith.constant 0 : index
    %41 = vector.load %arg5[%c0_28, %c0_29, %c0_30] : memref<2x168x84xbf16, #tpu.memory_space<vmem>>, vector<1x168x84xbf16>
    %42 = vector.shape_cast %41 : vector<1x168x84xbf16> to vector<168x84xbf16>
    %cst_31 = arith.constant dense<0.000000e+00> : vector<136x84xf32>
    %43 = tpu.matmul %40, %42, %cst_31 {dimension_numbers = #tpu.dot_dimension_numbers<[1], [0], [0], [1], [0, 0, 1, 1], [], []>} : vector<136x168xbf16>, vector<168x84xbf16>, vector<136x84xf32> -> vector<136x84xf32>
    %c1_32 = arith.constant 1 : index
    %c0_33 = arith.constant 0 : index
    %c0_34 = arith.constant 0 : index
    %44 = vector.load %arg5[%c1_32, %c0_33, %c0_34] : memref<2x168x84xbf16, #tpu.memory_space<vmem>>, vector<1x168x84xbf16>
    %45 = vector.shape_cast %44 : vector<1x168x84xbf16> to vector<168x84xbf16>
    %cst_35 = arith.constant dense<0.000000e+00> : vector<136x84xf32>
    %46 = tpu.matmul %40, %45, %cst_35 {dimension_numbers = #tpu.dot_dimension_numbers<[1], [0], [0], [1], [0, 0, 1, 1], [], []>} : vector<136x168xbf16>, vector<168x84xbf16>, vector<136x84xf32> -> vector<136x84xf32>
    %47 = arith.maximumf %43, %46 : vector<136x84xf32>
    %48 = arith.truncf %47 : vector<136x84xf32> to vector<136x84xbf16>
    %cst_36 = arith.constant 0.000000e+00 : f32
    %49 = vector.broadcast %cst_36 : f32 to vector<128x160xf32>
    %50 = vector.extract_strided_slice %48 {offsets = [0, 0], sizes = [128, 84], strides = [1, 1]} : vector<136x84xbf16> to vector<128x84xbf16>
    %c0_37 = arith.constant 0 : index
    %c0_38 = arith.constant 0 : index
    %c0_39 = arith.constant 0 : index
    %51 = vector.load %arg6[%c0_37, %c0_38, %c0_39] : memref<5x84x160xbf16, #tpu.memory_space<vmem>>, vector<1x84x160xbf16>
    %52 = vector.shape_cast %51 : vector<1x84x160xbf16> to vector<84x160xbf16>
    %cst_40 = arith.constant dense<0.000000e+00> : vector<128x160xf32>
    %53 = tpu.matmul %50, %52, %cst_40 {dimension_numbers = #tpu.dot_dimension_numbers<[1], [0], [0], [1], [0, 0, 1, 1], [], []>} : vector<128x84xbf16>, vector<84x160xbf16>, vector<128x160xf32> -> vector<128x160xf32>
    %54 = arith.addf %49, %53 : vector<128x160xf32>
    %55 = vector.extract_strided_slice %48 {offsets = [1, 0], sizes = [128, 84], strides = [1, 1]} : vector<136x84xbf16> to vector<128x84xbf16>
    %c1_41 = arith.constant 1 : index
    %c0_42 = arith.constant 0 : index
    %c0_43 = arith.constant 0 : index
    %56 = vector.load %arg6[%c1_41, %c0_42, %c0_43] : memref<5x84x160xbf16, #tpu.memory_space<vmem>>, vector<1x84x160xbf16>
    %57 = vector.shape_cast %56 : vector<1x84x160xbf16> to vector<84x160xbf16>
    %cst_44 = arith.constant dense<0.000000e+00> : vector<128x160xf32>
    %58 = tpu.matmul %55, %57, %cst_44 {dimension_numbers = #tpu.dot_dimension_numbers<[1], [0], [0], [1], [0, 0, 1, 1], [], []>} : vector<128x84xbf16>, vector<84x160xbf16>, vector<128x160xf32> -> vector<128x160xf32>
    %59 = arith.addf %54, %58 : vector<128x160xf32>
    %60 = vector.extract_strided_slice %48 {offsets = [2, 0], sizes = [128, 84], strides = [1, 1]} : vector<136x84xbf16> to vector<128x84xbf16>
    %c2_45 = arith.constant 2 : index
    %c0_46 = arith.constant 0 : index
    %c0_47 = arith.constant 0 : index
    %61 = vector.load %arg6[%c2_45, %c0_46, %c0_47] : memref<5x84x160xbf16, #tpu.memory_space<vmem>>, vector<1x84x160xbf16>
    %62 = vector.shape_cast %61 : vector<1x84x160xbf16> to vector<84x160xbf16>
    %cst_48 = arith.constant dense<0.000000e+00> : vector<128x160xf32>
    %63 = tpu.matmul %60, %62, %cst_48 {dimension_numbers = #tpu.dot_dimension_numbers<[1], [0], [0], [1], [0, 0, 1, 1], [], []>} : vector<128x84xbf16>, vector<84x160xbf16>, vector<128x160xf32> -> vector<128x160xf32>
    %64 = arith.addf %59, %63 : vector<128x160xf32>
    %65 = vector.extract_strided_slice %48 {offsets = [3, 0], sizes = [128, 84], strides = [1, 1]} : vector<136x84xbf16> to vector<128x84xbf16>
    %c3_49 = arith.constant 3 : index
    %c0_50 = arith.constant 0 : index
    %c0_51 = arith.constant 0 : index
    %66 = vector.load %arg6[%c3_49, %c0_50, %c0_51] : memref<5x84x160xbf16, #tpu.memory_space<vmem>>, vector<1x84x160xbf16>
    %67 = vector.shape_cast %66 : vector<1x84x160xbf16> to vector<84x160xbf16>
    %cst_52 = arith.constant dense<0.000000e+00> : vector<128x160xf32>
    %68 = tpu.matmul %65, %67, %cst_52 {dimension_numbers = #tpu.dot_dimension_numbers<[1], [0], [0], [1], [0, 0, 1, 1], [], []>} : vector<128x84xbf16>, vector<84x160xbf16>, vector<128x160xf32> -> vector<128x160xf32>
    %69 = arith.addf %64, %68 : vector<128x160xf32>
    %70 = vector.extract_strided_slice %48 {offsets = [4, 0], sizes = [128, 84], strides = [1, 1]} : vector<136x84xbf16> to vector<128x84xbf16>
    %c4_53 = arith.constant 4 : index
    %c0_54 = arith.constant 0 : index
    %c0_55 = arith.constant 0 : index
    %71 = vector.load %arg6[%c4_53, %c0_54, %c0_55] : memref<5x84x160xbf16, #tpu.memory_space<vmem>>, vector<1x84x160xbf16>
    %72 = vector.shape_cast %71 : vector<1x84x160xbf16> to vector<84x160xbf16>
    %cst_56 = arith.constant dense<0.000000e+00> : vector<128x160xf32>
    %73 = tpu.matmul %70, %72, %cst_56 {dimension_numbers = #tpu.dot_dimension_numbers<[1], [0], [0], [1], [0, 0, 1, 1], [], []>} : vector<128x84xbf16>, vector<84x160xbf16>, vector<128x160xf32> -> vector<128x160xf32>
    %74 = arith.addf %69, %73 : vector<128x160xf32>
    %c0_57 = arith.constant 0 : index
    %c0_58 = arith.constant 0 : index
    %75 = vector.load %arg7[%c0_57, %c0_58] : memref<1x160xf32, #tpu.memory_space<vmem>>, vector<1x160xf32>
    %76 = vector.broadcast %75 : vector<1x160xf32> to vector<128x160xf32>
    %77 = arith.addf %74, %76 : vector<128x160xf32>
    %cst_59 = arith.constant 0.000000e+00 : f32
    %78 = vector.broadcast %cst_59 : f32 to vector<128x160xf32>
    %79 = arith.maximumf %77, %78 : vector<128x160xf32>
    %80 = arith.truncf %79 : vector<128x160xf32> to vector<128x160xbf16>
    %c0_60 = arith.constant 0 : index
    %c0_61 = arith.constant 0 : index
    %c0_62 = arith.constant 0 : index
    %81 = vector.load %arg8[%c0_60, %c0_61, %c0_62] : memref<2x64x128xbf16, #tpu.memory_space<vmem>>, vector<1x64x128xbf16>
    %82 = vector.shape_cast %81 : vector<1x64x128xbf16> to vector<64x128xbf16>
    %cst_63 = arith.constant dense<0.000000e+00> : vector<64x160xf32>
    %83 = tpu.matmul %82, %80, %cst_63 {dimension_numbers = #tpu.dot_dimension_numbers<[1], [0], [0], [1], [0, 0, 1, 1], [], []>} : vector<64x128xbf16>, vector<128x160xbf16>, vector<64x160xf32> -> vector<64x160xf32>
    %c1_64 = arith.constant 1 : index
    %c0_65 = arith.constant 0 : index
    %c0_66 = arith.constant 0 : index
    %84 = vector.load %arg8[%c1_64, %c0_65, %c0_66] : memref<2x64x128xbf16, #tpu.memory_space<vmem>>, vector<1x64x128xbf16>
    %85 = vector.shape_cast %84 : vector<1x64x128xbf16> to vector<64x128xbf16>
    %cst_67 = arith.constant dense<0.000000e+00> : vector<64x160xf32>
    %86 = tpu.matmul %85, %80, %cst_67 {dimension_numbers = #tpu.dot_dimension_numbers<[1], [0], [0], [1], [0, 0, 1, 1], [], []>} : vector<64x128xbf16>, vector<128x160xbf16>, vector<64x160xf32> -> vector<64x160xf32>
    %87 = arith.maximumf %83, %86 : vector<64x160xf32>
    %88 = arith.truncf %87 : vector<64x160xf32> to vector<64x160xbf16>
    %c0_68 = arith.constant 0 : index
    %c0_69 = arith.constant 0 : index
    %c0_70 = arith.constant 0 : index
    %89 = vector.load %arg9[%c0_68, %c0_69, %c0_70] : memref<2x160x80xbf16, #tpu.memory_space<vmem>>, vector<1x160x80xbf16>
    %90 = vector.shape_cast %89 : vector<1x160x80xbf16> to vector<160x80xbf16>
    %cst_71 = arith.constant dense<0.000000e+00> : vector<64x80xf32>
    %91 = tpu.matmul %88, %90, %cst_71 {dimension_numbers = #tpu.dot_dimension_numbers<[1], [0], [0], [1], [0, 0, 1, 1], [], []>} : vector<64x160xbf16>, vector<160x80xbf16>, vector<64x80xf32> -> vector<64x80xf32>
    %c1_72 = arith.constant 1 : index
    %c0_73 = arith.constant 0 : index
    %c0_74 = arith.constant 0 : index
    %92 = vector.load %arg9[%c1_72, %c0_73, %c0_74] : memref<2x160x80xbf16, #tpu.memory_space<vmem>>, vector<1x160x80xbf16>
    %93 = vector.shape_cast %92 : vector<1x160x80xbf16> to vector<160x80xbf16>
    %cst_75 = arith.constant dense<0.000000e+00> : vector<64x80xf32>
    %94 = tpu.matmul %88, %93, %cst_75 {dimension_numbers = #tpu.dot_dimension_numbers<[1], [0], [0], [1], [0, 0, 1, 1], [], []>} : vector<64x160xbf16>, vector<160x80xbf16>, vector<64x80xf32> -> vector<64x80xf32>
    %95 = arith.maximumf %91, %94 : vector<64x80xf32>
    %96 = arith.truncf %95 : vector<64x80xf32> to vector<64x80xbf16>
    %cst_76 = arith.constant 0.000000e+00 : f32
    %97 = vector.broadcast %cst_76 : f32 to vector<8x128xf32>
    %c0_77 = arith.constant 0 : index
    %c0_78 = arith.constant 0 : index
    %c0_79 = arith.constant 0 : index
    %98 = vector.load %arg10[%c0_77, %c0_78, %c0_79] : memref<5x8x64xbf16, #tpu.memory_space<vmem>>, vector<1x8x64xbf16>
    %99 = vector.shape_cast %98 : vector<1x8x64xbf16> to vector<8x64xbf16>
    %cst_80 = arith.constant dense<0.000000e+00> : vector<8x80xf32>
    %100 = tpu.matmul %99, %96, %cst_80 {dimension_numbers = #tpu.dot_dimension_numbers<[1], [0], [0], [1], [0, 0, 1, 1], [], []>} : vector<8x64xbf16>, vector<64x80xbf16>, vector<8x80xf32> -> vector<8x80xf32>
    %101 = arith.truncf %100 : vector<8x80xf32> to vector<8x80xbf16>
    %c0_81 = arith.constant 0 : index
    %c0_82 = arith.constant 0 : index
    %102 = vector.load %arg11[%c0_81, %c0_82] : memref<400x128xbf16, #tpu.memory_space<vmem>>, vector<80x128xbf16>
    %cst_83 = arith.constant dense<0.000000e+00> : vector<8x128xf32>
    %103 = tpu.matmul %101, %102, %cst_83 {dimension_numbers = #tpu.dot_dimension_numbers<[1], [0], [0], [1], [0, 0, 1, 1], [], []>} : vector<8x80xbf16>, vector<80x128xbf16>, vector<8x128xf32> -> vector<8x128xf32>
    %104 = arith.addf %97, %103 : vector<8x128xf32>
    %c1_84 = arith.constant 1 : index
    %c0_85 = arith.constant 0 : index
    %c0_86 = arith.constant 0 : index
    %105 = vector.load %arg10[%c1_84, %c0_85, %c0_86] : memref<5x8x64xbf16, #tpu.memory_space<vmem>>, vector<1x8x64xbf16>
    %106 = vector.shape_cast %105 : vector<1x8x64xbf16> to vector<8x64xbf16>
    %cst_87 = arith.constant dense<0.000000e+00> : vector<8x80xf32>
    %107 = tpu.matmul %106, %96, %cst_87 {dimension_numbers = #tpu.dot_dimension_numbers<[1], [0], [0], [1], [0, 0, 1, 1], [], []>} : vector<8x64xbf16>, vector<64x80xbf16>, vector<8x80xf32> -> vector<8x80xf32>
    %108 = arith.truncf %107 : vector<8x80xf32> to vector<8x80xbf16>
    %c80 = arith.constant 80 : index
    %c0_88 = arith.constant 0 : index
    %109 = vector.load %arg11[%c80, %c0_88] : memref<400x128xbf16, #tpu.memory_space<vmem>>, vector<80x128xbf16>
    %cst_89 = arith.constant dense<0.000000e+00> : vector<8x128xf32>
    %110 = tpu.matmul %108, %109, %cst_89 {dimension_numbers = #tpu.dot_dimension_numbers<[1], [0], [0], [1], [0, 0, 1, 1], [], []>} : vector<8x80xbf16>, vector<80x128xbf16>, vector<8x128xf32> -> vector<8x128xf32>
    %111 = arith.addf %104, %110 : vector<8x128xf32>
    %c2_90 = arith.constant 2 : index
    %c0_91 = arith.constant 0 : index
    %c0_92 = arith.constant 0 : index
    %112 = vector.load %arg10[%c2_90, %c0_91, %c0_92] : memref<5x8x64xbf16, #tpu.memory_space<vmem>>, vector<1x8x64xbf16>
    %113 = vector.shape_cast %112 : vector<1x8x64xbf16> to vector<8x64xbf16>
    %cst_93 = arith.constant dense<0.000000e+00> : vector<8x80xf32>
    %114 = tpu.matmul %113, %96, %cst_93 {dimension_numbers = #tpu.dot_dimension_numbers<[1], [0], [0], [1], [0, 0, 1, 1], [], []>} : vector<8x64xbf16>, vector<64x80xbf16>, vector<8x80xf32> -> vector<8x80xf32>
    %115 = arith.truncf %114 : vector<8x80xf32> to vector<8x80xbf16>
    %c160 = arith.constant 160 : index
    %c0_94 = arith.constant 0 : index
    %116 = vector.load %arg11[%c160, %c0_94] : memref<400x128xbf16, #tpu.memory_space<vmem>>, vector<80x128xbf16>
    %cst_95 = arith.constant dense<0.000000e+00> : vector<8x128xf32>
    %117 = tpu.matmul %115, %116, %cst_95 {dimension_numbers = #tpu.dot_dimension_numbers<[1], [0], [0], [1], [0, 0, 1, 1], [], []>} : vector<8x80xbf16>, vector<80x128xbf16>, vector<8x128xf32> -> vector<8x128xf32>
    %118 = arith.addf %111, %117 : vector<8x128xf32>
    %c3_96 = arith.constant 3 : index
    %c0_97 = arith.constant 0 : index
    %c0_98 = arith.constant 0 : index
    %119 = vector.load %arg10[%c3_96, %c0_97, %c0_98] : memref<5x8x64xbf16, #tpu.memory_space<vmem>>, vector<1x8x64xbf16>
    %120 = vector.shape_cast %119 : vector<1x8x64xbf16> to vector<8x64xbf16>
    %cst_99 = arith.constant dense<0.000000e+00> : vector<8x80xf32>
    %121 = tpu.matmul %120, %96, %cst_99 {dimension_numbers = #tpu.dot_dimension_numbers<[1], [0], [0], [1], [0, 0, 1, 1], [], []>} : vector<8x64xbf16>, vector<64x80xbf16>, vector<8x80xf32> -> vector<8x80xf32>
    %122 = arith.truncf %121 : vector<8x80xf32> to vector<8x80xbf16>
    %c240 = arith.constant 240 : index
    %c0_100 = arith.constant 0 : index
    %123 = vector.load %arg11[%c240, %c0_100] : memref<400x128xbf16, #tpu.memory_space<vmem>>, vector<80x128xbf16>
    %cst_101 = arith.constant dense<0.000000e+00> : vector<8x128xf32>
    %124 = tpu.matmul %122, %123, %cst_101 {dimension_numbers = #tpu.dot_dimension_numbers<[1], [0], [0], [1], [0, 0, 1, 1], [], []>} : vector<8x80xbf16>, vector<80x128xbf16>, vector<8x128xf32> -> vector<8x128xf32>
    %125 = arith.addf %118, %124 : vector<8x128xf32>
    %c4_102 = arith.constant 4 : index
    %c0_103 = arith.constant 0 : index
    %c0_104 = arith.constant 0 : index
    %126 = vector.load %arg10[%c4_102, %c0_103, %c0_104] : memref<5x8x64xbf16, #tpu.memory_space<vmem>>, vector<1x8x64xbf16>
    %127 = vector.shape_cast %126 : vector<1x8x64xbf16> to vector<8x64xbf16>
    %cst_105 = arith.constant dense<0.000000e+00> : vector<8x80xf32>
    %128 = tpu.matmul %127, %96, %cst_105 {dimension_numbers = #tpu.dot_dimension_numbers<[1], [0], [0], [1], [0, 0, 1, 1], [], []>} : vector<8x64xbf16>, vector<64x80xbf16>, vector<8x80xf32> -> vector<8x80xf32>
    %129 = arith.truncf %128 : vector<8x80xf32> to vector<8x80xbf16>
    %c320 = arith.constant 320 : index
    %c0_106 = arith.constant 0 : index
    %130 = vector.load %arg11[%c320, %c0_106] : memref<400x128xbf16, #tpu.memory_space<vmem>>, vector<80x128xbf16>
    %cst_107 = arith.constant dense<0.000000e+00> : vector<8x128xf32>
    %131 = tpu.matmul %129, %130, %cst_107 {dimension_numbers = #tpu.dot_dimension_numbers<[1], [0], [0], [1], [0, 0, 1, 1], [], []>} : vector<8x80xbf16>, vector<80x128xbf16>, vector<8x128xf32> -> vector<8x128xf32>
    %132 = arith.addf %125, %131 : vector<8x128xf32>
    %c0_108 = arith.constant 0 : index
    %c0_109 = arith.constant 0 : index
    %133 = vector.load %arg12[%c0_108, %c0_109] : memref<1x128xf32, #tpu.memory_space<vmem>>, vector<1x128xf32>
    %134 = vector.broadcast %133 : vector<1x128xf32> to vector<8x128xf32>
    %135 = arith.addf %132, %134 : vector<8x128xf32>
    %cst_110 = arith.constant 0.000000e+00 : f32
    %136 = vector.broadcast %cst_110 : f32 to vector<8x128xf32>
    %137 = arith.maximumf %135, %136 : vector<8x128xf32>
    %138 = arith.truncf %137 : vector<8x128xf32> to vector<8x128xbf16>
    %c0_111 = arith.constant 0 : index
    %c0_112 = arith.constant 0 : index
    %139 = vector.load %arg13[%c0_111, %c0_112] : memref<128x128xbf16, #tpu.memory_space<vmem>>, vector<128x128xbf16>
    %cst_113 = arith.constant dense<0.000000e+00> : vector<8x128xf32>
    %140 = tpu.matmul %138, %139, %cst_113 {dimension_numbers = #tpu.dot_dimension_numbers<[1], [0], [0], [1], [0, 0, 1, 1], [], []>} : vector<8x128xbf16>, vector<128x128xbf16>, vector<8x128xf32> -> vector<8x128xf32>
    %c0_114 = arith.constant 0 : index
    %c0_115 = arith.constant 0 : index
    %141 = vector.load %arg14[%c0_114, %c0_115] : memref<1x128xf32, #tpu.memory_space<vmem>>, vector<1x128xf32>
    %142 = vector.broadcast %141 : vector<1x128xf32> to vector<8x128xf32>
    %143 = arith.addf %140, %142 : vector<8x128xf32>
    %cst_116 = arith.constant 0.000000e+00 : f32
    %144 = vector.broadcast %cst_116 : f32 to vector<8x128xf32>
    %145 = arith.maximumf %143, %144 : vector<8x128xf32>
    %146 = arith.truncf %145 : vector<8x128xf32> to vector<8x128xbf16>
    %c0_117 = arith.constant 0 : index
    %c0_118 = arith.constant 0 : index
    %147 = vector.load %arg15[%c0_117, %c0_118] : memref<128x128xbf16, #tpu.memory_space<vmem>>, vector<128x128xbf16>
    %cst_119 = arith.constant dense<0.000000e+00> : vector<8x128xf32>
    %148 = tpu.matmul %146, %147, %cst_119 {dimension_numbers = #tpu.dot_dimension_numbers<[1], [0], [0], [1], [0, 0, 1, 1], [], []>} : vector<8x128xbf16>, vector<128x128xbf16>, vector<8x128xf32> -> vector<8x128xf32>
    %c0_120 = arith.constant 0 : index
    %c0_121 = arith.constant 0 : index
    %149 = vector.load %arg16[%c0_120, %c0_121] : memref<1x128xf32, #tpu.memory_space<vmem>>, vector<1x128xf32>
    %150 = vector.broadcast %149 : vector<1x128xf32> to vector<8x128xf32>
    %151 = arith.addf %148, %150 : vector<8x128xf32>
    %cst_122 = arith.constant dense<0xFF800000> : vector<8xf32>
    %152 = vector.multi_reduction <maximumf>, %151, %cst_122 [1] : vector<8x128xf32> to vector<8xf32>
    %153 = vector.shape_cast %152 : vector<8xf32> to vector<8x1xf32>
    %154 = vector.broadcast %153 : vector<8x1xf32> to vector<8x128xf32>
    %155 = arith.subf %151, %154 : vector<8x128xf32>
    %156 = math.exp %155 : vector<8x128xf32>
    %cst_123 = arith.constant dense<0.000000e+00> : vector<8xf32>
    %157 = vector.multi_reduction <add>, %156, %cst_123 [1] : vector<8x128xf32> to vector<8xf32>
    %158 = vector.shape_cast %157 : vector<8xf32> to vector<8x1xf32>
    %159 = vector.broadcast %158 : vector<8x1xf32> to vector<8x128xf32>
    %160 = arith.divf %156, %159 : vector<8x128xf32>
    %c0_124 = arith.constant 0 : index
    %c0_125 = arith.constant 0 : index
    %161 = vector.load %arg17[%c0_124, %c0_125] : memref<8x128xf32, #tpu.memory_space<vmem>>, vector<8x128xf32>
    tpu.vector_store %arg17[%c0_124, %c0_125], %160 {strides = array<i32>} : memref<8x128xf32, #tpu.memory_space<vmem>>, vector<8x128xf32>,
    return
  }
  func.func @transform_0(%arg0: i32) -> (i32, i32) {
    %c0_i32 = arith.constant 0 : i32
    %c0_i32_0 = arith.constant 0 : i32
    return %arg0, %c0_i32 : i32, i32
  }
  func.func @transform_1(%arg0: i32) -> (i32, i32, i32) {
    %c0_i32 = arith.constant 0 : i32
    %c0_i32_0 = arith.constant 0 : i32
    %c0_i32_1 = arith.constant 0 : i32
    %c0_i32_2 = arith.constant 0 : i32
    return %c0_i32, %c0_i32_0, %c0_i32_1 : i32, i32, i32
  }
  func.func @transform_2(%arg0: i32) -> (i32, i32) {
    %c0_i32 = arith.constant 0 : i32
    %c0_i32_0 = arith.constant 0 : i32
    %c0_i32_1 = arith.constant 0 : i32
    return %c0_i32, %c0_i32_0 : i32, i32
  }
  func.func @transform_3(%arg0: i32) -> (i32, i32, i32) {
    %c0_i32 = arith.constant 0 : i32
    %c0_i32_0 = arith.constant 0 : i32
    %c0_i32_1 = arith.constant 0 : i32
    %c0_i32_2 = arith.constant 0 : i32
    return %c0_i32, %c0_i32_0, %c0_i32_1 : i32, i32, i32
  }
  func.func @transform_4(%arg0: i32) -> (i32, i32, i32) {
    %c0_i32 = arith.constant 0 : i32
    %c0_i32_0 = arith.constant 0 : i32
    %c0_i32_1 = arith.constant 0 : i32
    %c0_i32_2 = arith.constant 0 : i32
    return %c0_i32, %c0_i32_0, %c0_i32_1 : i32, i32, i32
  }
  func.func @transform_5(%arg0: i32) -> (i32, i32, i32) {
    %c0_i32 = arith.constant 0 : i32
    %c0_i32_0 = arith.constant 0 : i32
    %c0_i32_1 = arith.constant 0 : i32
    %c0_i32_2 = arith.constant 0 : i32
    return %c0_i32, %c0_i32_0, %c0_i32_1 : i32, i32, i32
  }
  func.func @transform_6(%arg0: i32) -> (i32, i32) {
    %c0_i32 = arith.constant 0 : i32
    %c0_i32_0 = arith.constant 0 : i32
    %c0_i32_1 = arith.constant 0 : i32
    return %c0_i32, %c0_i32_0 : i32, i32
  }
  func.func @transform_7(%arg0: i32) -> (i32, i32, i32) {
    %c0_i32 = arith.constant 0 : i32
    %c0_i32_0 = arith.constant 0 : i32
    %c0_i32_1 = arith.constant 0 : i32
    %c0_i32_2 = arith.constant 0 : i32
    return %c0_i32, %c0_i32_0, %c0_i32_1 : i32, i32, i32
  }
  func.func @transform_8(%arg0: i32) -> (i32, i32, i32) {
    %c0_i32 = arith.constant 0 : i32
    %c0_i32_0 = arith.constant 0 : i32
    %c0_i32_1 = arith.constant 0 : i32
    %c0_i32_2 = arith.constant 0 : i32
    return %c0_i32, %c0_i32_0, %c0_i32_1 : i32, i32, i32
  }
  func.func @transform_9(%arg0: i32) -> (i32, i32, i32) {
    %c0_i32 = arith.constant 0 : i32
    %c0_i32_0 = arith.constant 0 : i32
    %c0_i32_1 = arith.constant 0 : i32
    %c0_i32_2 = arith.constant 0 : i32
    return %c0_i32, %c0_i32_0, %c0_i32_1 : i32, i32, i32
  }
  func.func @transform_10(%arg0: i32) -> (i32, i32) {
    %c0_i32 = arith.constant 0 : i32
    %c0_i32_0 = arith.constant 0 : i32
    %c0_i32_1 = arith.constant 0 : i32
    return %c0_i32, %c0_i32_0 : i32, i32
  }
  func.func @transform_11(%arg0: i32) -> (i32, i32) {
    %c0_i32 = arith.constant 0 : i32
    %c0_i32_0 = arith.constant 0 : i32
    %c0_i32_1 = arith.constant 0 : i32
    return %c0_i32, %c0_i32_0 : i32, i32
  }
  func.func @transform_12(%arg0: i32) -> (i32, i32) {
    %c0_i32 = arith.constant 0 : i32
    %c0_i32_0 = arith.constant 0 : i32
    %c0_i32_1 = arith.constant 0 : i32
    return %c0_i32, %c0_i32_0 : i32, i32
  }
  func.func @transform_13(%arg0: i32) -> (i32, i32) {
    %c0_i32 = arith.constant 0 : i32
    %c0_i32_0 = arith.constant 0 : i32
    %c0_i32_1 = arith.constant 0 : i32
    return %c0_i32, %c0_i32_0 : i32, i32
  }
  func.func @transform_14(%arg0: i32) -> (i32, i32) {
    %c0_i32 = arith.constant 0 : i32
    %c0_i32_0 = arith.constant 0 : i32
    %c0_i32_1 = arith.constant 0 : i32
    return %c0_i32, %c0_i32_0 : i32, i32
  }
  func.func @transform_15(%arg0: i32) -> (i32, i32) {
    %c0_i32 = arith.constant 0 : i32
    %c0_i32_0 = arith.constant 0 : i32
    %c0_i32_1 = arith.constant 0 : i32
    return %c0_i32, %c0_i32_0 : i32, i32
  }
  func.func @transform_16(%arg0: i32) -> (i32, i32) {
    %c0_i32 = arith.constant 0 : i32
    %c0_i32_0 = arith.constant 0 : i32
    return %arg0, %c0_i32 : i32, i32
  }
}

</mosaic_0001>

<llo_original>
// kernel: lenet5_predict.1
$region0: #{lenet5_predict.1}
  #allocation0 [shape = 'u32[]', space=smem, size = 0x4, offset = 0x4, fixed_abs, tag = 'smem constant byte address 0x4 - core index']
  #allocation1 [shape = 'u32[144,128]{1,0:T(1,128)}', space=vmem, size = 0x12000, scoped, tag = 'internal scratch']
  %s0 = inlined_call_operand.vmem [shape: bf16[544,28], index: 0, kind: input, shape index: {}]
  %s1 = inlined_call_operand.vmem [shape: bf16[5,28,168], index: 1, kind: input, shape index: {}]
  %s2 = inlined_call_operand.vmem [shape: f32[1,168], index: 2, kind: input, shape index: {}]
  %s3 = inlined_call_operand.vmem [shape: bf16[2,136,256], index: 3, kind: input, shape index: {}]
  %s4 = inlined_call_operand.vmem [shape: bf16[2,168,84], index: 4, kind: input, shape index: {}]
  %s5 = inlined_call_operand.vmem [shape: bf16[5,84,160], index: 5, kind: input, shape index: {}]
  %s6 = inlined_call_operand.vmem [shape: f32[1,160], index: 6, kind: input, shape index: {}]
  %s7 = inlined_call_operand.vmem [shape: bf16[2,64,128], index: 7, kind: input, shape index: {}]
  %s8 = inlined_call_operand.vmem [shape: bf16[2,160,80], index: 8, kind: input, shape index: {}]
  %s9 = inlined_call_operand.vmem [shape: bf16[5,8,64], index: 9, kind: input, shape index: {}]
  %s10 = inlined_call_operand.vmem [shape: bf16[400,128], index: 10, kind: input, shape index: {}]
  %s11 = inlined_call_operand.vmem [shape: f32[1,128], index: 11, kind: input, shape index: {}]
  %s12 = inlined_call_operand.vmem [shape: bf16[128,128], index: 12, kind: input, shape index: {}]
  %s13 = inlined_call_operand.vmem [shape: f32[1,128], index: 13, kind: input, shape index: {}]
  %s14 = inlined_call_operand.vmem [shape: bf16[128,128], index: 14, kind: input, shape index: {}]
  %s15 = inlined_call_operand.vmem [shape: f32[1,128], index: 15, kind: input, shape index: {}]
  %s16 = inlined_call_operand.hbm [shape: f32[16,128], index: 16, kind: output, shape index: {}]
  %s17 = sld [smem:[#allocation0]]
  $region97: #{lenet5_predict.1} parent=0
    _
  %s19 = ssub.s32 1, %s17
  %s20 = scalar_select 0, %s19, %s17
  $region1: #{lenet5_predict.1} parent=0
    #allocation2 [shape = 'u8[8192]{0}', space=vmem, size = 0x2000, scoped, tag = 'output window, operand 0']
    #allocation3 [shape = 's32[2]{0}', space=sflag, size = 0x8, scoped, tag = 'scoped memory for lenet5_predict.1']
    %21 = vsyncpa [#allocation3], 0
    %s22 = scalar_lea.sflag [#allocation3], 1
    %23 = vsyncpa %s22, 0
    loop: start=0, step=1, limit=4
    $region2: #{lenet5_predict.1} parent=1 // loop_pre_header
      _
    $region3: #{lenet5_predict.1} parent=1 // loop_header
      %s25 = sphi 0, %s29
      %p26 = scmp.ge.s32.totalorder %s25, 4
      %s35 = sphi 0, %s37
      %s38 = sphi 0, %s35
      %s39 = sphi 0, %s38
      %s55 = sphi 0, %s39
      %s59 = sphi 0, %s59
      %s61 = sphi 0, %s59
      %s62 = sphi 0, %s61
      %s76 = sphi 0, %s62
      %s80 = sphi 0, %s80
      %s82 = sphi 0, %s80
      %s83 = sphi 0, %s82
      %s97 = sphi 0, %s83
      %s101 = sphi 0, %s101
      %s103 = sphi 0, %s101
      %s104 = sphi 0, %s103
      %s118 = sphi 0, %s104
      %s122 = sphi 0, %s122
      %s124 = sphi 0, %s122
      %s125 = sphi 0, %s124
      %s139 = sphi 0, %s125
      %s143 = sphi 0, %s143
      %s145 = sphi 0, %s143
      %s146 = sphi 0, %s145
      %s160 = sphi 0, %s146
      %s164 = sphi 0, %s164
      %s166 = sphi 0, %s164
      %s167 = sphi 0, %s166
      %s181 = sphi 0, %s167
      %s185 = sphi 0, %s185
      %s187 = sphi 0, %s185
      %s188 = sphi 0, %s187
      %s202 = sphi 0, %s188
      %s206 = sphi 0, %s206
      %s208 = sphi 0, %s206
      %s209 = sphi 0, %s208
      %s223 = sphi 0, %s209
      %s227 = sphi 0, %s227
      %s229 = sphi 0, %s227
      %s230 = sphi 0, %s229
      %s244 = sphi 0, %s230
      %s248 = sphi 0, %s248
      %s250 = sphi 0, %s248
      %s251 = sphi 0, %s250
      %s265 = sphi 0, %s251
      %s269 = sphi 0, %s269
      %s271 = sphi 0, %s269
      %s272 = sphi 0, %s271
      %s286 = sphi 0, %s272
      %s290 = sphi 0, %s290
      %s292 = sphi 0, %s290
      %s293 = sphi 0, %s292
      %s307 = sphi 0, %s293
      %s311 = sphi 0, %s311
      %s313 = sphi 0, %s311
      %s314 = sphi 0, %s313
      %s328 = sphi 0, %s314
      %s332 = sphi 0, %s332
      %s334 = sphi 0, %s332
      %s335 = sphi 0, %s334
      %s349 = sphi 0, %s335
      %s353 = sphi 0, %s353
      %s355 = sphi 0, %s353
      %s356 = sphi 0, %s355
      %s370 = sphi 0, %s356
      %s376 = sphi 0, %s378
      %s379 = sphi 0, %s376
      %s380 = sphi 0, %s379
      %s396 = sphi 0, %s380
    $region4: #{lenet5_predict.1} parent=1 // loop_header_branch
      %28 = sbr.rel (%p26) target = $region8
    $region5: #{lenet5_predict.1} parent=1 // loop_body
      %s30 = ssub.s32 %s25, 1
      %s31 = ssub.s32 %s25, 2
      %s32 = sadd.s32 %s25, 1
      %s33 = ssub.s32 %s25, %s32
      %p34 = scmp.eq.s32.totalorder %s33, 0
      %s36 = sadd.s32 %s35, 1
      %s37 = scalar_select %p34, %s35, %s36
      %p40 = pneg %p34
      %p41 = scmp.eq.s32.totalorder %s25, 1
      %p42 = por %p40, %p41
      %p43 = scmp.ne.s32.totalorder %s35, %s38
      %p44 = scmp.eq.s32.totalorder %s25, 0
      %p45 = por %p43, %p44
      %p46 = scmp.ne.s32.totalorder %s35, %s38
      %p47 = scmp.eq.s32.totalorder %s30, 1
      %p48 = por %p46, %p47
      %p49 = scmp.ne.s32.totalorder %s38, %s39
      %p50 = scmp.eq.s32.totalorder %s30, 0
      %p51 = por %p49, %p50
      %p52 = scmp.ne.s32.totalorder %s38, %s39
      %p53 = scmp.eq.s32.totalorder %s31, 1
      %p54 = por %p52, %p53
      %p56 = scmp.ne.s32.totalorder %s39, %s55
      %p57 = scmp.eq.s32.totalorder %s31, 0
      %p58 = por %p56, %p57
      %s60 = sadd.s32 %s59, 1
      %p63 = scmp.eq.s32.totalorder %s25, 1
      %p64 = scmp.ne.s32.totalorder %s59, %s61
      %p65 = scmp.eq.s32.totalorder %s25, 0
      %p66 = por %p64, %p65
      %p67 = scmp.ne.s32.totalorder %s59, %s61
      %p68 = scmp.eq.s32.totalorder %s30, 1
      %p69 = por %p67, %p68
      %p70 = scmp.ne.s32.totalorder %s61, %s62
      %p71 = scmp.eq.s32.totalorder %s30, 0
      %p72 = por %p70, %p71
      %p73 = scmp.ne.s32.totalorder %s61, %s62
      %p74 = scmp.eq.s32.totalorder %s31, 1
      %p75 = por %p73, %p74
      %p77 = scmp.ne.s32.totalorder %s62, %s76
      %p78 = scmp.eq.s32.totalorder %s31, 0
      %p79 = por %p77, %p78
      %s81 = sadd.s32 %s80, 1
      %p84 = scmp.eq.s32.totalorder %s25, 1
      %p85 = scmp.ne.s32.totalorder %s80, %s82
      %p86 = scmp.eq.s32.totalorder %s25, 0
      %p87 = por %p85, %p86
      %p88 = scmp.ne.s32.totalorder %s80, %s82
      %p89 = scmp.eq.s32.totalorder %s30, 1
      %p90 = por %p88, %p89
      %p91 = scmp.ne.s32.totalorder %s82, %s83
      %p92 = scmp.eq.s32.totalorder %s30, 0
      %p93 = por %p91, %p92
      %p94 = scmp.ne.s32.totalorder %s82, %s83
      %p95 = scmp.eq.s32.totalorder %s31, 1
      %p96 = por %p94, %p95
      %p98 = scmp.ne.s32.totalorder %s83, %s97
      %p99 = scmp.eq.s32.totalorder %s31, 0
      %p100 = por %p98, %p99
      %s102 = sadd.s32 %s101, 1
      %p105 = scmp.eq.s32.totalorder %s25, 1
      %p106 = scmp.ne.s32.totalorder %s101, %s103
      %p107 = scmp.eq.s32.totalorder %s25, 0
      %p108 = por %p106, %p107
      %p109 = scmp.ne.s32.totalorder %s101, %s103
      %p110 = scmp.eq.s32.totalorder %s30, 1
      %p111 = por %p109, %p110
      %p112 = scmp.ne.s32.totalorder %s103, %s104
      %p113 = scmp.eq.s32.totalorder %s30, 0
      %p114 = por %p112, %p113
      %p115 = scmp.ne.s32.totalorder %s103, %s104
      %p116 = scmp.eq.s32.totalorder %s31, 1
      %p117 = por %p115, %p116
      %p119 = scmp.ne.s32.totalorder %s104, %s118
      %p120 = scmp.eq.s32.totalorder %s31, 0
      %p121 = por %p119, %p120
      %s123 = sadd.s32 %s122, 1
      %p126 = scmp.eq.s32.totalorder %s25, 1
      %p127 = scmp.ne.s32.totalorder %s122, %s124
      %p128 = scmp.eq.s32.totalorder %s25, 0
      %p129 = por %p127, %p128
      %p130 = scmp.ne.s32.totalorder %s122, %s124
      %p131 = scmp.eq.s32.totalorder %s30, 1
      %p132 = por %p130, %p131
      %p133 = scmp.ne.s32.totalorder %s124, %s125
      %p134 = scmp.eq.s32.totalorder %s30, 0
      %p135 = por %p133, %p134
      %p136 = scmp.ne.s32.totalorder %s124, %s125
      %p137 = scmp.eq.s32.totalorder %s31, 1
      %p138 = por %p136, %p137
      %p140 = scmp.ne.s32.totalorder %s125, %s139
      %p141 = scmp.eq.s32.totalorder %s31, 0
      %p142 = por %p140, %p141
      %s144 = sadd.s32 %s143, 1
      %p147 = scmp.eq.s32.totalorder %s25, 1
      %p148 = scmp.ne.s32.totalorder %s143, %s145
      %p149 = scmp.eq.s32.totalorder %s25, 0
      %p150 = por %p148, %p149
      %p151 = scmp.ne.s32.totalorder %s143, %s145
      %p152 = scmp.eq.s32.totalorder %s30, 1
      %p153 = por %p151, %p152
      %p154 = scmp.ne.s32.totalorder %s145, %s146
      %p155 = scmp.eq.s32.totalorder %s30, 0
      %p156 = por %p154, %p155
      %p157 = scmp.ne.s32.totalorder %s145, %s146
      %p158 = scmp.eq.s32.totalorder %s31, 1
      %p159 = por %p157, %p158
      %p161 = scmp.ne.s32.totalorder %s146, %s160
      %p162 = scmp.eq.s32.totalorder %s31, 0
      %p163 = por %p161, %p162
      %s165 = sadd.s32 %s164, 1
      %p168 = scmp.eq.s32.totalorder %s25, 1
      %p169 = scmp.ne.s32.totalorder %s164, %s166
      %p170 = scmp.eq.s32.totalorder %s25, 0
      %p171 = por %p169, %p170
      %p172 = scmp.ne.s32.totalorder %s164, %s166
      %p173 = scmp.eq.s32.totalorder %s30, 1
      %p174 = por %p172, %p173
      %p175 = scmp.ne.s32.totalorder %s166, %s167
      %p176 = scmp.eq.s32.totalorder %s30, 0
      %p177 = por %p175, %p176
      %p178 = scmp.ne.s32.totalorder %s166, %s167
      %p179 = scmp.eq.s32.totalorder %s31, 1
      %p180 = por %p178, %p179
      %p182 = scmp.ne.s32.totalorder %s167, %s181
      %p183 = scmp.eq.s32.totalorder %s31, 0
      %p184 = por %p182, %p183
      %s186 = sadd.s32 %s185, 1
      %p189 = scmp.eq.s32.totalorder %s25, 1
      %p190 = scmp.ne.s32.totalorder %s185, %s187
      %p191 = scmp.eq.s32.totalorder %s25, 0
      %p192 = por %p190, %p191
      %p193 = scmp.ne.s32.totalorder %s185, %s187
      %p194 = scmp.eq.s32.totalorder %s30, 1
      %p195 = por %p193, %p194
      %p196 = scmp.ne.s32.totalorder %s187, %s188
      %p197 = scmp.eq.s32.totalorder %s30, 0
      %p198 = por %p196, %p197
      %p199 = scmp.ne.s32.totalorder %s187, %s188
      %p200 = scmp.eq.s32.totalorder %s31, 1
      %p201 = por %p199, %p200
      %p203 = scmp.ne.s32.totalorder %s188, %s202
      %p204 = scmp.eq.s32.totalorder %s31, 0
      %p205 = por %p203, %p204
      %s207 = sadd.s32 %s206, 1
      %p210 = scmp.eq.s32.totalorder %s25, 1
      %p211 = scmp.ne.s32.totalorder %s206, %s208
      %p212 = scmp.eq.s32.totalorder %s25, 0
      %p213 = por %p211, %p212
      %p214 = scmp.ne.s32.totalorder %s206, %s208
      %p215 = scmp.eq.s32.totalorder %s30, 1
      %p216 = por %p214, %p215
      %p217 = scmp.ne.s32.totalorder %s208, %s209
      %p218 = scmp.eq.s32.totalorder %s30, 0
      %p219 = por %p217, %p218
      %p220 = scmp.ne.s32.totalorder %s208, %s209
      %p221 = scmp.eq.s32.totalorder %s31, 1
      %p222 = por %p220, %p221
      %p224 = scmp.ne.s32.totalorder %s209, %s223
      %p225 = scmp.eq.s32.totalorder %s31, 0
      %p226 = por %p224, %p225
      %s228 = sadd.s32 %s227, 1
      %p231 = scmp.eq.s32.totalorder %s25, 1
      %p232 = scmp.ne.s32.totalorder %s227, %s229
      %p233 = scmp.eq.s32.totalorder %s25, 0
      %p234 = por %p232, %p233
      %p235 = scmp.ne.s32.totalorder %s227, %s229
      %p236 = scmp.eq.s32.totalorder %s30, 1
      %p237 = por %p235, %p236
      %p238 = scmp.ne.s32.totalorder %s229, %s230
      %p239 = scmp.eq.s32.totalorder %s30, 0
      %p240 = por %p238, %p239
      %p241 = scmp.ne.s32.totalorder %s229, %s230
      %p242 = scmp.eq.s32.totalorder %s31, 1
      %p243 = por %p241, %p242
      %p245 = scmp.ne.s32.totalorder %s230, %s244
      %p246 = scmp.eq.s32.totalorder %s31, 0
      %p247 = por %p245, %p246
      %s249 = sadd.s32 %s248, 1
      %p252 = scmp.eq.s32.totalorder %s25, 1
      %p253 = scmp.ne.s32.totalorder %s248, %s250
      %p254 = scmp.eq.s32.totalorder %s25, 0
      %p255 = por %p253, %p254
      %p256 = scmp.ne.s32.totalorder %s248, %s250
      %p257 = scmp.eq.s32.totalorder %s30, 1
      %p258 = por %p256, %p257
      %p259 = scmp.ne.s32.totalorder %s250, %s251
      %p260 = scmp.eq.s32.totalorder %s30, 0
      %p261 = por %p259, %p260
      %p262 = scmp.ne.s32.totalorder %s250, %s251
      %p263 = scmp.eq.s32.totalorder %s31, 1
      %p264 = por %p262, %p263
      %p266 = scmp.ne.s32.totalorder %s251, %s265
      %p267 = scmp.eq.s32.totalorder %s31, 0
      %p268 = por %p266, %p267
      %s270 = sadd.s32 %s269, 1
      %p273 = scmp.eq.s32.totalorder %s25, 1
      %p274 = scmp.ne.s32.totalorder %s269, %s271
      %p275 = scmp.eq.s32.totalorder %s25, 0
      %p276 = por %p274, %p275
      %p277 = scmp.ne.s32.totalorder %s269, %s271
      %p278 = scmp.eq.s32.totalorder %s30, 1
      %p279 = por %p277, %p278
      %p280 = scmp.ne.s32.totalorder %s271, %s272
      %p281 = scmp.eq.s32.totalorder %s30, 0
      %p282 = por %p280, %p281
      %p283 = scmp.ne.s32.totalorder %s271, %s272
      %p284 = scmp.eq.s32.totalorder %s31, 1
      %p285 = por %p283, %p284
      %p287 = scmp.ne.s32.totalorder %s272, %s286
      %p288 = scmp.eq.s32.totalorder %s31, 0
      %p289 = por %p287, %p288
      %s291 = sadd.s32 %s290, 1
      %p294 = scmp.eq.s32.totalorder %s25, 1
      %p295 = scmp.ne.s32.totalorder %s290, %s292
      %p296 = scmp.eq.s32.totalorder %s25, 0
      %p297 = por %p295, %p296
      %p298 = scmp.ne.s32.totalorder %s290, %s292
      %p299 = scmp.eq.s32.totalorder %s30, 1
      %p300 = por %p298, %p299
      %p301 = scmp.ne.s32.totalorder %s292, %s293
      %p302 = scmp.eq.s32.totalorder %s30, 0
      %p303 = por %p301, %p302
      %p304 = scmp.ne.s32.totalorder %s292, %s293
      %p305 = scmp.eq.s32.totalorder %s31, 1
      %p306 = por %p304, %p305
      %p308 = scmp.ne.s32.totalorder %s293, %s307
      %p309 = scmp.eq.s32.totalorder %s31, 0
      %p310 = por %p308, %p309
      %s312 = sadd.s32 %s311, 1
      %p315 = scmp.eq.s32.totalorder %s25, 1
      %p316 = scmp.ne.s32.totalorder %s311, %s313
      %p317 = scmp.eq.s32.totalorder %s25, 0
      %p318 = por %p316, %p317
      %p319 = scmp.ne.s32.totalorder %s311, %s313
      %p320 = scmp.eq.s32.totalorder %s30, 1
      %p321 = por %p319, %p320
      %p322 = scmp.ne.s32.totalorder %s313, %s314
      %p323 = scmp.eq.s32.totalorder %s30, 0
      %p324 = por %p322, %p323
      %p325 = scmp.ne.s32.totalorder %s313, %s314
      %p326 = scmp.eq.s32.totalorder %s31, 1
      %p327 = por %p325, %p326
      %p329 = scmp.ne.s32.totalorder %s314, %s328
      %p330 = scmp.eq.s32.totalorder %s31, 0
      %p331 = por %p329, %p330
      %s333 = sadd.s32 %s332, 1
      %p336 = scmp.eq.s32.totalorder %s25, 1
      %p337 = scmp.ne.s32.totalorder %s332, %s334
      %p338 = scmp.eq.s32.totalorder %s25, 0
      %p339 = por %p337, %p338
      %p340 = scmp.ne.s32.totalorder %s332, %s334
      %p341 = scmp.eq.s32.totalorder %s30, 1
      %p342 = por %p340, %p341
      %p343 = scmp.ne.s32.totalorder %s334, %s335
      %p344 = scmp.eq.s32.totalorder %s30, 0
      %p345 = por %p343, %p344
      %p346 = scmp.ne.s32.totalorder %s334, %s335
      %p347 = scmp.eq.s32.totalorder %s31, 1
      %p348 = por %p346, %p347
      %p350 = scmp.ne.s32.totalorder %s335, %s349
      %p351 = scmp.eq.s32.totalorder %s31, 0
      %p352 = por %p350, %p351
      %s354 = sadd.s32 %s353, 1
      %p357 = scmp.eq.s32.totalorder %s25, 1
      %p358 = scmp.ne.s32.totalorder %s353, %s355
      %p359 = scmp.eq.s32.totalorder %s25, 0
      %p360 = por %p358, %p359
      %p361 = scmp.ne.s32.totalorder %s353, %s355
      %p362 = scmp.eq.s32.totalorder %s30, 1
      %p363 = por %p361, %p362
      %p364 = scmp.ne.s32.totalorder %s355, %s356
      %p365 = scmp.eq.s32.totalorder %s30, 0
      %p366 = por %p364, %p365
      %p367 = scmp.ne.s32.totalorder %s355, %s356
      %p368 = scmp.eq.s32.totalorder %s31, 1
      %p369 = por %p367, %p368
      %p371 = scmp.ne.s32.totalorder %s356, %s370
      %p372 = scmp.eq.s32.totalorder %s31, 0
      %p373 = por %p371, %p372
      %s374 = ssub.s32 %s25, %s32
      %p375 = scmp.eq.s32.totalorder %s374, 0
      %s377 = sadd.s32 %s376, 1
      %s378 = scalar_select %p375, %s376, %s377
      %p381 = pneg %p375
      %p382 = scmp.eq.s32.totalorder %s25, 1
      %p383 = por %p381, %p382
      %p384 = scmp.ne.s32.totalorder %s376, %s379
      %p385 = scmp.eq.s32.totalorder %s25, 0
      %p386 = por %p384, %p385
      %p387 = scmp.ne.s32.totalorder %s376, %s379
      %p388 = scmp.eq.s32.totalorder %s30, 1
      %p389 = por %p387, %p388
      %p390 = scmp.ne.s32.totalorder %s379, %s380
      %p391 = scmp.eq.s32.totalorder %s30, 0
      %p392 = por %p390, %p391
      %p393 = scmp.ne.s32.totalorder %s379, %s380
      %p394 = scmp.eq.s32.totalorder %s31, 1
      %p395 = por %p393, %p394
      %p397 = scmp.ne.s32.totalorder %s380, %s396
      %p398 = scmp.eq.s32.totalorder %s31, 0
      %p399 = por %p397, %p398
      %p400 = scmp.le.s32.totalorder 1, %s25
      %p401 = scmp.lt.s32.totalorder %s25, 3
      %p402 = pnand %p400, %p401
      %p403 = pneg %p402
      // Predicated region
      $region9: #{lenet5_predict.1} parent=5 // pred_check
        _
      $region10: #{lenet5_predict.1} parent=5 // pred_check_branch
        %405 = sbr.rel (%p402) target = $region12
      $region11: #{lenet5_predict.1} parent=5 // pred_region
        %s406 = ssub.s32 %s25, 1
        // Predicated region
        $region13: #{lenet5_predict.1} parent=11 // pred_check
          %p407 = pneg %p72
        $region14: #{lenet5_predict.1} parent=11 // pred_check_branch
          %409 = sbr.rel (%p407) target = $region16
        $region15: #{lenet5_predict.1} parent=11 // pred_region
          _
        $region16: #{lenet5_predict.1} parent=11 // pred_fallthru
          _
        // Predicated region
        $region17: #{lenet5_predict.1} parent=11 // pred_check
          %p410 = pneg %p93
        $region18: #{lenet5_predict.1} parent=11 // pred_check_branch
          %412 = sbr.rel (%p410) target = $region20
        $region19: #{lenet5_predict.1} parent=11 // pred_region
          _
        $region20: #{lenet5_predict.1} parent=11 // pred_fallthru
          _
        // Predicated region
        $region21: #{lenet5_predict.1} parent=11 // pred_check
          %p413 = pneg %p114
        $region22: #{lenet5_predict.1} parent=11 // pred_check_branch
          %415 = sbr.rel (%p413) target = $region24
        $region23: #{lenet5_predict.1} parent=11 // pred_region
          _
        $region24: #{lenet5_predict.1} parent=11 // pred_fallthru
          _
        // Predicated region
        $region25: #{lenet5_predict.1} parent=11 // pred_check
          %p416 = pneg %p135
        $region26: #{lenet5_predict.1} parent=11 // pred_check_branch
          %418 = sbr.rel (%p416) target = $region28
        $region27: #{lenet5_predict.1} parent=11 // pred_region
          _
        $region28: #{lenet5_predict.1} parent=11 // pred_fallthru
          _
        // Predicated region
        $region29: #{lenet5_predict.1} parent=11 // pred_check
          %p419 = pneg %p156
        $region30: #{lenet5_predict.1} parent=11 // pred_check_branch
          %421 = sbr.rel (%p419) target = $region32
        $region31: #{lenet5_predict.1} parent=11 // pred_region
          _
        $region32: #{lenet5_predict.1} parent=11 // pred_fallthru
          _
        // Predicated region
        $region33: #{lenet5_predict.1} parent=11 // pred_check
          %p422 = pneg %p177
        $region34: #{lenet5_predict.1} parent=11 // pred_check_branch
          %424 = sbr.rel (%p422) target = $region36
        $region35: #{lenet5_predict.1} parent=11 // pred_region
          _
        $region36: #{lenet5_predict.1} parent=11 // pred_fallthru
          _
        // Predicated region
        $region37: #{lenet5_predict.1} parent=11 // pred_check
          %p425 = pneg %p198
        $region38: #{lenet5_predict.1} parent=11 // pred_check_branch
          %427 = sbr.rel (%p425) target = $region40
        $region39: #{lenet5_predict.1} parent=11 // pred_region
          _
        $region40: #{lenet5_predict.1} parent=11 // pred_fallthru
          _
        // Predicated region
        $region41: #{lenet5_predict.1} parent=11 // pred_check
          %p428 = pneg %p219
        $region42: #{lenet5_predict.1} parent=11 // pred_check_branch
          %430 = sbr.rel (%p428) target = $region44
        $region43: #{lenet5_predict.1} parent=11 // pred_region
          _
        $region44: #{lenet5_predict.1} parent=11 // pred_fallthru
          _
        // Predicated region
        $region45: #{lenet5_predict.1} parent=11 // pred_check
          %p431 = pneg %p240
        $region46: #{lenet5_predict.1} parent=11 // pred_check_branch
          %433 = sbr.rel (%p431) target = $region48
        $region47: #{lenet5_predict.1} parent=11 // pred_region
          _
        $region48: #{lenet5_predict.1} parent=11 // pred_fallthru
          _
        // Predicated region
        $region49: #{lenet5_predict.1} parent=11 // pred_check
          %p434 = pneg %p261
        $region50: #{lenet5_predict.1} parent=11 // pred_check_branch
          %436 = sbr.rel (%p434) target = $region52
        $region51: #{lenet5_predict.1} parent=11 // pred_region
          _
        $region52: #{lenet5_predict.1} parent=11 // pred_fallthru
          _
        // Predicated region
        $region53: #{lenet5_predict.1} parent=11 // pred_check
          %p437 = pneg %p282
        $region54: #{lenet5_predict.1} parent=11 // pred_check_branch
          %439 = sbr.rel (%p437) target = $region56
        $region55: #{lenet5_predict.1} parent=11 // pred_region
          _
        $region56: #{lenet5_predict.1} parent=11 // pred_fallthru
          _
        // Predicated region
        $region57: #{lenet5_predict.1} parent=11 // pred_check
          %p440 = pneg %p303
        $region58: #{lenet5_predict.1} parent=11 // pred_check_branch
          %442 = sbr.rel (%p440) target = $region60
        $region59: #{lenet5_predict.1} parent=11 // pred_region
          _
        $region60: #{lenet5_predict.1} parent=11 // pred_fallthru
          _
        // Predicated region
        $region61: #{lenet5_predict.1} parent=11 // pred_check
          %p443 = pneg %p324
        $region62: #{lenet5_predict.1} parent=11 // pred_check_branch
          %445 = sbr.rel (%p443) target = $region64
        $region63: #{lenet5_predict.1} parent=11 // pred_region
          _
        $region64: #{lenet5_predict.1} parent=11 // pred_fallthru
          _
        // Predicated region
        $region65: #{lenet5_predict.1} parent=11 // pred_check
          %p446 = pneg %p345
        $region66: #{lenet5_predict.1} parent=11 // pred_check_branch
          %448 = sbr.rel (%p446) target = $region68
        $region67: #{lenet5_predict.1} parent=11 // pred_region
          _
        $region68: #{lenet5_predict.1} parent=11 // pred_fallthru
          _
        // Predicated region
        $region69: #{lenet5_predict.1} parent=11 // pred_check
          %p449 = pneg %p366
        $region70: #{lenet5_predict.1} parent=11 // pred_check_branch
          %451 = sbr.rel (%p449) target = $region72
        $region71: #{lenet5_predict.1} parent=11 // pred_region
          _
        $region72: #{lenet5_predict.1} parent=11 // pred_fallthru
          _
      $region12: #{lenet5_predict.1} parent=5 // pred_fallthru
        _
      %p452 = scmp.lt.s32.totalorder %s25, 2
      // Predicated region
      $region73: #{lenet5_predict.1} parent=5 // pred_check
        %p453 = pneg %p452
      $region74: #{lenet5_predict.1} parent=5 // pred_check_branch
        %455 = sbr.rel (%p453) target = $region76
      $region75: #{lenet5_predict.1} parent=5 // pred_region
        // Predicated region
        $region77: #{lenet5_predict.1} parent=75 // pred_check
          %p456 = pneg %p45
        $region78: #{lenet5_predict.1} parent=75 // pred_check_branch
          %458 = sbr.rel (%p456) target = $region80
        $region79: #{lenet5_predict.1} parent=75 // pred_region
          %s459 = smul.u32 34, %s25
          %p460 = scmp.lt.s32.totalorder %s459, 67
          %s461 = scalar_select %p460, %s459, 67
          %s462 = smul.addr %s461, 4
          %s463 = scalar_lea.vmem %s0, %s462
          %s464 = smul.u32 34, %s25
        $region80: #{lenet5_predict.1} parent=75 // pred_fallthru
          _
      $region76: #{lenet5_predict.1} parent=5 // pred_fallthru
        _
      %p465 = scmp.le.s32.totalorder 1, %s25
      %p466 = scmp.lt.s32.totalorder %s25, 3
      %p467 = pnand %p465, %p466
      %p468 = pneg %p467
      // Predicated region
      $region81: #{lenet5_predict.1} parent=5 // pred_check
        _
      $region82: #{lenet5_predict.1} parent=5 // pred_check_branch
        %470 = sbr.rel (%p467) target = $region84
      $region83: #{lenet5_predict.1} parent=5 // pred_region
        %s471 = ssub.s32 %s25, 1
        %s472 = smul.u32 34, %s30
        %p473 = scmp.lt.s32.totalorder %s472, 67
        %s474 = scalar_select %p473, %s472, 67
        %s475 = smul.addr %s474, 4
        %s476 = scalar_lea.vmem %s0, %s475
        %p477 = pneg %p51
        %p478 = pneg %p48
        %p479 = pneg %p72
        %p480 = pneg %p69
        %p481 = pneg %p93
        %p482 = pneg %p90
        %p483 = pneg %p114
        %p484 = pneg %p111
        %p485 = pneg %p135
        %p486 = pneg %p132
        %p487 = pneg %p156
        %p488 = pneg %p153
        %p489 = pneg %p177
        %p490 = pneg %p174
        %p491 = pneg %p198
        %p492 = pneg %p195
        %p493 = pneg %p219
        %p494 = pneg %p216
        %p495 = pneg %p240
        %p496 = pneg %p237
        %p497 = pneg %p261
        %p498 = pneg %p258
        %p499 = pneg %p282
        %p500 = pneg %p279
        %p501 = pneg %p303
        %p502 = pneg %p300
        %p503 = pneg %p324
        %p504 = pneg %p321
        %p505 = pneg %p345
        %p506 = pneg %p342
        %p507 = pneg %p366
        %p508 = pneg %p363
        %p509 = pneg %p392
        %p510 = pneg %p389
        %s511 = sand.u32 %s379, 1
        %s512 = scalar_lea.sflag [#allocation3], %s511
        %s513 = sand.u32 %s379, 1
        %s514 = smul.addr %s513, 8
        %s515 = scalar_lea.vmem [#allocation2], %s514
        %s516 = smul.u32 34, %s30
        %p517 = scmp.lt.s32.totalorder %s516, 67
        %s518 = scalar_select %p517, %s516, 67
        %s519 = smul.addr %s518, 4
        %s520 = scalar_lea.vmem %s0, %s519
        %s521 = smul.u32 34, %s30
        %v523 = vld [vmem:[%s520] sm:$0xf]
        %v524 = vld [vmem:[%s520 + $0x4] sm:$0xf]
        %v525 = vld [vmem:[%s520 + $0x8] sm:$0xf]
        %v526 = vld [vmem:[%s520 + $0xc] sm:$0xf]
        %v527 = vld [vmem:[%s520 + $0x10] sm:$0xf]
        %v528 = vld [vmem:[%s520 + $0x14] sm:$0xf]
        %v529 = vld [vmem:[%s520 + $0x18] sm:$0xf]
        %v530 = vld [vmem:[%s520 + $0x1c] sm:$0xf]
        %v531 = vld [vmem:[%s520 + $0x20] sm:$0xf]
        %v532 = vld [vmem:[%s520 + $0x24] sm:$0xf]
        %v533 = vld [vmem:[%s520 + $0x28] sm:$0xf]
        %v534 = vld [vmem:[%s520 + $0x2c] sm:$0xf]
        %v535 = vld [vmem:[%s520 + $0x30] sm:$0xf]
        %v536 = vld [vmem:[%s520 + $0x34] sm:$0xf]
        %v537 = vld [vmem:[%s520 + $0x38] sm:$0xf]
        %v538 = vld [vmem:[%s520 + $0x3c] sm:$0xf]
        %v539 = vld [vmem:[%s520 + $0x40] sm:$0xf]
        %v540 = vld [vmem:[%s520 + $0x44] sm:$0xf]
        %v541 = vld [vmem:[%s520 + $0x48] sm:$0xf]
        %v542 = vld [vmem:[%s520 + $0x4c] sm:$0xf]
        %v543 = vld [vmem:[%s520 + $0x50] sm:$0xf]
        %v544 = vld [vmem:[%s520 + $0x54] sm:$0xf]
        %v545 = vld [vmem:[%s520 + $0x58] sm:$0xf]
        %v546 = vld [vmem:[%s520 + $0x5c] sm:$0xf]
        %v547 = vld [vmem:[%s520 + $0x60] sm:$0xf]
        %v548 = vld [vmem:[%s520 + $0x64] sm:$0xf]
        %v549 = vld [vmem:[%s520 + $0x68] sm:$0xf]
        %v550 = vld [vmem:[%s520 + $0x6c] sm:$0xf]
        %v551 = vld [vmem:[%s520 + $0x70] sm:$0xf]
        %v552 = vld [vmem:[%s520 + $0x74] sm:$0xf]
        %v553 = vld [vmem:[%s520 + $0x78] sm:$0xf]
        %v554 = vld [vmem:[%s520 + $0x7c] sm:$0xf]
        %v555 = vld [vmem:[%s520 + $0x80] sm:$0xf]
        %v556 = vld [vmem:[%s1] sm:$0xff]
        %v557 = vld [vmem:[%s1 + $0x8] sm:$0xff]
        %v558 = vld [vmem:[%s1 + $0x10] sm:$0xff]
        %v559 = vld [vmem:[%s1 + $0x18] sm:$0x33]
        %s560 = scalar_lea.vmem %s1, 32
        %v561 = vld [vmem:[%s560] sm:$0xff]
        %v562 = vld [vmem:[%s560 + $0x8] sm:$0xff]
        %v563 = vld [vmem:[%s560 + $0x10] sm:$0xff]
        %v564 = vld [vmem:[%s560 + $0x18] sm:$0x33]
        %v598 = vunpack.c.l.b16 %v523
        %v599 = vunpack.c.l.b16 %v524
        %v600 = vunpack.c.l.b16 %v525
        %v601 = vunpack.c.l.b16 %v526
        %v602 = vunpack.c.l.b16 %v527
        %v603 = vunpack.c.l.b16 %v528
        %v604 = vunpack.c.l.b16 %v529
        %v605 = vunpack.c.l.b16 %v530
        %v606 = vunpack.c.l.b16 %v531
        %v607 = vunpack.c.l.b16 %v532
        %v608 = vunpack.c.l.b16 %v533
        %v609 = vunpack.c.l.b16 %v534
        %v610 = vunpack.c.l.b16 %v535
        %v611 = vunpack.c.l.b16 %v536
        %v612 = vunpack.c.l.b16 %v537
        %v613 = vunpack.c.l.b16 %v538
        %v614 = vunpack.c.l.b16 %v539
        %v615 = vunpack.c.l.b16 %v540
        %v616 = vunpack.c.l.b16 %v541
        %v617 = vunpack.c.l.b16 %v542
        %v618 = vunpack.c.l.b16 %v543
        %v619 = vunpack.c.l.b16 %v544
        %v620 = vunpack.c.l.b16 %v545
        %v621 = vunpack.c.l.b16 %v546
        %v622 = vunpack.c.l.b16 %v547
        %v623 = vunpack.c.l.b16 %v548
        %v624 = vunpack.c.l.b16 %v549
        %v625 = vunpack.c.l.b16 %v550
        %v626 = vunpack.c.l.b16 %v551
        %v627 = vunpack.c.l.b16 %v552
        %v628 = vunpack.c.l.b16 %v553
        %v629 = vunpack.c.l.b16 %v554
        %v630 = vunpack.c.l.b16 %v555
        %v631 = vpack.c.b16 %v599, %v598
        %v632 = vpack.c.b16 %v601, %v600
        %v633 = vpack.c.b16 %v603, %v602
        %v634 = vpack.c.b16 %v605, %v604
        %v635 = vpack.c.b16 %v607, %v606
        %v636 = vpack.c.b16 %v609, %v608
        %v637 = vpack.c.b16 %v611, %v610
        %v638 = vpack.c.b16 %v613, %v612
        %v639 = vpack.c.b16 %v615, %v614
        %v640 = vpack.c.b16 %v617, %v616
        %v641 = vpack.c.b16 %v619, %v618
        %v642 = vpack.c.b16 %v621, %v620
        %v643 = vpack.c.b16 %v623, %v622
        %v644 = vpack.c.b16 %v625, %v624
        %v645 = vpack.c.b16 %v627, %v626
        %v646 = vpack.c.b16 %v629, %v628
        %v647 = vpack.c.b16 %v630, %v630
        %vm648 = vsmask.f32 7424
        %v650 = vshrl.u32 %v631, 16
        %v652 = vshll.u32 %v631, 16
        %v654 = vrot.slane %v652, 1
        %v655 = vor.u32 %v650, %v654
        %v657 = vshll.u32 %v632, 16
        %v659 = vrot.slane %v657, 1
        %v660 = vsel %vm648, %v655, %v659
        %v661 = vshrl.u32 %v632, 16
        %v663 = vor.u32 %v661, %v659
        %v665 = vshll.u32 %v633, 16
        %v667 = vrot.slane %v665, 1
        %v668 = vsel %vm648, %v663, %v667
        %v669 = vshrl.u32 %v633, 16
        %v671 = vor.u32 %v669, %v667
        %v673 = vshll.u32 %v634, 16
        %v675 = vrot.slane %v673, 1
        %v676 = vsel %vm648, %v671, %v675
        %v677 = vshrl.u32 %v634, 16
        %v679 = vor.u32 %v677, %v675
        %v681 = vshll.u32 %v635, 16
        %v683 = vrot.slane %v681, 1
        %v684 = vsel %vm648, %v679, %v683
        %v685 = vshrl.u32 %v635, 16
        %v687 = vor.u32 %v685, %v683
        %v689 = vshll.u32 %v636, 16
        %v691 = vrot.slane %v689, 1
        %v692 = vsel %vm648, %v687, %v691
        %v693 = vshrl.u32 %v636, 16
        %v695 = vor.u32 %v693, %v691
        %v697 = vshll.u32 %v637, 16
        %v699 = vrot.slane %v697, 1
        %v700 = vsel %vm648, %v695, %v699
        %v701 = vshrl.u32 %v637, 16
        %v703 = vor.u32 %v701, %v699
        %v705 = vshll.u32 %v638, 16
        %v707 = vrot.slane %v705, 1
        %v708 = vsel %vm648, %v703, %v707
        %v709 = vshrl.u32 %v638, 16
        %v711 = vor.u32 %v709, %v707
        %v713 = vshll.u32 %v639, 16
        %v715 = vrot.slane %v713, 1
        %v716 = vsel %vm648, %v711, %v715
        %v717 = vshrl.u32 %v639, 16
        %v719 = vor.u32 %v717, %v715
        %v721 = vshll.u32 %v640, 16
        %v723 = vrot.slane %v721, 1
        %v724 = vsel %vm648, %v719, %v723
        %v725 = vshrl.u32 %v640, 16
        %v727 = vor.u32 %v725, %v723
        %v729 = vshll.u32 %v641, 16
        %v731 = vrot.slane %v729, 1
        %v732 = vsel %vm648, %v727, %v731
        %v733 = vshrl.u32 %v641, 16
        %v735 = vor.u32 %v733, %v731
        %v737 = vshll.u32 %v642, 16
        %v739 = vrot.slane %v737, 1
        %v740 = vsel %vm648, %v735, %v739
        %v741 = vshrl.u32 %v642, 16
        %v743 = vor.u32 %v741, %v739
        %v745 = vshll.u32 %v643, 16
        %v747 = vrot.slane %v745, 1
        %v748 = vsel %vm648, %v743, %v747
        %v749 = vshrl.u32 %v643, 16
        %v751 = vor.u32 %v749, %v747
        %v753 = vshll.u32 %v644, 16
        %v755 = vrot.slane %v753, 1
        %v756 = vsel %vm648, %v751, %v755
        %v757 = vshrl.u32 %v644, 16
        %v759 = vor.u32 %v757, %v755
        %v761 = vshll.u32 %v645, 16
        %v763 = vrot.slane %v761, 1
        %v764 = vsel %vm648, %v759, %v763
        %v765 = vshrl.u32 %v645, 16
        %v767 = vor.u32 %v765, %v763
        %v769 = vshll.u32 %v646, 16
        %v771 = vrot.slane %v769, 1
        %v772 = vsel %vm648, %v767, %v771
        %v773 = vshrl.u32 %v646, 16
        %v775 = vor.u32 %v773, %v771
        %v777 = vshll.u32 %v647, 16
        %v779 = vrot.slane %v777, 1
        %v780 = vsel %vm648, %v775, %v779
        %v785 = vunpack.c.l.b16 %v561
        %v786 = vunpack.c.h.b16 %v561
        %v787 = vunpack.c.l.b16 %v562
        %v788 = vunpack.c.h.b16 %v562
        %v789 = vunpack.c.l.b16 %v563
        %v790 = vunpack.c.h.b16 %v563
        %v791 = vunpack.c.l.b16 %v564
        %v792 = vunpack.c.h.b16 %v564
        %v793 = vpack.c.b16 %v787, %v785
        %v794 = vpack.c.b16 %v788, %v786
        %v795 = vpack.c.b16 %v791, %v789
        %v796 = vpack.c.b16 %v792, %v790
        %vm799 = vcmask 228352
        %v801 = vsel %vm799, %v660, 0
        %v804 = vsel %vm799, %v668, 0
        %v807 = vsel %vm799, %v676, 0
        %v810 = vsel %vm799, %v684, 0
        %v813 = vsel %vm799, %v692, 0
        %v816 = vsel %vm799, %v700, 0
        %v819 = vsel %vm799, %v708, 0
        %v822 = vsel %vm799, %v716, 0
        %v825 = vsel %vm799, %v724, 0
        %v828 = vsel %vm799, %v732, 0
        %v831 = vsel %vm799, %v740, 0
        %v834 = vsel %vm799, %v748, 0
        %v837 = vsel %vm799, %v756, 0
        %v840 = vsel %vm799, %v764, 0
        %v843 = vsel %vm799, %v772, 0
        %v846 = vsel %vm799, %v780, 0
        %vm848 = vcmask 1045504
        %v850 = vsel %vm848, %v795, 0
        %v853 = vsel %vm848, %v796, 0
        %855 = vmatprep.subr.bf16.mxu0 %v794
        %856 = vmatpush1.bf16.msra.mxu0 %v793
        %857 = vmatprep.subr.bf16.mxu0 %v853
        %858 = vmatpush1.bf16.msra.mxu0 %v850
        %859 = vmatprep.subr.bf16.mxu0 0
        %860 = vmatpush1.bf16.msra.mxu0 0
        %861 = vmatprep.subr.bf16.mxu0 0
        %862 = vmatpush1.bf16.msra.mxu0 0
        %863 = vmatprep.subr.bf16.mxu0 0
        %864 = vmatpush1.bf16.msra.mxu0 0
        %865 = vmatprep.subr.bf16.mxu0 0
        %866 = vmatpush1.bf16.msra.mxu0 0
        %867 = vmatprep.subr.bf16.mxu0 0
        %868 = vmatpush1.bf16.msra.mxu0 0
        %869 = vmatprep.subr.bf16.mxu0 0
        %870 = vmatpush1.bf16.msra.mxu0 0
        %871 = vmatprep.subr.bf16.mxu0 0
        %872 = vmatpush1.bf16.msra.mxu0 0
        %873 = vmatprep.subr.bf16.mxu0 0
        %874 = vmatpush1.bf16.msra.mxu0 0
        %875 = vmatprep.subr.bf16.mxu0 0
        %876 = vmatpush1.bf16.msra.mxu0 0
        %877 = vmatprep.subr.bf16.mxu0 0
        %878 = vmatpush1.bf16.msra.mxu0 0
        %879 = vmatprep.subr.bf16.mxu0 0
        %880 = vmatpush1.bf16.msra.mxu0 0
        %881 = vmatprep.subr.bf16.mxu0 0
        %882 = vmatpush1.bf16.msra.mxu0 0
        %883 = vmatprep.subr.bf16.mxu0 0
        %884 = vmatpush1.bf16.msra.mxu0 0
        %885 = vmatprep.subr.bf16.mxu0 0
        %886 = vmatpush1.bf16.msra.mxu0 0
        %887 = vmatprep.mubr.bf16.mxu0 0
        %888 = vmatmul.mubr.bf16.gmra.mrb[0].mxu0 %v801
        %v889 = vpop.f32.mrb[0].mxu0
        %v890 = vadd.f32 0.0, %v889
        %v891 = vpop.f32.mrb[0].mxu0
        %v892 = vadd.f32 0.0, %v891
        %v893 = vpop.f32.mrb[0].mxu0
        %v894 = vadd.f32 0.0, %v893
        %v895 = vpop.f32.mrb[0].mxu0
        %v896 = vadd.f32 0.0, %v895
        %897 = vmatprep.mubr.bf16.mxu0 0
        %898 = vmatmul.mubr.bf16.gmra.mrb[0].mxu0 %v804
        %v899 = vpop.f32.mrb[0].mxu0
        %v900 = vadd.f32 0.0, %v899
        %v901 = vpop.f32.mrb[0].mxu0
        %v902 = vadd.f32 0.0, %v901
        %v903 = vpop.f32.mrb[0].mxu0
        %v904 = vadd.f32 0.0, %v903
        %v905 = vpop.f32.mrb[0].mxu0
        %v906 = vadd.f32 0.0, %v905
        %907 = vmatprep.mubr.bf16.mxu0 0
        %908 = vmatmul.mubr.bf16.gmra.mrb[0].mxu0 %v807
        %v909 = vpop.f32.mrb[0].mxu0
        %v910 = vadd.f32 0.0, %v909
        %v911 = vpop.f32.mrb[0].mxu0
        %v912 = vadd.f32 0.0, %v911
        %v913 = vpop.f32.mrb[0].mxu0
        %v914 = vadd.f32 0.0, %v913
        %v915 = vpop.f32.mrb[0].mxu0
        %v916 = vadd.f32 0.0, %v915
        %917 = vmatprep.mubr.bf16.mxu0 0
        %918 = vmatmul.mubr.bf16.gmra.mrb[0].mxu0 %v810
        %v919 = vpop.f32.mrb[0].mxu0
        %v920 = vadd.f32 0.0, %v919
        %v921 = vpop.f32.mrb[0].mxu0
        %v922 = vadd.f32 0.0, %v921
        %v923 = vpop.f32.mrb[0].mxu0
        %v924 = vadd.f32 0.0, %v923
        %v925 = vpop.f32.mrb[0].mxu0
        %v926 = vadd.f32 0.0, %v925
        %927 = vmatprep.mubr.bf16.mxu0 0
        %928 = vmatmul.mubr.bf16.gmra.mrb[0].mxu0 %v813
        %v929 = vpop.f32.mrb[0].mxu0
        %v930 = vadd.f32 0.0, %v929
        %v931 = vpop.f32.mrb[0].mxu0
        %v932 = vadd.f32 0.0, %v931
        %v933 = vpop.f32.mrb[0].mxu0
        %v934 = vadd.f32 0.0, %v933
        %v935 = vpop.f32.mrb[0].mxu0
        %v936 = vadd.f32 0.0, %v935
        %937 = vmatprep.mubr.bf16.mxu0 0
        %938 = vmatmul.mubr.bf16.gmra.mrb[0].mxu0 %v816
        %v939 = vpop.f32.mrb[0].mxu0
        %v940 = vadd.f32 0.0, %v939
        %v941 = vpop.f32.mrb[0].mxu0
        %v942 = vadd.f32 0.0, %v941
        %v943 = vpop.f32.mrb[0].mxu0
        %v944 = vadd.f32 0.0, %v943
        %v945 = vpop.f32.mrb[0].mxu0
        %v946 = vadd.f32 0.0, %v945
        %947 = vmatprep.mubr.bf16.mxu0 0
        %948 = vmatmul.mubr.bf16.gmra.mrb[0].mxu0 %v819
        %v949 = vpop.f32.mrb[0].mxu0
        %v950 = vadd.f32 0.0, %v949
        %v951 = vpop.f32.mrb[0].mxu0
        %v952 = vadd.f32 0.0, %v951
        %v953 = vpop.f32.mrb[0].mxu0
        %v954 = vadd.f32 0.0, %v953
        %v955 = vpop.f32.mrb[0].mxu0
        %v956 = vadd.f32 0.0, %v955
        %957 = vmatprep.mubr.bf16.mxu0 0
        %958 = vmatmul.mubr.bf16.gmra.mrb[0].mxu0 %v822
        %v959 = vpop.f32.mrb[0].mxu0
        %v960 = vadd.f32 0.0, %v959
        %v961 = vpop.f32.mrb[0].mxu0
        %v962 = vadd.f32 0.0, %v961
        %v963 = vpop.f32.mrb[0].mxu0
        %v964 = vadd.f32 0.0, %v963
        %v965 = vpop.f32.mrb[0].mxu0
        %v966 = vadd.f32 0.0, %v965
        %967 = vmatprep.mubr.bf16.mxu0 0
        %968 = vmatmul.mubr.bf16.gmra.mrb[0].mxu0 %v825
        %v969 = vpop.f32.mrb[0].mxu0
        %v970 = vadd.f32 0.0, %v969
        %v971 = vpop.f32.mrb[0].mxu0
        %v972 = vadd.f32 0.0, %v971
        %v973 = vpop.f32.mrb[0].mxu0
        %v974 = vadd.f32 0.0, %v973
        %v975 = vpop.f32.mrb[0].mxu0
        %v976 = vadd.f32 0.0, %v975
        %977 = vmatprep.mubr.bf16.mxu0 0
        %978 = vmatmul.mubr.bf16.gmra.mrb[0].mxu0 %v828
        %v979 = vpop.f32.mrb[0].mxu0
        %v980 = vadd.f32 0.0, %v979
        %v981 = vpop.f32.mrb[0].mxu0
        %v982 = vadd.f32 0.0, %v981
        %v983 = vpop.f32.mrb[0].mxu0
        %v984 = vadd.f32 0.0, %v983
        %v985 = vpop.f32.mrb[0].mxu0
        %v986 = vadd.f32 0.0, %v985
        %987 = vmatprep.mubr.bf16.mxu0 0
        %988 = vmatmul.mubr.bf16.gmra.mrb[0].mxu0 %v831
        %v989 = vpop.f32.mrb[0].mxu0
        %v990 = vadd.f32 0.0, %v989
        %v991 = vpop.f32.mrb[0].mxu0
        %v992 = vadd.f32 0.0, %v991
        %v993 = vpop.f32.mrb[0].mxu0
        %v994 = vadd.f32 0.0, %v993
        %v995 = vpop.f32.mrb[0].mxu0
        %v996 = vadd.f32 0.0, %v995
        %997 = vmatprep.mubr.bf16.mxu0 0
        %998 = vmatmul.mubr.bf16.gmra.mrb[0].mxu0 %v834
        %v999 = vpop.f32.mrb[0].mxu0
        %v1000 = vadd.f32 0.0, %v999
        %v1001 = vpop.f32.mrb[0].mxu0
        %v1002 = vadd.f32 0.0, %v1001
        %v1003 = vpop.f32.mrb[0].mxu0
        %v1004 = vadd.f32 0.0, %v1003
        %v1005 = vpop.f32.mrb[0].mxu0
        %v1006 = vadd.f32 0.0, %v1005
        %1007 = vmatprep.mubr.bf16.mxu0 0
        %1008 = vmatmul.mubr.bf16.gmra.mrb[0].mxu0 %v837
        %v1009 = vpop.f32.mrb[0].mxu0
        %v1010 = vadd.f32 0.0, %v1009
        %v1011 = vpop.f32.mrb[0].mxu0
        %v1012 = vadd.f32 0.0, %v1011
        %v1013 = vpop.f32.mrb[0].mxu0
        %v1014 = vadd.f32 0.0, %v1013
        %v1015 = vpop.f32.mrb[0].mxu0
        %v1016 = vadd.f32 0.0, %v1015
        %1017 = vmatprep.mubr.bf16.mxu0 0
        %1018 = vmatmul.mubr.bf16.gmra.mrb[0].mxu0 %v840
        %v1019 = vpop.f32.mrb[0].mxu0
        %v1020 = vadd.f32 0.0, %v1019
        %v1021 = vpop.f32.mrb[0].mxu0
        %v1022 = vadd.f32 0.0, %v1021
        %v1023 = vpop.f32.mrb[0].mxu0
        %v1024 = vadd.f32 0.0, %v1023
        %v1025 = vpop.f32.mrb[0].mxu0
        %v1026 = vadd.f32 0.0, %v1025
        %1027 = vmatprep.mubr.bf16.mxu0 0
        %1028 = vmatmul.mubr.bf16.gmra.mrb[0].mxu0 %v843
        %v1029 = vpop.f32.mrb[0].mxu0
        %v1030 = vadd.f32 0.0, %v1029
        %v1031 = vpop.f32.mrb[0].mxu0
        %v1032 = vadd.f32 0.0, %v1031
        %v1033 = vpop.f32.mrb[0].mxu0
        %v1034 = vadd.f32 0.0, %v1033
        %v1035 = vpop.f32.mrb[0].mxu0
        %v1036 = vadd.f32 0.0, %v1035
        %1037 = vmatprep.mubr.bf16.mxu0 0
        %1038 = vmatmul.mubr.bf16.gmra.mrb[0].mxu0 %v846
        %v1039 = vpop.f32.mrb[0].mxu0
        %v1040 = vadd.f32 0.0, %v1039
        %v1041 = vpop.f32.mrb[0].mxu0
        %v1042 = vadd.f32 0.0, %v1041
        %v1043 = vpop.f32.mrb[0].mxu0
        %v1044 = vadd.f32 0.0, %v1043
        %v1045 = vpop.f32.mrb[0].mxu0
        %v1046 = vadd.f32 0.0, %v1045
        %1047 = vdwg.mxu0
        %v1052 = vunpack.c.l.b16 %v556
        %v1053 = vunpack.c.h.b16 %v556
        %v1054 = vunpack.c.l.b16 %v557
        %v1055 = vunpack.c.h.b16 %v557
        %v1056 = vunpack.c.l.b16 %v558
        %v1057 = vunpack.c.h.b16 %v558
        %v1058 = vunpack.c.l.b16 %v559
        %v1059 = vunpack.c.h.b16 %v559
        %v1060 = vpack.c.b16 %v1054, %v1052
        %v1061 = vpack.c.b16 %v1055, %v1053
        %v1062 = vpack.c.b16 %v1058, %v1056
        %v1063 = vpack.c.b16 %v1059, %v1057
        %v1066 = vsel %vm799, %v631, 0
        %v1068 = vsel %vm799, %v632, 0
        %v1070 = vsel %vm799, %v633, 0
        %v1072 = vsel %vm799, %v634, 0
        %v1074 = vsel %vm799, %v635, 0
        %v1076 = vsel %vm799, %v636, 0
        %v1078 = vsel %vm799, %v637, 0
        %v1080 = vsel %vm799, %v638, 0
        %v1082 = vsel %vm799, %v639, 0
        %v1084 = vsel %vm799, %v640, 0
        %v1086 = vsel %vm799, %v641, 0
        %v1088 = vsel %vm799, %v642, 0
        %v1090 = vsel %vm799, %v643, 0
        %v1092 = vsel %vm799, %v644, 0
        %v1094 = vsel %vm799, %v645, 0
        %v1096 = vsel %vm799, %v646, 0
        %v1099 = vsel %vm848, %v1062, 0
        %v1102 = vsel %vm848, %v1063, 0
        %1104 = vmatprep.subr.bf16.mxu0 %v1061
        %1105 = vmatpush1.bf16.msra.mxu0 %v1060
        %1106 = vmatprep.subr.bf16.mxu0 %v1102
        %1107 = vmatpush1.bf16.msra.mxu0 %v1099
        %1108 = vmatprep.subr.bf16.mxu0 0
        %1109 = vmatpush1.bf16.msra.mxu0 0
        %1110 = vmatprep.subr.bf16.mxu0 0
        %1111 = vmatpush1.bf16.msra.mxu0 0
        %1112 = vmatprep.subr.bf16.mxu0 0
        %1113 = vmatpush1.bf16.msra.mxu0 0
        %1114 = vmatprep.subr.bf16.mxu0 0
        %1115 = vmatpush1.bf16.msra.mxu0 0
        %1116 = vmatprep.subr.bf16.mxu0 0
        %1117 = vmatpush1.bf16.msra.mxu0 0
        %1118 = vmatprep.subr.bf16.mxu0 0
        %1119 = vmatpush1.bf16.msra.mxu0 0
        %1120 = vmatprep.subr.bf16.mxu0 0
        %1121 = vmatpush1.bf16.msra.mxu0 0
        %1122 = vmatprep.subr.bf16.mxu0 0
        %1123 = vmatpush1.bf16.msra.mxu0 0
        %1124 = vmatprep.subr.bf16.mxu0 0
        %1125 = vmatpush1.bf16.msra.mxu0 0
        %1126 = vmatprep.subr.bf16.mxu0 0
        %1127 = vmatpush1.bf16.msra.mxu0 0
        %1128 = vmatprep.subr.bf16.mxu0 0
        %1129 = vmatpush1.bf16.msra.mxu0 0
        %1130 = vmatprep.subr.bf16.mxu0 0
        %1131 = vmatpush1.bf16.msra.mxu0 0
        %1132 = vmatprep.subr.bf16.mxu0 0
        %1133 = vmatpush1.bf16.msra.mxu0 0
        %1134 = vmatprep.subr.bf16.mxu0 0
        %1135 = vmatpush1.bf16.msra.mxu0 0
        %1136 = vmatprep.mubr.bf16.mxu0 0
        %1137 = vmatmul.mubr.bf16.gmra.mrb[0].mxu0 %v1066
        %v1138 = vpop.f32.mrb[0].mxu0
        %v1139 = vadd.f32 %v890, %v1138
        %v1140 = vpop.f32.mrb[0].mxu0
        %v1141 = vadd.f32 %v892, %v1140
        %v1142 = vpop.f32.mrb[0].mxu0
        %v1143 = vadd.f32 %v894, %v1142
        %v1144 = vpop.f32.mrb[0].mxu0
        %v1145 = vadd.f32 %v896, %v1144
        %1146 = vmatprep.mubr.bf16.mxu0 0
        %1147 = vmatmul.mubr.bf16.gmra.mrb[0].mxu0 %v1068
        %v1148 = vpop.f32.mrb[0].mxu0
        %v1149 = vadd.f32 %v900, %v1148
        %v1150 = vpop.f32.mrb[0].mxu0
        %v1151 = vadd.f32 %v902, %v1150
        %v1152 = vpop.f32.mrb[0].mxu0
        %v1153 = vadd.f32 %v904, %v1152
        %v1154 = vpop.f32.mrb[0].mxu0
        %v1155 = vadd.f32 %v906, %v1154
        %1156 = vmatprep.mubr.bf16.mxu0 0
        %1157 = vmatmul.mubr.bf16.gmra.mrb[0].mxu0 %v1070
        %v1158 = vpop.f32.mrb[0].mxu0
        %v1159 = vadd.f32 %v910, %v1158
        %v1160 = vpop.f32.mrb[0].mxu0
        %v1161 = vadd.f32 %v912, %v1160
        %v1162 = vpop.f32.mrb[0].mxu0
        %v1163 = vadd.f32 %v914, %v1162
        %v1164 = vpop.f32.mrb[0].mxu0
        %v1165 = vadd.f32 %v916, %v1164
        %1166 = vmatprep.mubr.bf16.mxu0 0
        %1167 = vmatmul.mubr.bf16.gmra.mrb[0].mxu0 %v1072
        %v1168 = vpop.f32.mrb[0].mxu0
        %v1169 = vadd.f32 %v920, %v1168
        %v1170 = vpop.f32.mrb[0].mxu0
        %v1171 = vadd.f32 %v922, %v1170
        %v1172 = vpop.f32.mrb[0].mxu0
        %v1173 = vadd.f32 %v924, %v1172
        %v1174 = vpop.f32.mrb[0].mxu0
        %v1175 = vadd.f32 %v926, %v1174
        %1176 = vmatprep.mubr.bf16.mxu0 0
        %1177 = vmatmul.mubr.bf16.gmra.mrb[0].mxu0 %v1074
        %v1178 = vpop.f32.mrb[0].mxu0
        %v1179 = vadd.f32 %v930, %v1178
        %v1180 = vpop.f32.mrb[0].mxu0
        %v1181 = vadd.f32 %v932, %v1180
        %v1182 = vpop.f32.mrb[0].mxu0
        %v1183 = vadd.f32 %v934, %v1182
        %v1184 = vpop.f32.mrb[0].mxu0
        %v1185 = vadd.f32 %v936, %v1184
        %1186 = vmatprep.mubr.bf16.mxu0 0
        %1187 = vmatmul.mubr.bf16.gmra.mrb[0].mxu0 %v1076
        %v1188 = vpop.f32.mrb[0].mxu0
        %v1189 = vadd.f32 %v940, %v1188
        %v1190 = vpop.f32.mrb[0].mxu0
        %v1191 = vadd.f32 %v942, %v1190
        %v1192 = vpop.f32.mrb[0].mxu0
        %v1193 = vadd.f32 %v944, %v1192
        %v1194 = vpop.f32.mrb[0].mxu0
        %v1195 = vadd.f32 %v946, %v1194
        %1196 = vmatprep.mubr.bf16.mxu0 0
        %1197 = vmatmul.mubr.bf16.gmra.mrb[0].mxu0 %v1078
        %v1198 = vpop.f32.mrb[0].mxu0
        %v1199 = vadd.f32 %v950, %v1198
        %v1200 = vpop.f32.mrb[0].mxu0
        %v1201 = vadd.f32 %v952, %v1200
        %v1202 = vpop.f32.mrb[0].mxu0
        %v1203 = vadd.f32 %v954, %v1202
        %v1204 = vpop.f32.mrb[0].mxu0
        %v1205 = vadd.f32 %v956, %v1204
        %1206 = vmatprep.mubr.bf16.mxu0 0
        %1207 = vmatmul.mubr.bf16.gmra.mrb[0].mxu0 %v1080
        %v1208 = vpop.f32.mrb[0].mxu0
        %v1209 = vadd.f32 %v960, %v1208
        %v1210 = vpop.f32.mrb[0].mxu0
        %v1211 = vadd.f32 %v962, %v1210
        %v1212 = vpop.f32.mrb[0].mxu0
        %v1213 = vadd.f32 %v964, %v1212
        %v1214 = vpop.f32.mrb[0].mxu0
        %v1215 = vadd.f32 %v966, %v1214
        %1216 = vmatprep.mubr.bf16.mxu0 0
        %1217 = vmatmul.mubr.bf16.gmra.mrb[0].mxu0 %v1082
        %v1218 = vpop.f32.mrb[0].mxu0
        %v1219 = vadd.f32 %v970, %v1218
        %v1220 = vpop.f32.mrb[0].mxu0
        %v1221 = vadd.f32 %v972, %v1220
        %v1222 = vpop.f32.mrb[0].mxu0
        %v1223 = vadd.f32 %v974, %v1222
        %v1224 = vpop.f32.mrb[0].mxu0
        %v1225 = vadd.f32 %v976, %v1224
        %1226 = vmatprep.mubr.bf16.mxu0 0
        %1227 = vmatmul.mubr.bf16.gmra.mrb[0].mxu0 %v1084
        %v1228 = vpop.f32.mrb[0].mxu0
        %v1229 = vadd.f32 %v980, %v1228
        %v1230 = vpop.f32.mrb[0].mxu0
        %v1231 = vadd.f32 %v982, %v1230
        %v1232 = vpop.f32.mrb[0].mxu0
        %v1233 = vadd.f32 %v984, %v1232
        %v1234 = vpop.f32.mrb[0].mxu0
        %v1235 = vadd.f32 %v986, %v1234
        %1236 = vmatprep.mubr.bf16.mxu0 0
        %1237 = vmatmul.mubr.bf16.gmra.mrb[0].mxu0 %v1086
        %v1238 = vpop.f32.mrb[0].mxu0
        %v1239 = vadd.f32 %v990, %v1238
        %v1240 = vpop.f32.mrb[0].mxu0
        %v1241 = vadd.f32 %v992, %v1240
        %v1242 = vpop.f32.mrb[0].mxu0
        %v1243 = vadd.f32 %v994, %v1242
        %v1244 = vpop.f32.mrb[0].mxu0
        %v1245 = vadd.f32 %v996, %v1244
        %1246 = vmatprep.mubr.bf16.mxu0 0
        %1247 = vmatmul.mubr.bf16.gmra.mrb[0].mxu0 %v1088
        %v1248 = vpop.f32.mrb[0].mxu0
        %v1249 = vadd.f32 %v1000, %v1248
        %v1250 = vpop.f32.mrb[0].mxu0
        %v1251 = vadd.f32 %v1002, %v1250
        %v1252 = vpop.f32.mrb[0].mxu0
        %v1253 = vadd.f32 %v1004, %v1252
        %v1254 = vpop.f32.mrb[0].mxu0
        %v1255 = vadd.f32 %v1006, %v1254
        %1256 = vmatprep.mubr.bf16.mxu0 0
        %1257 = vmatmul.mubr.bf16.gmra.mrb[0].mxu0 %v1090
        %v1258 = vpop.f32.mrb[0].mxu0
        %v1259 = vadd.f32 %v1010, %v1258
        %v1260 = vpop.f32.mrb[0].mxu0
        %v1261 = vadd.f32 %v1012, %v1260
        %v1262 = vpop.f32.mrb[0].mxu0
        %v1263 = vadd.f32 %v1014, %v1262
        %v1264 = vpop.f32.mrb[0].mxu0
        %v1265 = vadd.f32 %v1016, %v1264
        %1266 = vmatprep.mubr.bf16.mxu0 0
        %1267 = vmatmul.mubr.bf16.gmra.mrb[0].mxu0 %v1092
        %v1268 = vpop.f32.mrb[0].mxu0
        %v1269 = vadd.f32 %v1020, %v1268
        %v1270 = vpop.f32.mrb[0].mxu0
        %v1271 = vadd.f32 %v1022, %v1270
        %v1272 = vpop.f32.mrb[0].mxu0
        %v1273 = vadd.f32 %v1024, %v1272
        %v1274 = vpop.f32.mrb[0].mxu0
        %v1275 = vadd.f32 %v1026, %v1274
        %1276 = vmatprep.mubr.bf16.mxu0 0
        %1277 = vmatmul.mubr.bf16.gmra.mrb[0].mxu0 %v1094
        %v1278 = vpop.f32.mrb[0].mxu0
        %v1279 = vadd.f32 %v1030, %v1278
        %v1280 = vpop.f32.mrb[0].mxu0
        %v1281 = vadd.f32 %v1032, %v1280
        %v1282 = vpop.f32.mrb[0].mxu0
        %v1283 = vadd.f32 %v1034, %v1282
        %v1284 = vpop.f32.mrb[0].mxu0
        %v1285 = vadd.f32 %v1036, %v1284
        %1286 = vmatprep.mubr.bf16.mxu0 0
        %1287 = vmatmul.mubr.bf16.gmra.mrb[0].mxu0 %v1096
        %v1288 = vpop.f32.mrb[0].mxu0
        %v1289 = vadd.f32 %v1040, %v1288
        %v1290 = vpop.f32.mrb[0].mxu0
        %v1291 = vadd.f32 %v1042, %v1290
        %v1292 = vpop.f32.mrb[0].mxu0
        %v1293 = vadd.f32 %v1044, %v1292
        %v1294 = vpop.f32.mrb[0].mxu0
        %v1295 = vadd.f32 %v1046, %v1294
        %1296 = vdwg.mxu0
        %s1297 = scalar_lea.vmem %s1, 64
        %v1298 = vld [vmem:[%s1297] sm:$0xff]
        %v1299 = vld [vmem:[%s1297 + $0x8] sm:$0xff]
        %v1300 = vld [vmem:[%s1297 + $0x10] sm:$0xff]
        %v1301 = vld [vmem:[%s1297 + $0x18] sm:$0x33]
        %vm1302 = vcmask 1046528
        %v1303 = vrot.slane %v631, 1
        %v1304 = vrot.slane %v632, 1
        %v1305 = vsel %vm1302, %v1303, %v1304
        %v1306 = vrot.slane %v633, 1
        %v1307 = vsel %vm1302, %v1304, %v1306
        %v1308 = vrot.slane %v634, 1
        %v1309 = vsel %vm1302, %v1306, %v1308
        %v1310 = vrot.slane %v635, 1
        %v1311 = vsel %vm1302, %v1308, %v1310
        %v1312 = vrot.slane %v636, 1
        %v1313 = vsel %vm1302, %v1310, %v1312
        %v1314 = vrot.slane %v637, 1
        %v1315 = vsel %vm1302, %v1312, %v1314
        %v1316 = vrot.slane %v638, 1
        %v1317 = vsel %vm1302, %v1314, %v1316
        %v1318 = vrot.slane %v639, 1
        %v1319 = vsel %vm1302, %v1316, %v1318
        %v1320 = vrot.slane %v640, 1
        %v1321 = vsel %vm1302, %v1318, %v1320
        %v1322 = vrot.slane %v641, 1
        %v1323 = vsel %vm1302, %v1320, %v1322
        %v1324 = vrot.slane %v642, 1
        %v1325 = vsel %vm1302, %v1322, %v1324
        %v1326 = vrot.slane %v643, 1
        %v1327 = vsel %vm1302, %v1324, %v1326
        %v1328 = vrot.slane %v644, 1
        %v1329 = vsel %vm1302, %v1326, %v1328
        %v1330 = vrot.slane %v645, 1
        %v1331 = vsel %vm1302, %v1328, %v1330
        %v1332 = vrot.slane %v646, 1
        %v1333 = vsel %vm1302, %v1330, %v1332
        %v1334 = vrot.slane %v647, 1
        %v1335 = vsel %vm1302, %v1332, %v1334
        %v1340 = vunpack.c.l.b16 %v1298
        %v1341 = vunpack.c.h.b16 %v1298
        %v1342 = vunpack.c.l.b16 %v1299
        %v1343 = vunpack.c.h.b16 %v1299
        %v1344 = vunpack.c.l.b16 %v1300
        %v1345 = vunpack.c.h.b16 %v1300
        %v1346 = vunpack.c.l.b16 %v1301
        %v1347 = vunpack.c.h.b16 %v1301
        %v1348 = vpack.c.b16 %v1342, %v1340
        %v1349 = vpack.c.b16 %v1343, %v1341
        %v1350 = vpack.c.b16 %v1346, %v1344
        %v1351 = vpack.c.b16 %v1347, %v1345
        %v1355 = vsel %vm799, %v1305, 0
        %v1358 = vsel %vm799, %v1307, 0
        %v1361 = vsel %vm799, %v1309, 0
        %v1364 = vsel %vm799, %v1311, 0
        %v1367 = vsel %vm799, %v1313, 0
        %v1370 = vsel %vm799, %v1315, 0
        %v1373 = vsel %vm799, %v1317, 0
        %v1376 = vsel %vm799, %v1319, 0
        %v1379 = vsel %vm799, %v1321, 0
        %v1382 = vsel %vm799, %v1323, 0
        %v1385 = vsel %vm799, %v1325, 0
        %v1388 = vsel %vm799, %v1327, 0
        %v1391 = vsel %vm799, %v1329, 0
        %v1394 = vsel %vm799, %v1331, 0
        %v1397 = vsel %vm799, %v1333, 0
        %v1400 = vsel %vm799, %v1335, 0
        %v1403 = vsel %vm848, %v1350, 0
        %v1406 = vsel %vm848, %v1351, 0
        %1408 = vmatprep.subr.bf16.mxu0 %v1349
        %1409 = vmatpush1.bf16.msra.mxu0 %v1348
        %1410 = vmatprep.subr.bf16.mxu0 %v1406
        %1411 = vmatpush1.bf16.msra.mxu0 %v1403
        %1412 = vmatprep.subr.bf16.mxu0 0
        %1413 = vmatpush1.bf16.msra.mxu0 0
        %1414 = vmatprep.subr.bf16.mxu0 0
        %1415 = vmatpush1.bf16.msra.mxu0 0
        %1416 = vmatprep.subr.bf16.mxu0 0
        %1417 = vmatpush1.bf16.msra.mxu0 0
        %1418 = vmatprep.subr.bf16.mxu0 0
        %1419 = vmatpush1.bf16.msra.mxu0 0
        %1420 = vmatprep.subr.bf16.mxu0 0
        %1421 = vmatpush1.bf16.msra.mxu0 0
        %1422 = vmatprep.subr.bf16.mxu0 0
        %1423 = vmatpush1.bf16.msra.mxu0 0
        %1424 = vmatprep.subr.bf16.mxu0 0
        %1425 = vmatpush1.bf16.msra.mxu0 0
        %1426 = vmatprep.subr.bf16.mxu0 0
        %1427 = vmatpush1.bf16.msra.mxu0 0
        %1428 = vmatprep.subr.bf16.mxu0 0
        %1429 = vmatpush1.bf16.msra.mxu0 0
        %1430 = vmatprep.subr.bf16.mxu0 0
        %1431 = vmatpush1.bf16.msra.mxu0 0
        %1432 = vmatprep.subr.bf16.mxu0 0
        %1433 = vmatpush1.bf16.msra.mxu0 0
        %1434 = vmatprep.subr.bf16.mxu0 0
        %1435 = vmatpush1.bf16.msra.mxu0 0
        %1436 = vmatprep.subr.bf16.mxu0 0
        %1437 = vmatpush1.bf16.msra.mxu0 0
        %1438 = vmatprep.subr.bf16.mxu0 0
        %1439 = vmatpush1.bf16.msra.mxu0 0
        %1440 = vmatprep.mubr.bf16.mxu0 0
        %1441 = vmatmul.mubr.bf16.gmra.mrb[0].mxu0 %v1355
        %v1442 = vpop.f32.mrb[0].mxu0
        %v1443 = vadd.f32 0.0, %v1442
        %v1444 = vpop.f32.mrb[0].mxu0
        %v1445 = vadd.f32 0.0, %v1444
        %v1446 = vpop.f32.mrb[0].mxu0
        %v1447 = vadd.f32 0.0, %v1446
        %v1448 = vpop.f32.mrb[0].mxu0
        %v1449 = vadd.f32 0.0, %v1448
        %1450 = vmatprep.mubr.bf16.mxu0 0
        %1451 = vmatmul.mubr.bf16.gmra.mrb[0].mxu0 %v1358
        %v1452 = vpop.f32.mrb[0].mxu0
        %v1453 = vadd.f32 0.0, %v1452
        %v1454 = vpop.f32.mrb[0].mxu0
        %v1455 = vadd.f32 0.0, %v1454
        %v1456 = vpop.f32.mrb[0].mxu0
        %v1457 = vadd.f32 0.0, %v1456
        %v1458 = vpop.f32.mrb[0].mxu0
        %v1459 = vadd.f32 0.0, %v1458
        %1460 = vmatprep.mubr.bf16.mxu0 0
        %1461 = vmatmul.mubr.bf16.gmra.mrb[0].mxu0 %v1361
        %v1462 = vpop.f32.mrb[0].mxu0
        %v1463 = vadd.f32 0.0, %v1462
        %v1464 = vpop.f32.mrb[0].mxu0
        %v1465 = vadd.f32 0.0, %v1464
        %v1466 = vpop.f32.mrb[0].mxu0
        %v1467 = vadd.f32 0.0, %v1466
        %v1468 = vpop.f32.mrb[0].mxu0
        %v1469 = vadd.f32 0.0, %v1468
        %1470 = vmatprep.mubr.bf16.mxu0 0
        %1471 = vmatmul.mubr.bf16.gmra.mrb[0].mxu0 %v1364
        %v1472 = vpop.f32.mrb[0].mxu0
        %v1473 = vadd.f32 0.0, %v1472
        %v1474 = vpop.f32.mrb[0].mxu0
        %v1475 = vadd.f32 0.0, %v1474
        %v1476 = vpop.f32.mrb[0].mxu0
        %v1477 = vadd.f32 0.0, %v1476
        %v1478 = vpop.f32.mrb[0].mxu0
        %v1479 = vadd.f32 0.0, %v1478
        %1480 = vmatprep.mubr.bf16.mxu0 0
        %1481 = vmatmul.mubr.bf16.gmra.mrb[0].mxu0 %v1367
        %v1482 = vpop.f32.mrb[0].mxu0
        %v1483 = vadd.f32 0.0, %v1482
        %v1484 = vpop.f32.mrb[0].mxu0
        %v1485 = vadd.f32 0.0, %v1484
        %v1486 = vpop.f32.mrb[0].mxu0
        %v1487 = vadd.f32 0.0, %v1486
        %v1488 = vpop.f32.mrb[0].mxu0
        %v1489 = vadd.f32 0.0, %v1488
        %1490 = vmatprep.mubr.bf16.mxu0 0
        %1491 = vmatmul.mubr.bf16.gmra.mrb[0].mxu0 %v1370
        %v1492 = vpop.f32.mrb[0].mxu0
        %v1493 = vadd.f32 0.0, %v1492
        %v1494 = vpop.f32.mrb[0].mxu0
        %v1495 = vadd.f32 0.0, %v1494
        %v1496 = vpop.f32.mrb[0].mxu0
        %v1497 = vadd.f32 0.0, %v1496
        %v1498 = vpop.f32.mrb[0].mxu0
        %v1499 = vadd.f32 0.0, %v1498
        %1500 = vmatprep.mubr.bf16.mxu0 0
        %1501 = vmatmul.mubr.bf16.gmra.mrb[0].mxu0 %v1373
        %v1502 = vpop.f32.mrb[0].mxu0
        %v1503 = vadd.f32 0.0, %v1502
        %v1504 = vpop.f32.mrb[0].mxu0
        %v1505 = vadd.f32 0.0, %v1504
        %v1506 = vpop.f32.mrb[0].mxu0
        %v1507 = vadd.f32 0.0, %v1506
        %v1508 = vpop.f32.mrb[0].mxu0
        %v1509 = vadd.f32 0.0, %v1508
        %1510 = vmatprep.mubr.bf16.mxu0 0
        %1511 = vmatmul.mubr.bf16.gmra.mrb[0].mxu0 %v1376
        %v1512 = vpop.f32.mrb[0].mxu0
        %v1513 = vadd.f32 0.0, %v1512
        %v1514 = vpop.f32.mrb[0].mxu0
        %v1515 = vadd.f32 0.0, %v1514
        %v1516 = vpop.f32.mrb[0].mxu0
        %v1517 = vadd.f32 0.0, %v1516
        %v1518 = vpop.f32.mrb[0].mxu0
        %v1519 = vadd.f32 0.0, %v1518
        %1520 = vmatprep.mubr.bf16.mxu0 0
        %1521 = vmatmul.mubr.bf16.gmra.mrb[0].mxu0 %v1379
        %v1522 = vpop.f32.mrb[0].mxu0
        %v1523 = vadd.f32 0.0, %v1522
        %v1524 = vpop.f32.mrb[0].mxu0
        %v1525 = vadd.f32 0.0, %v1524
        %v1526 = vpop.f32.mrb[0].mxu0
        %v1527 = vadd.f32 0.0, %v1526
        %v1528 = vpop.f32.mrb[0].mxu0
        %v1529 = vadd.f32 0.0, %v1528
        %1530 = vmatprep.mubr.bf16.mxu0 0
        %1531 = vmatmul.mubr.bf16.gmra.mrb[0].mxu0 %v1382
        %v1532 = vpop.f32.mrb[0].mxu0
        %v1533 = vadd.f32 0.0, %v1532
        %v1534 = vpop.f32.mrb[0].mxu0
        %v1535 = vadd.f32 0.0, %v1534
        %v1536 = vpop.f32.mrb[0].mxu0
        %v1537 = vadd.f32 0.0, %v1536
        %v1538 = vpop.f32.mrb[0].mxu0
        %v1539 = vadd.f32 0.0, %v1538
        %1540 = vmatprep.mubr.bf16.mxu0 0
        %1541 = vmatmul.mubr.bf16.gmra.mrb[0].mxu0 %v1385
        %v1542 = vpop.f32.mrb[0].mxu0
        %v1543 = vadd.f32 0.0, %v1542
        %v1544 = vpop.f32.mrb[0].mxu0
        %v1545 = vadd.f32 0.0, %v1544
        %v1546 = vpop.f32.mrb[0].mxu0
        %v1547 = vadd.f32 0.0, %v1546
        %v1548 = vpop.f32.mrb[0].mxu0
        %v1549 = vadd.f32 0.0, %v1548
        %1550 = vmatprep.mubr.bf16.mxu0 0
        %1551 = vmatmul.mubr.bf16.gmra.mrb[0].mxu0 %v1388
        %v1552 = vpop.f32.mrb[0].mxu0
        %v1553 = vadd.f32 0.0, %v1552
        %v1554 = vpop.f32.mrb[0].mxu0
        %v1555 = vadd.f32 0.0, %v1554
        %v1556 = vpop.f32.mrb[0].mxu0
        %v1557 = vadd.f32 0.0, %v1556
        %v1558 = vpop.f32.mrb[0].mxu0
        %v1559 = vadd.f32 0.0, %v1558
        %1560 = vmatprep.mubr.bf16.mxu0 0
        %1561 = vmatmul.mubr.bf16.gmra.mrb[0].mxu0 %v1391
        %v1562 = vpop.f32.mrb[0].mxu0
        %v1563 = vadd.f32 0.0, %v1562
        %v1564 = vpop.f32.mrb[0].mxu0
        %v1565 = vadd.f32 0.0, %v1564
        %v1566 = vpop.f32.mrb[0].mxu0
        %v1567 = vadd.f32 0.0, %v1566
        %v1568 = vpop.f32.mrb[0].mxu0
        %v1569 = vadd.f32 0.0, %v1568
        %1570 = vmatprep.mubr.bf16.mxu0 0
        %1571 = vmatmul.mubr.bf16.gmra.mrb[0].mxu0 %v1394
        %v1572 = vpop.f32.mrb[0].mxu0
        %v1573 = vadd.f32 0.0, %v1572
        %v1574 = vpop.f32.mrb[0].mxu0
        %v1575 = vadd.f32 0.0, %v1574
        %v1576 = vpop.f32.mrb[0].mxu0
        %v1577 = vadd.f32 0.0, %v1576
        %v1578 = vpop.f32.mrb[0].mxu0
        %v1579 = vadd.f32 0.0, %v1578
        %1580 = vmatprep.mubr.bf16.mxu0 0
        %1581 = vmatmul.mubr.bf16.gmra.mrb[0].mxu0 %v1397
        %v1582 = vpop.f32.mrb[0].mxu0
        %v1583 = vadd.f32 0.0, %v1582
        %v1584 = vpop.f32.mrb[0].mxu0
        %v1585 = vadd.f32 0.0, %v1584
        %v1586 = vpop.f32.mrb[0].mxu0
        %v1587 = vadd.f32 0.0, %v1586
        %v1588 = vpop.f32.mrb[0].mxu0
        %v1589 = vadd.f32 0.0, %v1588
        %1590 = vmatprep.mubr.bf16.mxu0 0
        %1591 = vmatmul.mubr.bf16.gmra.mrb[0].mxu0 %v1400
        %v1592 = vpop.f32.mrb[0].mxu0
        %v1593 = vadd.f32 0.0, %v1592
        %v1594 = vpop.f32.mrb[0].mxu0
        %v1595 = vadd.f32 0.0, %v1594
        %v1596 = vpop.f32.mrb[0].mxu0
        %v1597 = vadd.f32 0.0, %v1596
        %v1598 = vpop.f32.mrb[0].mxu0
        %v1599 = vadd.f32 0.0, %v1598
        %1600 = vdwg.mxu0
        %v1601 = vadd.f32 %v1139, %v1443
        %v1602 = vadd.f32 %v1141, %v1445
        %v1603 = vadd.f32 %v1143, %v1447
        %v1604 = vadd.f32 %v1145, %v1449
        %v1605 = vadd.f32 %v1149, %v1453
        %v1606 = vadd.f32 %v1151, %v1455
        %v1607 = vadd.f32 %v1153, %v1457
        %v1608 = vadd.f32 %v1155, %v1459
        %v1609 = vadd.f32 %v1159, %v1463
        %v1610 = vadd.f32 %v1161, %v1465
        %v1611 = vadd.f32 %v1163, %v1467
        %v1612 = vadd.f32 %v1165, %v1469
        %v1613 = vadd.f32 %v1169, %v1473
        %v1614 = vadd.f32 %v1171, %v1475
        %v1615 = vadd.f32 %v1173, %v1477
        %v1616 = vadd.f32 %v1175, %v1479
        %v1617 = vadd.f32 %v1179, %v1483
        %v1618 = vadd.f32 %v1181, %v1485
        %v1619 = vadd.f32 %v1183, %v1487
        %v1620 = vadd.f32 %v1185, %v1489
        %v1621 = vadd.f32 %v1189, %v1493
        %v1622 = vadd.f32 %v1191, %v1495
        %v1623 = vadd.f32 %v1193, %v1497
        %v1624 = vadd.f32 %v1195, %v1499
        %v1625 = vadd.f32 %v1199, %v1503
        %v1626 = vadd.f32 %v1201, %v1505
        %v1627 = vadd.f32 %v1203, %v1507
        %v1628 = vadd.f32 %v1205, %v1509
        %v1629 = vadd.f32 %v1209, %v1513
        %v1630 = vadd.f32 %v1211, %v1515
        %v1631 = vadd.f32 %v1213, %v1517
        %v1632 = vadd.f32 %v1215, %v1519
        %v1633 = vadd.f32 %v1219, %v1523
        %v1634 = vadd.f32 %v1221, %v1525
        %v1635 = vadd.f32 %v1223, %v1527
        %v1636 = vadd.f32 %v1225, %v1529
        %v1637 = vadd.f32 %v1229, %v1533
        %v1638 = vadd.f32 %v1231, %v1535
        %v1639 = vadd.f32 %v1233, %v1537
        %v1640 = vadd.f32 %v1235, %v1539
        %v1641 = vadd.f32 %v1239, %v1543
        %v1642 = vadd.f32 %v1241, %v1545
        %v1643 = vadd.f32 %v1243, %v1547
        %v1644 = vadd.f32 %v1245, %v1549
        %v1645 = vadd.f32 %v1249, %v1553
        %v1646 = vadd.f32 %v1251, %v1555
        %v1647 = vadd.f32 %v1253, %v1557
        %v1648 = vadd.f32 %v1255, %v1559
        %v1649 = vadd.f32 %v1259, %v1563
        %v1650 = vadd.f32 %v1261, %v1565
        %v1651 = vadd.f32 %v1263, %v1567
        %v1652 = vadd.f32 %v1265, %v1569
        %v1653 = vadd.f32 %v1269, %v1573
        %v1654 = vadd.f32 %v1271, %v1575
        %v1655 = vadd.f32 %v1273, %v1577
        %v1656 = vadd.f32 %v1275, %v1579
        %v1657 = vadd.f32 %v1279, %v1583
        %v1658 = vadd.f32 %v1281, %v1585
        %v1659 = vadd.f32 %v1283, %v1587
        %v1660 = vadd.f32 %v1285, %v1589
        %v1661 = vadd.f32 %v1289, %v1593
        %v1662 = vadd.f32 %v1291, %v1595
        %v1663 = vadd.f32 %v1293, %v1597
        %v1664 = vadd.f32 %v1295, %v1599
        %s1665 = scalar_lea.vmem %s1, 96
        %v1666 = vld [vmem:[%s1665] sm:$0xff]
        %v1667 = vld [vmem:[%s1665 + $0x8] sm:$0xff]
        %v1668 = vld [vmem:[%s1665 + $0x10] sm:$0xff]
        %v1669 = vld [vmem:[%s1665 + $0x18] sm:$0x33]
        %vm1670 = vsmask.f32 6400
        %v1671 = vrot.slane %v650, 1
        %v1672 = vrot.slane %v652, 2
        %v1673 = vor.u32 %v1671, %v1672
        %v1674 = vrot.slane %v661, 1
        %v1675 = vrot.slane %v657, 2
        %v1676 = vor.u32 %v1674, %v1675
        %v1677 = vsel %vm1670, %v1673, %v1676
        %v1678 = vrot.slane %v669, 1
        %v1679 = vrot.slane %v665, 2
        %v1680 = vor.u32 %v1678, %v1679
        %v1681 = vsel %vm1670, %v1676, %v1680
        %v1682 = vrot.slane %v677, 1
        %v1683 = vrot.slane %v673, 2
        %v1684 = vor.u32 %v1682, %v1683
        %v1685 = vsel %vm1670, %v1680, %v1684
        %v1686 = vrot.slane %v685, 1
        %v1687 = vrot.slane %v681, 2
        %v1688 = vor.u32 %v1686, %v1687
        %v1689 = vsel %vm1670, %v1684, %v1688
        %v1690 = vrot.slane %v693, 1
        %v1691 = vrot.slane %v689, 2
        %v1692 = vor.u32 %v1690, %v1691
        %v1693 = vsel %vm1670, %v1688, %v1692
        %v1694 = vrot.slane %v701, 1
        %v1695 = vrot.slane %v697, 2
        %v1696 = vor.u32 %v1694, %v1695
        %v1697 = vsel %vm1670, %v1692, %v1696
        %v1698 = vrot.slane %v709, 1
        %v1699 = vrot.slane %v705, 2
        %v1700 = vor.u32 %v1698, %v1699
        %v1701 = vsel %vm1670, %v1696, %v1700
        %v1702 = vrot.slane %v717, 1
        %v1703 = vrot.slane %v713, 2
        %v1704 = vor.u32 %v1702, %v1703
        %v1705 = vsel %vm1670, %v1700, %v1704
        %v1706 = vrot.slane %v725, 1
        %v1707 = vrot.slane %v721, 2
        %v1708 = vor.u32 %v1706, %v1707
        %v1709 = vsel %vm1670, %v1704, %v1708
        %v1710 = vrot.slane %v733, 1
        %v1711 = vrot.slane %v729, 2
        %v1712 = vor.u32 %v1710, %v1711
        %v1713 = vsel %vm1670, %v1708, %v1712
        %v1714 = vrot.slane %v741, 1
        %v1715 = vrot.slane %v737, 2
        %v1716 = vor.u32 %v1714, %v1715
        %v1717 = vsel %vm1670, %v1712, %v1716
        %v1718 = vrot.slane %v749, 1
        %v1719 = vrot.slane %v745, 2
        %v1720 = vor.u32 %v1718, %v1719
        %v1721 = vsel %vm1670, %v1716, %v1720
        %v1722 = vrot.slane %v757, 1
        %v1723 = vrot.slane %v753, 2
        %v1724 = vor.u32 %v1722, %v1723
        %v1725 = vsel %vm1670, %v1720, %v1724
        %v1726 = vrot.slane %v765, 1
        %v1727 = vrot.slane %v761, 2
        %v1728 = vor.u32 %v1726, %v1727
        %v1729 = vsel %vm1670, %v1724, %v1728
        %v1730 = vrot.slane %v773, 1
        %v1731 = vrot.slane %v769, 2
        %v1732 = vor.u32 %v1730, %v1731
        %v1733 = vsel %vm1670, %v1728, %v1732
        %v1734 = vshrl.u32 %v647, 16
        %v1736 = vrot.slane %v1734, 1
        %v1737 = vrot.slane %v777, 2
        %v1738 = vor.u32 %v1736, %v1737
        %v1739 = vsel %vm1670, %v1732, %v1738
        %v1744 = vunpack.c.l.b16 %v1666
        %v1745 = vunpack.c.h.b16 %v1666
        %v1746 = vunpack.c.l.b16 %v1667
        %v1747 = vunpack.c.h.b16 %v1667
        %v1748 = vunpack.c.l.b16 %v1668
        %v1749 = vunpack.c.h.b16 %v1668
        %v1750 = vunpack.c.l.b16 %v1669
        %v1751 = vunpack.c.h.b16 %v1669
        %v1752 = vpack.c.b16 %v1746, %v1744
        %v1753 = vpack.c.b16 %v1747, %v1745
        %v1754 = vpack.c.b16 %v1750, %v1748
        %v1755 = vpack.c.b16 %v1751, %v1749
        %v1759 = vsel %vm799, %v1677, 0
        %v1762 = vsel %vm799, %v1681, 0
        %v1765 = vsel %vm799, %v1685, 0
        %v1768 = vsel %vm799, %v1689, 0
        %v1771 = vsel %vm799, %v1693, 0
        %v1774 = vsel %vm799, %v1697, 0
        %v1777 = vsel %vm799, %v1701, 0
        %v1780 = vsel %vm799, %v1705, 0
        %v1783 = vsel %vm799, %v1709, 0
        %v1786 = vsel %vm799, %v1713, 0
        %v1789 = vsel %vm799, %v1717, 0
        %v1792 = vsel %vm799, %v1721, 0
        %v1795 = vsel %vm799, %v1725, 0
        %v1798 = vsel %vm799, %v1729, 0
        %v1801 = vsel %vm799, %v1733, 0
        %v1804 = vsel %vm799, %v1739, 0
        %v1807 = vsel %vm848, %v1754, 0
        %v1810 = vsel %vm848, %v1755, 0
        %1812 = vmatprep.subr.bf16.mxu0 %v1753
        %1813 = vmatpush1.bf16.msra.mxu0 %v1752
        %1814 = vmatprep.subr.bf16.mxu0 %v1810
        %1815 = vmatpush1.bf16.msra.mxu0 %v1807
        %1816 = vmatprep.subr.bf16.mxu0 0
        %1817 = vmatpush1.bf16.msra.mxu0 0
        %1818 = vmatprep.subr.bf16.mxu0 0
        %1819 = vmatpush1.bf16.msra.mxu0 0
        %1820 = vmatprep.subr.bf16.mxu0 0
        %1821 = vmatpush1.bf16.msra.mxu0 0
        %1822 = vmatprep.subr.bf16.mxu0 0
        %1823 = vmatpush1.bf16.msra.mxu0 0
        %1824 = vmatprep.subr.bf16.mxu0 0
        %1825 = vmatpush1.bf16.msra.mxu0 0
        %1826 = vmatprep.subr.bf16.mxu0 0
        %1827 = vmatpush1.bf16.msra.mxu0 0
        %1828 = vmatprep.subr.bf16.mxu0 0
        %1829 = vmatpush1.bf16.msra.mxu0 0
        %1830 = vmatprep.subr.bf16.mxu0 0
        %1831 = vmatpush1.bf16.msra.mxu0 0
        %1832 = vmatprep.subr.bf16.mxu0 0
        %1833 = vmatpush1.bf16.msra.mxu0 0
        %1834 = vmatprep.subr.bf16.mxu0 0
        %1835 = vmatpush1.bf16.msra.mxu0 0
        %1836 = vmatprep.subr.bf16.mxu0 0
        %1837 = vmatpush1.bf16.msra.mxu0 0
        %1838 = vmatprep.subr.bf16.mxu0 0
        %1839 = vmatpush1.bf16.msra.mxu0 0
        %1840 = vmatprep.subr.bf16.mxu0 0
        %1841 = vmatpush1.bf16.msra.mxu0 0
        %1842 = vmatprep.subr.bf16.mxu0 0
        %1843 = vmatpush1.bf16.msra.mxu0 0
        %1844 = vmatprep.mubr.bf16.mxu0 0
        %1845 = vmatmul.mubr.bf16.gmra.mrb[0].mxu0 %v1759
        %v1846 = vpop.f32.mrb[0].mxu0
        %v1847 = vadd.f32 0.0, %v1846
        %v1848 = vpop.f32.mrb[0].mxu0
        %v1849 = vadd.f32 0.0, %v1848
        %v1850 = vpop.f32.mrb[0].mxu0
        %v1851 = vadd.f32 0.0, %v1850
        %v1852 = vpop.f32.mrb[0].mxu0
        %v1853 = vadd.f32 0.0, %v1852
        %1854 = vmatprep.mubr.bf16.mxu0 0
        %1855 = vmatmul.mubr.bf16.gmra.mrb[0].mxu0 %v1762
        %v1856 = vpop.f32.mrb[0].mxu0
        %v1857 = vadd.f32 0.0, %v1856
        %v1858 = vpop.f32.mrb[0].mxu0
        %v1859 = vadd.f32 0.0, %v1858
        %v1860 = vpop.f32.mrb[0].mxu0
        %v1861 = vadd.f32 0.0, %v1860
        %v1862 = vpop.f32.mrb[0].mxu0
        %v1863 = vadd.f32 0.0, %v1862
        %1864 = vmatprep.mubr.bf16.mxu0 0
        %1865 = vmatmul.mubr.bf16.gmra.mrb[0].mxu0 %v1765
        %v1866 = vpop.f32.mrb[0].mxu0
        %v1867 = vadd.f32 0.0, %v1866
        %v1868 = vpop.f32.mrb[0].mxu0
        %v1869 = vadd.f32 0.0, %v1868
        %v1870 = vpop.f32.mrb[0].mxu0
        %v1871 = vadd.f32 0.0, %v1870
        %v1872 = vpop.f32.mrb[0].mxu0
        %v1873 = vadd.f32 0.0, %v1872
        %1874 = vmatprep.mubr.bf16.mxu0 0
        %1875 = vmatmul.mubr.bf16.gmra.mrb[0].mxu0 %v1768
        %v1876 = vpop.f32.mrb[0].mxu0
        %v1877 = vadd.f32 0.0, %v1876
        %v1878 = vpop.f32.mrb[0].mxu0
        %v1879 = vadd.f32 0.0, %v1878
        %v1880 = vpop.f32.mrb[0].mxu0
        %v1881 = vadd.f32 0.0, %v1880
        %v1882 = vpop.f32.mrb[0].mxu0
        %v1883 = vadd.f32 0.0, %v1882
        %1884 = vmatprep.mubr.bf16.mxu0 0
        %1885 = vmatmul.mubr.bf16.gmra.mrb[0].mxu0 %v1771
        %v1886 = vpop.f32.mrb[0].mxu0
        %v1887 = vadd.f32 0.0, %v1886
        %v1888 = vpop.f32.mrb[0].mxu0
        %v1889 = vadd.f32 0.0, %v1888
        %v1890 = vpop.f32.mrb[0].mxu0
        %v1891 = vadd.f32 0.0, %v1890
        %v1892 = vpop.f32.mrb[0].mxu0
        %v1893 = vadd.f32 0.0, %v1892
        %1894 = vmatprep.mubr.bf16.mxu0 0
        %1895 = vmatmul.mubr.bf16.gmra.mrb[0].mxu0 %v1774
        %v1896 = vpop.f32.mrb[0].mxu0
        %v1897 = vadd.f32 0.0, %v1896
        %v1898 = vpop.f32.mrb[0].mxu0
        %v1899 = vadd.f32 0.0, %v1898
        %v1900 = vpop.f32.mrb[0].mxu0
        %v1901 = vadd.f32 0.0, %v1900
        %v1902 = vpop.f32.mrb[0].mxu0
        %v1903 = vadd.f32 0.0, %v1902
        %1904 = vmatprep.mubr.bf16.mxu0 0
        %1905 = vmatmul.mubr.bf16.gmra.mrb[0].mxu0 %v1777
        %v1906 = vpop.f32.mrb[0].mxu0
        %v1907 = vadd.f32 0.0, %v1906
        %v1908 = vpop.f32.mrb[0].mxu0
        %v1909 = vadd.f32 0.0, %v1908
        %v1910 = vpop.f32.mrb[0].mxu0
        %v1911 = vadd.f32 0.0, %v1910
        %v1912 = vpop.f32.mrb[0].mxu0
        %v1913 = vadd.f32 0.0, %v1912
        %1914 = vmatprep.mubr.bf16.mxu0 0
        %1915 = vmatmul.mubr.bf16.gmra.mrb[0].mxu0 %v1780
        %v1916 = vpop.f32.mrb[0].mxu0
        %v1917 = vadd.f32 0.0, %v1916
        %v1918 = vpop.f32.mrb[0].mxu0
        %v1919 = vadd.f32 0.0, %v1918
        %v1920 = vpop.f32.mrb[0].mxu0
        %v1921 = vadd.f32 0.0, %v1920
        %v1922 = vpop.f32.mrb[0].mxu0
        %v1923 = vadd.f32 0.0, %v1922
        %1924 = vmatprep.mubr.bf16.mxu0 0
        %1925 = vmatmul.mubr.bf16.gmra.mrb[0].mxu0 %v1783
        %v1926 = vpop.f32.mrb[0].mxu0
        %v1927 = vadd.f32 0.0, %v1926
        %v1928 = vpop.f32.mrb[0].mxu0
        %v1929 = vadd.f32 0.0, %v1928
        %v1930 = vpop.f32.mrb[0].mxu0
        %v1931 = vadd.f32 0.0, %v1930
        %v1932 = vpop.f32.mrb[0].mxu0
        %v1933 = vadd.f32 0.0, %v1932
        %1934 = vmatprep.mubr.bf16.mxu0 0
        %1935 = vmatmul.mubr.bf16.gmra.mrb[0].mxu0 %v1786
        %v1936 = vpop.f32.mrb[0].mxu0
        %v1937 = vadd.f32 0.0, %v1936
        %v1938 = vpop.f32.mrb[0].mxu0
        %v1939 = vadd.f32 0.0, %v1938
        %v1940 = vpop.f32.mrb[0].mxu0
        %v1941 = vadd.f32 0.0, %v1940
        %v1942 = vpop.f32.mrb[0].mxu0
        %v1943 = vadd.f32 0.0, %v1942
        %1944 = vmatprep.mubr.bf16.mxu0 0
        %1945 = vmatmul.mubr.bf16.gmra.mrb[0].mxu0 %v1789
        %v1946 = vpop.f32.mrb[0].mxu0
        %v1947 = vadd.f32 0.0, %v1946
        %v1948 = vpop.f32.mrb[0].mxu0
        %v1949 = vadd.f32 0.0, %v1948
        %v1950 = vpop.f32.mrb[0].mxu0
        %v1951 = vadd.f32 0.0, %v1950
        %v1952 = vpop.f32.mrb[0].mxu0
        %v1953 = vadd.f32 0.0, %v1952
        %1954 = vmatprep.mubr.bf16.mxu0 0
        %1955 = vmatmul.mubr.bf16.gmra.mrb[0].mxu0 %v1792
        %v1956 = vpop.f32.mrb[0].mxu0
        %v1957 = vadd.f32 0.0, %v1956
        %v1958 = vpop.f32.mrb[0].mxu0
        %v1959 = vadd.f32 0.0, %v1958
        %v1960 = vpop.f32.mrb[0].mxu0
        %v1961 = vadd.f32 0.0, %v1960
        %v1962 = vpop.f32.mrb[0].mxu0
        %v1963 = vadd.f32 0.0, %v1962
        %1964 = vmatprep.mubr.bf16.mxu0 0
        %1965 = vmatmul.mubr.bf16.gmra.mrb[0].mxu0 %v1795
        %v1966 = vpop.f32.mrb[0].mxu0
        %v1967 = vadd.f32 0.0, %v1966
        %v1968 = vpop.f32.mrb[0].mxu0
        %v1969 = vadd.f32 0.0, %v1968
        %v1970 = vpop.f32.mrb[0].mxu0
        %v1971 = vadd.f32 0.0, %v1970
        %v1972 = vpop.f32.mrb[0].mxu0
        %v1973 = vadd.f32 0.0, %v1972
        %1974 = vmatprep.mubr.bf16.mxu0 0
        %1975 = vmatmul.mubr.bf16.gmra.mrb[0].mxu0 %v1798
        %v1976 = vpop.f32.mrb[0].mxu0
        %v1977 = vadd.f32 0.0, %v1976
        %v1978 = vpop.f32.mrb[0].mxu0
        %v1979 = vadd.f32 0.0, %v1978
        %v1980 = vpop.f32.mrb[0].mxu0
        %v1981 = vadd.f32 0.0, %v1980
        %v1982 = vpop.f32.mrb[0].mxu0
        %v1983 = vadd.f32 0.0, %v1982
        %1984 = vmatprep.mubr.bf16.mxu0 0
        %1985 = vmatmul.mubr.bf16.gmra.mrb[0].mxu0 %v1801
        %v1986 = vpop.f32.mrb[0].mxu0
        %v1987 = vadd.f32 0.0, %v1986
        %v1988 = vpop.f32.mrb[0].mxu0
        %v1989 = vadd.f32 0.0, %v1988
        %v1990 = vpop.f32.mrb[0].mxu0
        %v1991 = vadd.f32 0.0, %v1990
        %v1992 = vpop.f32.mrb[0].mxu0
        %v1993 = vadd.f32 0.0, %v1992
        %1994 = vmatprep.mubr.bf16.mxu0 0
        %1995 = vmatmul.mubr.bf16.gmra.mrb[0].mxu0 %v1804
        %v1996 = vpop.f32.mrb[0].mxu0
        %v1997 = vadd.f32 0.0, %v1996
        %v1998 = vpop.f32.mrb[0].mxu0
        %v1999 = vadd.f32 0.0, %v1998
        %v2000 = vpop.f32.mrb[0].mxu0
        %v2001 = vadd.f32 0.0, %v2000
        %v2002 = vpop.f32.mrb[0].mxu0
        %v2003 = vadd.f32 0.0, %v2002
        %2004 = vdwg.mxu0
        %v2005 = vadd.f32 %v1601, %v1847
        %v2006 = vadd.f32 %v1602, %v1849
        %v2007 = vadd.f32 %v1603, %v1851
        %v2008 = vadd.f32 %v1604, %v1853
        %v2009 = vadd.f32 %v1605, %v1857
        %v2010 = vadd.f32 %v1606, %v1859
        %v2011 = vadd.f32 %v1607, %v1861
        %v2012 = vadd.f32 %v1608, %v1863
        %v2013 = vadd.f32 %v1609, %v1867
        %v2014 = vadd.f32 %v1610, %v1869
        %v2015 = vadd.f32 %v1611, %v1871
        %v2016 = vadd.f32 %v1612, %v1873
        %v2017 = vadd.f32 %v1613, %v1877
        %v2018 = vadd.f32 %v1614, %v1879
        %v2019 = vadd.f32 %v1615, %v1881
        %v2020 = vadd.f32 %v1616, %v1883
        %v2021 = vadd.f32 %v1617, %v1887
        %v2022 = vadd.f32 %v1618, %v1889
        %v2023 = vadd.f32 %v1619, %v1891
        %v2024 = vadd.f32 %v1620, %v1893
        %v2025 = vadd.f32 %v1621, %v1897
        %v2026 = vadd.f32 %v1622, %v1899
        %v2027 = vadd.f32 %v1623, %v1901
        %v2028 = vadd.f32 %v1624, %v1903
        %v2029 = vadd.f32 %v1625, %v1907
        %v2030 = vadd.f32 %v1626, %v1909
        %v2031 = vadd.f32 %v1627, %v1911
        %v2032 = vadd.f32 %v1628, %v1913
        %v2033 = vadd.f32 %v1629, %v1917
        %v2034 = vadd.f32 %v1630, %v1919
        %v2035 = vadd.f32 %v1631, %v1921
        %v2036 = vadd.f32 %v1632, %v1923
        %v2037 = vadd.f32 %v1633, %v1927
        %v2038 = vadd.f32 %v1634, %v1929
        %v2039 = vadd.f32 %v1635, %v1931
        %v2040 = vadd.f32 %v1636, %v1933
        %v2041 = vadd.f32 %v1637, %v1937
        %v2042 = vadd.f32 %v1638, %v1939
        %v2043 = vadd.f32 %v1639, %v1941
        %v2044 = vadd.f32 %v1640, %v1943
        %v2045 = vadd.f32 %v1641, %v1947
        %v2046 = vadd.f32 %v1642, %v1949
        %v2047 = vadd.f32 %v1643, %v1951
        %v2048 = vadd.f32 %v1644, %v1953
        %v2049 = vadd.f32 %v1645, %v1957
        %v2050 = vadd.f32 %v1646, %v1959
        %v2051 = vadd.f32 %v1647, %v1961
        %v2052 = vadd.f32 %v1648, %v1963
        %v2053 = vadd.f32 %v1649, %v1967
        %v2054 = vadd.f32 %v1650, %v1969
        %v2055 = vadd.f32 %v1651, %v1971
        %v2056 = vadd.f32 %v1652, %v1973
        %v2057 = vadd.f32 %v1653, %v1977
        %v2058 = vadd.f32 %v1654, %v1979
        %v2059 = vadd.f32 %v1655, %v1981
        %v2060 = vadd.f32 %v1656, %v1983
        %v2061 = vadd.f32 %v1657, %v1987
        %v2062 = vadd.f32 %v1658, %v1989
        %v2063 = vadd.f32 %v1659, %v1991
        %v2064 = vadd.f32 %v1660, %v1993
        %v2065 = vadd.f32 %v1661, %v1997
        %v2066 = vadd.f32 %v1662, %v1999
        %v2067 = vadd.f32 %v1663, %v2001
        %v2068 = vadd.f32 %v1664, %v2003
        %s2069 = scalar_lea.vmem %s1, 128
        %v2070 = vld [vmem:[%s2069] sm:$0xff]
        %v2071 = vld [vmem:[%s2069 + $0x8] sm:$0xff]
        %v2072 = vld [vmem:[%s2069 + $0x10] sm:$0xff]
        %v2073 = vld [vmem:[%s2069 + $0x18] sm:$0x33]
        %vm2074 = vcmask 1045504
        %v2075 = vrot.slane %v631, 2
        %v2076 = vrot.slane %v632, 2
        %v2077 = vsel %vm2074, %v2075, %v2076
        %v2078 = vrot.slane %v633, 2
        %v2079 = vsel %vm2074, %v2076, %v2078
        %v2080 = vrot.slane %v634, 2
        %v2081 = vsel %vm2074, %v2078, %v2080
        %v2082 = vrot.slane %v635, 2
        %v2083 = vsel %vm2074, %v2080, %v2082
        %v2084 = vrot.slane %v636, 2
        %v2085 = vsel %vm2074, %v2082, %v2084
        %v2086 = vrot.slane %v637, 2
        %v2087 = vsel %vm2074, %v2084, %v2086
        %v2088 = vrot.slane %v638, 2
        %v2089 = vsel %vm2074, %v2086, %v2088
        %v2090 = vrot.slane %v639, 2
        %v2091 = vsel %vm2074, %v2088, %v2090
        %v2092 = vrot.slane %v640, 2
        %v2093 = vsel %vm2074, %v2090, %v2092
        %v2094 = vrot.slane %v641, 2
        %v2095 = vsel %vm2074, %v2092, %v2094
        %v2096 = vrot.slane %v642, 2
        %v2097 = vsel %vm2074, %v2094, %v2096
        %v2098 = vrot.slane %v643, 2
        %v2099 = vsel %vm2074, %v2096, %v2098
        %v2100 = vrot.slane %v644, 2
        %v2101 = vsel %vm2074, %v2098, %v2100
        %v2102 = vrot.slane %v645, 2
        %v2103 = vsel %vm2074, %v2100, %v2102
        %v2104 = vrot.slane %v646, 2
        %v2105 = vsel %vm2074, %v2102, %v2104
        %v2106 = vrot.slane %v647, 2
        %v2107 = vsel %vm2074, %v2104, %v2106
        %v2112 = vunpack.c.l.b16 %v2070
        %v2113 = vunpack.c.h.b16 %v2070
        %v2114 = vunpack.c.l.b16 %v2071
        %v2115 = vunpack.c.h.b16 %v2071
        %v2116 = vunpack.c.l.b16 %v2072
        %v2117 = vunpack.c.h.b16 %v2072
        %v2118 = vunpack.c.l.b16 %v2073
        %v2119 = vunpack.c.h.b16 %v2073
        %v2120 = vpack.c.b16 %v2114, %v2112
        %v2121 = vpack.c.b16 %v2115, %v2113
        %v2122 = vpack.c.b16 %v2118, %v2116
        %v2123 = vpack.c.b16 %v2119, %v2117
        %v2127 = vsel %vm799, %v2077, 0
        %v2130 = vsel %vm799, %v2079, 0
        %v2133 = vsel %vm799, %v2081, 0
        %v2136 = vsel %vm799, %v2083, 0
        %v2139 = vsel %vm799, %v2085, 0
        %v2142 = vsel %vm799, %v2087, 0
        %v2145 = vsel %vm799, %v2089, 0
        %v2148 = vsel %vm799, %v2091, 0
        %v2151 = vsel %vm799, %v2093, 0
        %v2154 = vsel %vm799, %v2095, 0
        %v2157 = vsel %vm799, %v2097, 0
        %v2160 = vsel %vm799, %v2099, 0
        %v2163 = vsel %vm799, %v2101, 0
        %v2166 = vsel %vm799, %v2103, 0
        %v2169 = vsel %vm799, %v2105, 0
        %v2172 = vsel %vm799, %v2107, 0
        %v2175 = vsel %vm848, %v2122, 0
        %v2178 = vsel %vm848, %v2123, 0
        %2180 = vmatprep.subr.bf16.mxu0 %v2121
        %2181 = vmatpush1.bf16.msra.mxu0 %v2120
        %2182 = vmatprep.subr.bf16.mxu0 %v2178
        %2183 = vmatpush1.bf16.msra.mxu0 %v2175
        %2184 = vmatprep.subr.bf16.mxu0 0
        %2185 = vmatpush1.bf16.msra.mxu0 0
        %2186 = vmatprep.subr.bf16.mxu0 0
        %2187 = vmatpush1.bf16.msra.mxu0 0
        %2188 = vmatprep.subr.bf16.mxu0 0
        %2189 = vmatpush1.bf16.msra.mxu0 0
        %2190 = vmatprep.subr.bf16.mxu0 0
        %2191 = vmatpush1.bf16.msra.mxu0 0
        %2192 = vmatprep.subr.bf16.mxu0 0
        %2193 = vmatpush1.bf16.msra.mxu0 0
        %2194 = vmatprep.subr.bf16.mxu0 0
        %2195 = vmatpush1.bf16.msra.mxu0 0
        %2196 = vmatprep.subr.bf16.mxu0 0
        %2197 = vmatpush1.bf16.msra.mxu0 0
        %2198 = vmatprep.subr.bf16.mxu0 0
        %2199 = vmatpush1.bf16.msra.mxu0 0
        %2200 = vmatprep.subr.bf16.mxu0 0
        %2201 = vmatpush1.bf16.msra.mxu0 0
        %2202 = vmatprep.subr.bf16.mxu0 0
        %2203 = vmatpush1.bf16.msra.mxu0 0
        %2204 = vmatprep.subr.bf16.mxu0 0
        %2205 = vmatpush1.bf16.msra.mxu0 0
        %2206 = vmatprep.subr.bf16.mxu0 0
        %2207 = vmatpush1.bf16.msra.mxu0 0
        %2208 = vmatprep.subr.bf16.mxu0 0
        %2209 = vmatpush1.bf16.msra.mxu0 0
        %2210 = vmatprep.subr.bf16.mxu0 0
        %2211 = vmatpush1.bf16.msra.mxu0 0
        %2212 = vmatprep.mubr.bf16.mxu0 0
        %2213 = vmatmul.mubr.bf16.gmra.mrb[0].mxu0 %v2127
        %v2214 = vpop.f32.mrb[0].mxu0
        %v2215 = vadd.f32 0.0, %v2214
        %v2216 = vpop.f32.mrb[0].mxu0
        %v2217 = vadd.f32 0.0, %v2216
        %v2218 = vpop.f32.mrb[0].mxu0
        %v2219 = vadd.f32 0.0, %v2218
        %v2220 = vpop.f32.mrb[0].mxu0
        %v2221 = vadd.f32 0.0, %v2220
        %2222 = vmatprep.mubr.bf16.mxu0 0
        %2223 = vmatmul.mubr.bf16.gmra.mrb[0].mxu0 %v2130
        %v2224 = vpop.f32.mrb[0].mxu0
        %v2225 = vadd.f32 0.0, %v2224
        %v2226 = vpop.f32.mrb[0].mxu0
        %v2227 = vadd.f32 0.0, %v2226
        %v2228 = vpop.f32.mrb[0].mxu0
        %v2229 = vadd.f32 0.0, %v2228
        %v2230 = vpop.f32.mrb[0].mxu0
        %v2231 = vadd.f32 0.0, %v2230
        %2232 = vmatprep.mubr.bf16.mxu0 0
        %2233 = vmatmul.mubr.bf16.gmra.mrb[0].mxu0 %v2133
        %v2234 = vpop.f32.mrb[0].mxu0
        %v2235 = vadd.f32 0.0, %v2234
        %v2236 = vpop.f32.mrb[0].mxu0
        %v2237 = vadd.f32 0.0, %v2236
        %v2238 = vpop.f32.mrb[0].mxu0
        %v2239 = vadd.f32 0.0, %v2238
        %v2240 = vpop.f32.mrb[0].mxu0
        %v2241 = vadd.f32 0.0, %v2240
        %2242 = vmatprep.mubr.bf16.mxu0 0
        %2243 = vmatmul.mubr.bf16.gmra.mrb[0].mxu0 %v2136
        %v2244 = vpop.f32.mrb[0].mxu0
        %v2245 = vadd.f32 0.0, %v2244
        %v2246 = vpop.f32.mrb[0].mxu0
        %v2247 = vadd.f32 0.0, %v2246
        %v2248 = vpop.f32.mrb[0].mxu0
        %v2249 = vadd.f32 0.0, %v2248
        %v2250 = vpop.f32.mrb[0].mxu0
        %v2251 = vadd.f32 0.0, %v2250
        %2252 = vmatprep.mubr.bf16.mxu0 0
        %2253 = vmatmul.mubr.bf16.gmra.mrb[0].mxu0 %v2139
        %v2254 = vpop.f32.mrb[0].mxu0
        %v2255 = vadd.f32 0.0, %v2254
        %v2256 = vpop.f32.mrb[0].mxu0
        %v2257 = vadd.f32 0.0, %v2256
        %v2258 = vpop.f32.mrb[0].mxu0
        %v2259 = vadd.f32 0.0, %v2258
        %v2260 = vpop.f32.mrb[0].mxu0
        %v2261 = vadd.f32 0.0, %v2260
        %2262 = vmatprep.mubr.bf16.mxu0 0
        %2263 = vmatmul.mubr.bf16.gmra.mrb[0].mxu0 %v2142
        %v2264 = vpop.f32.mrb[0].mxu0
        %v2265 = vadd.f32 0.0, %v2264
        %v2266 = vpop.f32.mrb[0].mxu0
        %v2267 = vadd.f32 0.0, %v2266
        %v2268 = vpop.f32.mrb[0].mxu0
        %v2269 = vadd.f32 0.0, %v2268
        %v2270 = vpop.f32.mrb[0].mxu0
        %v2271 = vadd.f32 0.0, %v2270
        %2272 = vmatprep.mubr.bf16.mxu0 0
        %2273 = vmatmul.mubr.bf16.gmra.mrb[0].mxu0 %v2145
        %v2274 = vpop.f32.mrb[0].mxu0
        %v2275 = vadd.f32 0.0, %v2274
        %v2276 = vpop.f32.mrb[0].mxu0
        %v2277 = vadd.f32 0.0, %v2276
        %v2278 = vpop.f32.mrb[0].mxu0
        %v2279 = vadd.f32 0.0, %v2278
        %v2280 = vpop.f32.mrb[0].mxu0
        %v2281 = vadd.f32 0.0, %v2280
        %2282 = vmatprep.mubr.bf16.mxu0 0
        %2283 = vmatmul.mubr.bf16.gmra.mrb[0].mxu0 %v2148
        %v2284 = vpop.f32.mrb[0].mxu0
        %v2285 = vadd.f32 0.0, %v2284
        %v2286 = vpop.f32.mrb[0].mxu0
        %v2287 = vadd.f32 0.0, %v2286
        %v2288 = vpop.f32.mrb[0].mxu0
        %v2289 = vadd.f32 0.0, %v2288
        %v2290 = vpop.f32.mrb[0].mxu0
        %v2291 = vadd.f32 0.0, %v2290
        %2292 = vmatprep.mubr.bf16.mxu0 0
        %2293 = vmatmul.mubr.bf16.gmra.mrb[0].mxu0 %v2151
        %v2294 = vpop.f32.mrb[0].mxu0
        %v2295 = vadd.f32 0.0, %v2294
        %v2296 = vpop.f32.mrb[0].mxu0
        %v2297 = vadd.f32 0.0, %v2296
        %v2298 = vpop.f32.mrb[0].mxu0
        %v2299 = vadd.f32 0.0, %v2298
        %v2300 = vpop.f32.mrb[0].mxu0
        %v2301 = vadd.f32 0.0, %v2300
        %2302 = vmatprep.mubr.bf16.mxu0 0
        %2303 = vmatmul.mubr.bf16.gmra.mrb[0].mxu0 %v2154
        %v2304 = vpop.f32.mrb[0].mxu0
        %v2305 = vadd.f32 0.0, %v2304
        %v2306 = vpop.f32.mrb[0].mxu0
        %v2307 = vadd.f32 0.0, %v2306
        %v2308 = vpop.f32.mrb[0].mxu0
        %v2309 = vadd.f32 0.0, %v2308
        %v2310 = vpop.f32.mrb[0].mxu0
        %v2311 = vadd.f32 0.0, %v2310
        %2312 = vmatprep.mubr.bf16.mxu0 0
        %2313 = vmatmul.mubr.bf16.gmra.mrb[0].mxu0 %v2157
        %v2314 = vpop.f32.mrb[0].mxu0
        %v2315 = vadd.f32 0.0, %v2314
        %v2316 = vpop.f32.mrb[0].mxu0
        %v2317 = vadd.f32 0.0, %v2316
        %v2318 = vpop.f32.mrb[0].mxu0
        %v2319 = vadd.f32 0.0, %v2318
        %v2320 = vpop.f32.mrb[0].mxu0
        %v2321 = vadd.f32 0.0, %v2320
        %2322 = vmatprep.mubr.bf16.mxu0 0
        %2323 = vmatmul.mubr.bf16.gmra.mrb[0].mxu0 %v2160
        %v2324 = vpop.f32.mrb[0].mxu0
        %v2325 = vadd.f32 0.0, %v2324
        %v2326 = vpop.f32.mrb[0].mxu0
        %v2327 = vadd.f32 0.0, %v2326
        %v2328 = vpop.f32.mrb[0].mxu0
        %v2329 = vadd.f32 0.0, %v2328
        %v2330 = vpop.f32.mrb[0].mxu0
        %v2331 = vadd.f32 0.0, %v2330
        %2332 = vmatprep.mubr.bf16.mxu0 0
        %2333 = vmatmul.mubr.bf16.gmra.mrb[0].mxu0 %v2163
        %v2334 = vpop.f32.mrb[0].mxu0
        %v2335 = vadd.f32 0.0, %v2334
        %v2336 = vpop.f32.mrb[0].mxu0
        %v2337 = vadd.f32 0.0, %v2336
        %v2338 = vpop.f32.mrb[0].mxu0
        %v2339 = vadd.f32 0.0, %v2338
        %v2340 = vpop.f32.mrb[0].mxu0
        %v2341 = vadd.f32 0.0, %v2340
        %2342 = vmatprep.mubr.bf16.mxu0 0
        %2343 = vmatmul.mubr.bf16.gmra.mrb[0].mxu0 %v2166
        %v2344 = vpop.f32.mrb[0].mxu0
        %v2345 = vadd.f32 0.0, %v2344
        %v2346 = vpop.f32.mrb[0].mxu0
        %v2347 = vadd.f32 0.0, %v2346
        %v2348 = vpop.f32.mrb[0].mxu0
        %v2349 = vadd.f32 0.0, %v2348
        %v2350 = vpop.f32.mrb[0].mxu0
        %v2351 = vadd.f32 0.0, %v2350
        %2352 = vmatprep.mubr.bf16.mxu0 0
        %2353 = vmatmul.mubr.bf16.gmra.mrb[0].mxu0 %v2169
        %v2354 = vpop.f32.mrb[0].mxu0
        %v2355 = vadd.f32 0.0, %v2354
        %v2356 = vpop.f32.mrb[0].mxu0
        %v2357 = vadd.f32 0.0, %v2356
        %v2358 = vpop.f32.mrb[0].mxu0
        %v2359 = vadd.f32 0.0, %v2358
        %v2360 = vpop.f32.mrb[0].mxu0
        %v2361 = vadd.f32 0.0, %v2360
        %2362 = vmatprep.mubr.bf16.mxu0 0
        %2363 = vmatmul.mubr.bf16.gmra.mrb[0].mxu0 %v2172
        %v2364 = vpop.f32.mrb[0].mxu0
        %v2365 = vadd.f32 0.0, %v2364
        %v2366 = vpop.f32.mrb[0].mxu0
        %v2367 = vadd.f32 0.0, %v2366
        %v2368 = vpop.f32.mrb[0].mxu0
        %v2369 = vadd.f32 0.0, %v2368
        %v2370 = vpop.f32.mrb[0].mxu0
        %v2371 = vadd.f32 0.0, %v2370
        %2372 = vdwg.mxu0
        %v2373 = vadd.f32 %v2005, %v2215
        %v2374 = vadd.f32 %v2006, %v2217
        %v2375 = vadd.f32 %v2007, %v2219
        %v2376 = vadd.f32 %v2008, %v2221
        %v2377 = vadd.f32 %v2009, %v2225
        %v2378 = vadd.f32 %v2010, %v2227
        %v2379 = vadd.f32 %v2011, %v2229
        %v2380 = vadd.f32 %v2012, %v2231
        %v2381 = vadd.f32 %v2013, %v2235
        %v2382 = vadd.f32 %v2014, %v2237
        %v2383 = vadd.f32 %v2015, %v2239
        %v2384 = vadd.f32 %v2016, %v2241
        %v2385 = vadd.f32 %v2017, %v2245
        %v2386 = vadd.f32 %v2018, %v2247
        %v2387 = vadd.f32 %v2019, %v2249
        %v2388 = vadd.f32 %v2020, %v2251
        %v2389 = vadd.f32 %v2021, %v2255
        %v2390 = vadd.f32 %v2022, %v2257
        %v2391 = vadd.f32 %v2023, %v2259
        %v2392 = vadd.f32 %v2024, %v2261
        %v2393 = vadd.f32 %v2025, %v2265
        %v2394 = vadd.f32 %v2026, %v2267
        %v2395 = vadd.f32 %v2027, %v2269
        %v2396 = vadd.f32 %v2028, %v2271
        %v2397 = vadd.f32 %v2029, %v2275
        %v2398 = vadd.f32 %v2030, %v2277
        %v2399 = vadd.f32 %v2031, %v2279
        %v2400 = vadd.f32 %v2032, %v2281
        %v2401 = vadd.f32 %v2033, %v2285
        %v2402 = vadd.f32 %v2034, %v2287
        %v2403 = vadd.f32 %v2035, %v2289
        %v2404 = vadd.f32 %v2036, %v2291
        %v2405 = vadd.f32 %v2037, %v2295
        %v2406 = vadd.f32 %v2038, %v2297
        %v2407 = vadd.f32 %v2039, %v2299
        %v2408 = vadd.f32 %v2040, %v2301
        %v2409 = vadd.f32 %v2041, %v2305
        %v2410 = vadd.f32 %v2042, %v2307
        %v2411 = vadd.f32 %v2043, %v2309
        %v2412 = vadd.f32 %v2044, %v2311
        %v2413 = vadd.f32 %v2045, %v2315
        %v2414 = vadd.f32 %v2046, %v2317
        %v2415 = vadd.f32 %v2047, %v2319
        %v2416 = vadd.f32 %v2048, %v2321
        %v2417 = vadd.f32 %v2049, %v2325
        %v2418 = vadd.f32 %v2050, %v2327
        %v2419 = vadd.f32 %v2051, %v2329
        %v2420 = vadd.f32 %v2052, %v2331
        %v2421 = vadd.f32 %v2053, %v2335
        %v2422 = vadd.f32 %v2054, %v2337
        %v2423 = vadd.f32 %v2055, %v2339
        %v2424 = vadd.f32 %v2056, %v2341
        %v2425 = vadd.f32 %v2057, %v2345
        %v2426 = vadd.f32 %v2058, %v2347
        %v2427 = vadd.f32 %v2059, %v2349
        %v2428 = vadd.f32 %v2060, %v2351
        %v2429 = vadd.f32 %v2061, %v2355
        %v2430 = vadd.f32 %v2062, %v2357
        %v2431 = vadd.f32 %v2063, %v2359
        %v2432 = vadd.f32 %v2064, %v2361
        %v2433 = vadd.f32 %v2065, %v2365
        %v2434 = vadd.f32 %v2066, %v2367
        %v2435 = vadd.f32 %v2067, %v2369
        %v2436 = vadd.f32 %v2068, %v2371
        %v2437 = vld [vmem:[%s2] sm:$0x3]
        %v2439 = vlaneseq
        %v2440 = vshrl.u32 %v2439, 7
        %v2441 = vsub.s32 0, %v2440
        %v2442 = vrot.slane %v2437, %v2441
        %v2443 = vlaneseq
        %v2444 = vshrl.u32 %v2443, 7
        %v2445 = vsub.s32 1, %v2444
        %v2446 = vrot.slane %v2437, %v2445
        %v2449 = vadd.f32 %v2373, %v2442
        %v2450 = vadd.f32 %v2374, %v2446
        %v2451 = vadd.f32 %v2375, %v2442
        %v2452 = vadd.f32 %v2376, %v2446
        %v2453 = vadd.f32 %v2377, %v2442
        %v2454 = vadd.f32 %v2378, %v2446
        %v2455 = vadd.f32 %v2379, %v2442
        %v2456 = vadd.f32 %v2380, %v2446
        %v2457 = vadd.f32 %v2381, %v2442
        %v2458 = vadd.f32 %v2382, %v2446
        %v2459 = vadd.f32 %v2383, %v2442
        %v2460 = vadd.f32 %v2384, %v2446
        %v2461 = vadd.f32 %v2385, %v2442
        %v2462 = vadd.f32 %v2386, %v2446
        %v2463 = vadd.f32 %v2387, %v2442
        %v2464 = vadd.f32 %v2388, %v2446
        %v2465 = vadd.f32 %v2389, %v2442
        %v2466 = vadd.f32 %v2390, %v2446
        %v2467 = vadd.f32 %v2391, %v2442
        %v2468 = vadd.f32 %v2392, %v2446
        %v2469 = vadd.f32 %v2393, %v2442
        %v2470 = vadd.f32 %v2394, %v2446
        %v2471 = vadd.f32 %v2395, %v2442
        %v2472 = vadd.f32 %v2396, %v2446
        %v2473 = vadd.f32 %v2397, %v2442
        %v2474 = vadd.f32 %v2398, %v2446
        %v2475 = vadd.f32 %v2399, %v2442
        %v2476 = vadd.f32 %v2400, %v2446
        %v2477 = vadd.f32 %v2401, %v2442
        %v2478 = vadd.f32 %v2402, %v2446
        %v2479 = vadd.f32 %v2403, %v2442
        %v2480 = vadd.f32 %v2404, %v2446
        %v2481 = vadd.f32 %v2405, %v2442
        %v2482 = vadd.f32 %v2406, %v2446
        %v2483 = vadd.f32 %v2407, %v2442
        %v2484 = vadd.f32 %v2408, %v2446
        %v2485 = vadd.f32 %v2409, %v2442
        %v2486 = vadd.f32 %v2410, %v2446
        %v2487 = vadd.f32 %v2411, %v2442
        %v2488 = vadd.f32 %v2412, %v2446
        %v2489 = vadd.f32 %v2413, %v2442
        %v2490 = vadd.f32 %v2414, %v2446
        %v2491 = vadd.f32 %v2415, %v2442
        %v2492 = vadd.f32 %v2416, %v2446
        %v2493 = vadd.f32 %v2417, %v2442
        %v2494 = vadd.f32 %v2418, %v2446
        %v2495 = vadd.f32 %v2419, %v2442
        %v2496 = vadd.f32 %v2420, %v2446
        %v2497 = vadd.f32 %v2421, %v2442
        %v2498 = vadd.f32 %v2422, %v2446
        %v2499 = vadd.f32 %v2423, %v2442
        %v2500 = vadd.f32 %v2424, %v2446
        %v2501 = vadd.f32 %v2425, %v2442
        %v2502 = vadd.f32 %v2426, %v2446
        %v2503 = vadd.f32 %v2427, %v2442
        %v2504 = vadd.f32 %v2428, %v2446
        %v2505 = vadd.f32 %v2429, %v2442
        %v2506 = vadd.f32 %v2430, %v2446
        %v2507 = vadd.f32 %v2431, %v2442
        %v2508 = vadd.f32 %v2432, %v2446
        %v2509 = vadd.f32 %v2433, %v2442
        %v2510 = vadd.f32 %v2434, %v2446
        %v2511 = vadd.f32 %v2435, %v2442
        %v2512 = vadd.f32 %v2436, %v2446
        %v2513 = vmax.f32 %v2449, 0.0
        %v2514 = vmax.f32 %v2450, 0.0
        %v2515 = vmax.f32 %v2451, 0.0
        %v2516 = vmax.f32 %v2452, 0.0
        %v2517 = vmax.f32 %v2453, 0.0
        %v2518 = vmax.f32 %v2454, 0.0
        %v2519 = vmax.f32 %v2455, 0.0
        %v2520 = vmax.f32 %v2456, 0.0
        %v2521 = vmax.f32 %v2457, 0.0
        %v2522 = vmax.f32 %v2458, 0.0
        %v2523 = vmax.f32 %v2459, 0.0
        %v2524 = vmax.f32 %v2460, 0.0
        %v2525 = vmax.f32 %v2461, 0.0
        %v2526 = vmax.f32 %v2462, 0.0
        %v2527 = vmax.f32 %v2463, 0.0
        %v2528 = vmax.f32 %v2464, 0.0
        %v2529 = vmax.f32 %v2465, 0.0
        %v2530 = vmax.f32 %v2466, 0.0
        %v2531 = vmax.f32 %v2467, 0.0
        %v2532 = vmax.f32 %v2468, 0.0
        %v2533 = vmax.f32 %v2469, 0.0
        %v2534 = vmax.f32 %v2470, 0.0
        %v2535 = vmax.f32 %v2471, 0.0
        %v2536 = vmax.f32 %v2472, 0.0
        %v2537 = vmax.f32 %v2473, 0.0
        %v2538 = vmax.f32 %v2474, 0.0
        %v2539 = vmax.f32 %v2475, 0.0
        %v2540 = vmax.f32 %v2476, 0.0
        %v2541 = vmax.f32 %v2477, 0.0
        %v2542 = vmax.f32 %v2478, 0.0
        %v2543 = vmax.f32 %v2479, 0.0
        %v2544 = vmax.f32 %v2480, 0.0
        %v2545 = vmax.f32 %v2481, 0.0
        %v2546 = vmax.f32 %v2482, 0.0
        %v2547 = vmax.f32 %v2483, 0.0
        %v2548 = vmax.f32 %v2484, 0.0
        %v2549 = vmax.f32 %v2485, 0.0
        %v2550 = vmax.f32 %v2486, 0.0
        %v2551 = vmax.f32 %v2487, 0.0
        %v2552 = vmax.f32 %v2488, 0.0
        %v2553 = vmax.f32 %v2489, 0.0
        %v2554 = vmax.f32 %v2490, 0.0
        %v2555 = vmax.f32 %v2491, 0.0
        %v2556 = vmax.f32 %v2492, 0.0
        %v2557 = vmax.f32 %v2493, 0.0
        %v2558 = vmax.f32 %v2494, 0.0
        %v2559 = vmax.f32 %v2495, 0.0
        %v2560 = vmax.f32 %v2496, 0.0
        %v2561 = vmax.f32 %v2497, 0.0
        %v2562 = vmax.f32 %v2498, 0.0
        %v2563 = vmax.f32 %v2499, 0.0
        %v2564 = vmax.f32 %v2500, 0.0
        %v2565 = vmax.f32 %v2501, 0.0
        %v2566 = vmax.f32 %v2502, 0.0
        %v2567 = vmax.f32 %v2503, 0.0
        %v2568 = vmax.f32 %v2504, 0.0
        %v2569 = vmax.f32 %v2505, 0.0
        %v2570 = vmax.f32 %v2506, 0.0
        %v2571 = vmax.f32 %v2507, 0.0
        %v2572 = vmax.f32 %v2508, 0.0
        %v2573 = vmax.f32 %v2509, 0.0
        %v2574 = vmax.f32 %v2510, 0.0
        %v2575 = vmax.f32 %v2511, 0.0
        %v2576 = vmax.f32 %v2512, 0.0
        %v2577 = vpack.c.bf16 %v2515, %v2513
        %v2578 = vpack.c.bf16 %v2516, %v2514
        %v2579 = vpack.c.bf16 %v2519, %v2517
        %v2580 = vpack.c.bf16 %v2520, %v2518
        %v2581 = vpack.c.bf16 %v2523, %v2521
        %v2582 = vpack.c.bf16 %v2524, %v2522
        %v2583 = vpack.c.bf16 %v2527, %v2525
        %v2584 = vpack.c.bf16 %v2528, %v2526
        %v2585 = vpack.c.bf16 %v2531, %v2529
        %v2586 = vpack.c.bf16 %v2532, %v2530
        %v2587 = vpack.c.bf16 %v2535, %v2533
        %v2588 = vpack.c.bf16 %v2536, %v2534
        %v2589 = vpack.c.bf16 %v2539, %v2537
        %v2590 = vpack.c.bf16 %v2540, %v2538
        %v2591 = vpack.c.bf16 %v2543, %v2541
        %v2592 = vpack.c.bf16 %v2544, %v2542
        %v2593 = vpack.c.bf16 %v2547, %v2545
        %v2594 = vpack.c.bf16 %v2548, %v2546
        %v2595 = vpack.c.bf16 %v2551, %v2549
        %v2596 = vpack.c.bf16 %v2552, %v2550
        %v2597 = vpack.c.bf16 %v2555, %v2553
        %v2598 = vpack.c.bf16 %v2556, %v2554
        %v2599 = vpack.c.bf16 %v2559, %v2557
        %v2600 = vpack.c.bf16 %v2560, %v2558
        %v2601 = vpack.c.bf16 %v2563, %v2561
        %v2602 = vpack.c.bf16 %v2564, %v2562
        %v2603 = vpack.c.bf16 %v2567, %v2565
        %v2604 = vpack.c.bf16 %v2568, %v2566
        %v2605 = vpack.c.bf16 %v2571, %v2569
        %v2606 = vpack.c.bf16 %v2572, %v2570
        %v2607 = vpack.c.bf16 %v2575, %v2573
        %v2608 = vpack.c.bf16 %v2576, %v2574
        %v2609 = vld [vmem:[%s3] sm:$0xff]
        %v2610 = vld [vmem:[%s3 + $0x8] sm:$0xff]
        %v2611 = vld [vmem:[%s3 + $0x10] sm:$0xff]
        %v2612 = vld [vmem:[%s3 + $0x18] sm:$0xff]
        %v2613 = vld [vmem:[%s3 + $0x20] sm:$0xff]
        %v2614 = vld [vmem:[%s3 + $0x28] sm:$0xff]
        %v2615 = vld [vmem:[%s3 + $0x30] sm:$0xff]
        %v2616 = vld [vmem:[%s3 + $0x38] sm:$0xff]
        %v2617 = vld [vmem:[%s3 + $0x40] sm:$0xff]
        %v2618 = vld [vmem:[%s3 + $0x48] sm:$0xff]
        %v2619 = vld [vmem:[%s3 + $0x50] sm:$0xff]
        %v2620 = vld [vmem:[%s3 + $0x58] sm:$0xff]
        %v2621 = vld [vmem:[%s3 + $0x60] sm:$0xff]
        %v2622 = vld [vmem:[%s3 + $0x68] sm:$0xff]
        %v2623 = vld [vmem:[%s3 + $0x70] sm:$0xff]
        %v2624 = vld [vmem:[%s3 + $0x78] sm:$0xff]
        %v2625 = vld [vmem:[%s3 + $0x80] sm:$0xff]
        %v2643 = vunpack.c.l.b16 %v2609
        %v2644 = vunpack.c.h.b16 %v2609
        %v2645 = vunpack.c.l.b16 %v2610
        %v2646 = vunpack.c.h.b16 %v2610
        %v2647 = vunpack.c.l.b16 %v2611
        %v2648 = vunpack.c.h.b16 %v2611
        %v2649 = vunpack.c.l.b16 %v2612
        %v2650 = vunpack.c.h.b16 %v2612
        %v2651 = vunpack.c.l.b16 %v2613
        %v2652 = vunpack.c.h.b16 %v2613
        %v2653 = vunpack.c.l.b16 %v2614
        %v2654 = vunpack.c.h.b16 %v2614
        %v2655 = vunpack.c.l.b16 %v2615
        %v2656 = vunpack.c.h.b16 %v2615
        %v2657 = vunpack.c.l.b16 %v2616
        %v2658 = vunpack.c.h.b16 %v2616
        %v2659 = vunpack.c.l.b16 %v2617
        %v2660 = vunpack.c.h.b16 %v2617
        %v2661 = vunpack.c.l.b16 %v2618
        %v2662 = vunpack.c.h.b16 %v2618
        %v2663 = vunpack.c.l.b16 %v2619
        %v2664 = vunpack.c.h.b16 %v2619
        %v2665 = vunpack.c.l.b16 %v2620
        %v2666 = vunpack.c.h.b16 %v2620
        %v2667 = vunpack.c.l.b16 %v2621
        %v2668 = vunpack.c.h.b16 %v2621
        %v2669 = vunpack.c.l.b16 %v2622
        %v2670 = vunpack.c.h.b16 %v2622
        %v2671 = vunpack.c.l.b16 %v2623
        %v2672 = vunpack.c.h.b16 %v2623
        %v2673 = vunpack.c.l.b16 %v2624
        %v2674 = vunpack.c.h.b16 %v2624
        %v2675 = vunpack.c.l.b16 %v2625
        %v2676 = vunpack.c.h.b16 %v2625
        %v2677 = vpack.c.b16 %v2645, %v2643
        %v2678 = vpack.c.b16 %v2646, %v2644
        %v2679 = vpack.c.b16 %v2649, %v2647
        %v2680 = vpack.c.b16 %v2650, %v2648
        %v2681 = vpack.c.b16 %v2653, %v2651
        %v2682 = vpack.c.b16 %v2654, %v2652
        %v2683 = vpack.c.b16 %v2657, %v2655
        %v2684 = vpack.c.b16 %v2658, %v2656
        %v2685 = vpack.c.b16 %v2661, %v2659
        %v2686 = vpack.c.b16 %v2662, %v2660
        %v2687 = vpack.c.b16 %v2665, %v2663
        %v2688 = vpack.c.b16 %v2666, %v2664
        %v2689 = vpack.c.b16 %v2669, %v2667
        %v2690 = vpack.c.b16 %v2670, %v2668
        %v2691 = vpack.c.b16 %v2673, %v2671
        %v2692 = vpack.c.b16 %v2674, %v2672
        %v2693 = vpack.c.b16 %v2675, %v2675
        %v2694 = vpack.c.b16 %v2676, %v2676
        %2713 = vmatprep.subr.bf16.mxu0 %v2578
        %2714 = vmatpush1.bf16.msra.mxu0 %v2577
        %2715 = vmatprep.subr.bf16.mxu0 %v2580
        %2716 = vmatpush1.bf16.msra.mxu0 %v2579
        %2717 = vmatprep.subr.bf16.mxu0 %v2582
        %2718 = vmatpush1.bf16.msra.mxu0 %v2581
        %2719 = vmatprep.subr.bf16.mxu0 %v2584
        %2720 = vmatpush1.bf16.msra.mxu0 %v2583
        %2721 = vmatprep.subr.bf16.mxu0 %v2586
        %2722 = vmatpush1.bf16.msra.mxu0 %v2585
        %2723 = vmatprep.subr.bf16.mxu0 %v2588
        %2724 = vmatpush1.bf16.msra.mxu0 %v2587
        %2725 = vmatprep.subr.bf16.mxu0 %v2590
        %2726 = vmatpush1.bf16.msra.mxu0 %v2589
        %2727 = vmatprep.subr.bf16.mxu0 %v2592
        %2728 = vmatpush1.bf16.msra.mxu0 %v2591
        %2729 = vmatprep.subr.bf16.mxu0 %v2594
        %2730 = vmatpush1.bf16.msra.mxu0 %v2593
        %2731 = vmatprep.subr.bf16.mxu0 %v2596
        %2732 = vmatpush1.bf16.msra.mxu0 %v2595
        %2733 = vmatprep.subr.bf16.mxu0 %v2598
        %2734 = vmatpush1.bf16.msra.mxu0 %v2597
        %2735 = vmatprep.subr.bf16.mxu0 %v2600
        %2736 = vmatpush1.bf16.msra.mxu0 %v2599
        %2737 = vmatprep.subr.bf16.mxu0 %v2602
        %2738 = vmatpush1.bf16.msra.mxu0 %v2601
        %2739 = vmatprep.subr.bf16.mxu0 %v2604
        %2740 = vmatpush1.bf16.msra.mxu0 %v2603
        %2741 = vmatprep.subr.bf16.mxu0 %v2606
        %2742 = vmatpush1.bf16.msra.mxu0 %v2605
        %2743 = vmatprep.subr.bf16.mxu0 %v2608
        %2744 = vmatpush1.bf16.msra.mxu0 %v2607
        %2745 = vmatprep.mubr.bf16.mxu0 %v2678
        %2746 = vmatmul.mubr.bf16.gmra.mrb[0].mxu0 %v2677
        %v2747 = vpop.f32.mrb[0].mxu0
        %v2748 = vadd.f32 0.0, %v2747
        %v2749 = vpop.f32.mrb[0].mxu0
        %v2750 = vadd.f32 0.0, %v2749
        %v2751 = vpop.f32.mrb[0].mxu0
        %v2752 = vadd.f32 0.0, %v2751
        %v2753 = vpop.f32.mrb[0].mxu0
        %v2754 = vadd.f32 0.0, %v2753
        %2755 = vmatprep.mubr.bf16.mxu0 %v2680
        %2756 = vmatmul.mubr.bf16.gmra.mrb[0].mxu0 %v2679
        %v2757 = vpop.f32.mrb[0].mxu0
        %v2758 = vadd.f32 0.0, %v2757
        %v2759 = vpop.f32.mrb[0].mxu0
        %v2760 = vadd.f32 0.0, %v2759
        %v2761 = vpop.f32.mrb[0].mxu0
        %v2762 = vadd.f32 0.0, %v2761
        %v2763 = vpop.f32.mrb[0].mxu0
        %v2764 = vadd.f32 0.0, %v2763
        %2765 = vmatprep.mubr.bf16.mxu0 %v2682
        %2766 = vmatmul.mubr.bf16.gmra.mrb[0].mxu0 %v2681
        %v2767 = vpop.f32.mrb[0].mxu0
        %v2768 = vadd.f32 0.0, %v2767
        %v2769 = vpop.f32.mrb[0].mxu0
        %v2770 = vadd.f32 0.0, %v2769
        %v2771 = vpop.f32.mrb[0].mxu0
        %v2772 = vadd.f32 0.0, %v2771
        %v2773 = vpop.f32.mrb[0].mxu0
        %v2774 = vadd.f32 0.0, %v2773
        %2775 = vmatprep.mubr.bf16.mxu0 %v2684
        %2776 = vmatmul.mubr.bf16.gmra.mrb[0].mxu0 %v2683
        %v2777 = vpop.f32.mrb[0].mxu0
        %v2778 = vadd.f32 0.0, %v2777
        %v2779 = vpop.f32.mrb[0].mxu0
        %v2780 = vadd.f32 0.0, %v2779
        %v2781 = vpop.f32.mrb[0].mxu0
        %v2782 = vadd.f32 0.0, %v2781
        %v2783 = vpop.f32.mrb[0].mxu0
        %v2784 = vadd.f32 0.0, %v2783
        %2785 = vmatprep.mubr.bf16.mxu0 %v2686
        %2786 = vmatmul.mubr.bf16.gmra.mrb[0].mxu0 %v2685
        %v2787 = vpop.f32.mrb[0].mxu0
        %v2788 = vadd.f32 0.0, %v2787
        %v2789 = vpop.f32.mrb[0].mxu0
        %v2790 = vadd.f32 0.0, %v2789
        %v2791 = vpop.f32.mrb[0].mxu0
        %v2792 = vadd.f32 0.0, %v2791
        %v2793 = vpop.f32.mrb[0].mxu0
        %v2794 = vadd.f32 0.0, %v2793
        %2795 = vmatprep.mubr.bf16.mxu0 %v2688
        %2796 = vmatmul.mubr.bf16.gmra.mrb[0].mxu0 %v2687
        %v2797 = vpop.f32.mrb[0].mxu0
        %v2798 = vadd.f32 0.0, %v2797
        %v2799 = vpop.f32.mrb[0].mxu0
        %v2800 = vadd.f32 0.0, %v2799
        %v2801 = vpop.f32.mrb[0].mxu0
        %v2802 = vadd.f32 0.0, %v2801
        %v2803 = vpop.f32.mrb[0].mxu0
        %v2804 = vadd.f32 0.0, %v2803
        %2805 = vmatprep.mubr.bf16.mxu0 %v2690
        %2806 = vmatmul.mubr.bf16.gmra.mrb[0].mxu0 %v2689
        %v2807 = vpop.f32.mrb[0].mxu0
        %v2808 = vadd.f32 0.0, %v2807
        %v2809 = vpop.f32.mrb[0].mxu0
        %v2810 = vadd.f32 0.0, %v2809
        %v2811 = vpop.f32.mrb[0].mxu0
        %v2812 = vadd.f32 0.0, %v2811
        %v2813 = vpop.f32.mrb[0].mxu0
        %v2814 = vadd.f32 0.0, %v2813
        %2815 = vmatprep.mubr.bf16.mxu0 %v2692
        %2816 = vmatmul.mubr.bf16.gmra.mrb[0].mxu0 %v2691
        %v2817 = vpop.f32.mrb[0].mxu0
        %v2818 = vadd.f32 0.0, %v2817
        %v2819 = vpop.f32.mrb[0].mxu0
        %v2820 = vadd.f32 0.0, %v2819
        %v2821 = vpop.f32.mrb[0].mxu0
        %v2822 = vadd.f32 0.0, %v2821
        %v2823 = vpop.f32.mrb[0].mxu0
        %v2824 = vadd.f32 0.0, %v2823
        %2825 = vmatprep.mubr.bf16.mxu0 %v2694
        %2826 = vmatmul.mubr.bf16.gmra.mrb[0].mxu0 %v2693
        %v2827 = vpop.f32.mrb[0].mxu0
        %v2828 = vadd.f32 0.0, %v2827
        %v2829 = vpop.f32.mrb[0].mxu0
        %v2830 = vadd.f32 0.0, %v2829
        %v2831 = vpop.f32.mrb[0].mxu0
        %v2832 = vpop.f32.mrb[0].mxu0
        %2833 = vdwg.mxu0
        %s2834 = scalar_lea.vmem %s3, 136
        %v2835 = vld [vmem:[%s2834] sm:$0xff]
        %v2836 = vld [vmem:[%s2834 + $0x8] sm:$0xff]
        %v2837 = vld [vmem:[%s2834 + $0x10] sm:$0xff]
        %v2838 = vld [vmem:[%s2834 + $0x18] sm:$0xff]
        %v2839 = vld [vmem:[%s2834 + $0x20] sm:$0xff]
        %v2840 = vld [vmem:[%s2834 + $0x28] sm:$0xff]
        %v2841 = vld [vmem:[%s2834 + $0x30] sm:$0xff]
        %v2842 = vld [vmem:[%s2834 + $0x38] sm:$0xff]
        %v2843 = vld [vmem:[%s2834 + $0x40] sm:$0xff]
        %v2844 = vld [vmem:[%s2834 + $0x48] sm:$0xff]
        %v2845 = vld [vmem:[%s2834 + $0x50] sm:$0xff]
        %v2846 = vld [vmem:[%s2834 + $0x58] sm:$0xff]
        %v2847 = vld [vmem:[%s2834 + $0x60] sm:$0xff]
        %v2848 = vld [vmem:[%s2834 + $0x68] sm:$0xff]
        %v2849 = vld [vmem:[%s2834 + $0x70] sm:$0xff]
        %v2850 = vld [vmem:[%s2834 + $0x78] sm:$0xff]
        %v2851 = vld [vmem:[%s2834 + $0x80] sm:$0xff]
        %v2869 = vunpack.c.l.b16 %v2835
        %v2870 = vunpack.c.h.b16 %v2835
        %v2871 = vunpack.c.l.b16 %v2836
        %v2872 = vunpack.c.h.b16 %v2836
        %v2873 = vunpack.c.l.b16 %v2837
        %v2874 = vunpack.c.h.b16 %v2837
        %v2875 = vunpack.c.l.b16 %v2838
        %v2876 = vunpack.c.h.b16 %v2838
        %v2877 = vunpack.c.l.b16 %v2839
        %v2878 = vunpack.c.h.b16 %v2839
        %v2879 = vunpack.c.l.b16 %v2840
        %v2880 = vunpack.c.h.b16 %v2840
        %v2881 = vunpack.c.l.b16 %v2841
        %v2882 = vunpack.c.h.b16 %v2841
        %v2883 = vunpack.c.l.b16 %v2842
        %v2884 = vunpack.c.h.b16 %v2842
        %v2885 = vunpack.c.l.b16 %v2843
        %v2886 = vunpack.c.h.b16 %v2843
        %v2887 = vunpack.c.l.b16 %v2844
        %v2888 = vunpack.c.h.b16 %v2844
        %v2889 = vunpack.c.l.b16 %v2845
        %v2890 = vunpack.c.h.b16 %v2845
        %v2891 = vunpack.c.l.b16 %v2846
        %v2892 = vunpack.c.h.b16 %v2846
        %v2893 = vunpack.c.l.b16 %v2847
        %v2894 = vunpack.c.h.b16 %v2847
        %v2895 = vunpack.c.l.b16 %v2848
        %v2896 = vunpack.c.h.b16 %v2848
        %v2897 = vunpack.c.l.b16 %v2849
        %v2898 = vunpack.c.h.b16 %v2849
        %v2899 = vunpack.c.l.b16 %v2850
        %v2900 = vunpack.c.h.b16 %v2850
        %v2901 = vunpack.c.l.b16 %v2851
        %v2902 = vunpack.c.h.b16 %v2851
        %v2903 = vpack.c.b16 %v2871, %v2869
        %v2904 = vpack.c.b16 %v2872, %v2870
        %v2905 = vpack.c.b16 %v2875, %v2873
        %v2906 = vpack.c.b16 %v2876, %v2874
        %v2907 = vpack.c.b16 %v2879, %v2877
        %v2908 = vpack.c.b16 %v2880, %v2878
        %v2909 = vpack.c.b16 %v2883, %v2881
        %v2910 = vpack.c.b16 %v2884, %v2882
        %v2911 = vpack.c.b16 %v2887, %v2885
        %v2912 = vpack.c.b16 %v2888, %v2886
        %v2913 = vpack.c.b16 %v2891, %v2889
        %v2914 = vpack.c.b16 %v2892, %v2890
        %v2915 = vpack.c.b16 %v2895, %v2893
        %v2916 = vpack.c.b16 %v2896, %v2894
        %v2917 = vpack.c.b16 %v2899, %v2897
        %v2918 = vpack.c.b16 %v2900, %v2898
        %v2919 = vpack.c.b16 %v2901, %v2901
        %v2920 = vpack.c.b16 %v2902, %v2902
        %2939 = vmatprep.subr.bf16.mxu0 %v2578
        %2940 = vmatpush1.bf16.msra.mxu0 %v2577
        %2941 = vmatprep.subr.bf16.mxu0 %v2580
        %2942 = vmatpush1.bf16.msra.mxu0 %v2579
        %2943 = vmatprep.subr.bf16.mxu0 %v2582
        %2944 = vmatpush1.bf16.msra.mxu0 %v2581
        %2945 = vmatprep.subr.bf16.mxu0 %v2584
        %2946 = vmatpush1.bf16.msra.mxu0 %v2583
        %2947 = vmatprep.subr.bf16.mxu0 %v2586
        %2948 = vmatpush1.bf16.msra.mxu0 %v2585
        %2949 = vmatprep.subr.bf16.mxu0 %v2588
        %2950 = vmatpush1.bf16.msra.mxu0 %v2587
        %2951 = vmatprep.subr.bf16.mxu0 %v2590
        %2952 = vmatpush1.bf16.msra.mxu0 %v2589
        %2953 = vmatprep.subr.bf16.mxu0 %v2592
        %2954 = vmatpush1.bf16.msra.mxu0 %v2591
        %2955 = vmatprep.subr.bf16.mxu0 %v2594
        %2956 = vmatpush1.bf16.msra.mxu0 %v2593
        %2957 = vmatprep.subr.bf16.mxu0 %v2596
        %2958 = vmatpush1.bf16.msra.mxu0 %v2595
        %2959 = vmatprep.subr.bf16.mxu0 %v2598
        %2960 = vmatpush1.bf16.msra.mxu0 %v2597
        %2961 = vmatprep.subr.bf16.mxu0 %v2600
        %2962 = vmatpush1.bf16.msra.mxu0 %v2599
        %2963 = vmatprep.subr.bf16.mxu0 %v2602
        %2964 = vmatpush1.bf16.msra.mxu0 %v2601
        %2965 = vmatprep.subr.bf16.mxu0 %v2604
        %2966 = vmatpush1.bf16.msra.mxu0 %v2603
        %2967 = vmatprep.subr.bf16.mxu0 %v2606
        %2968 = vmatpush1.bf16.msra.mxu0 %v2605
        %2969 = vmatprep.subr.bf16.mxu0 %v2608
        %2970 = vmatpush1.bf16.msra.mxu0 %v2607
        %2971 = vmatprep.mubr.bf16.mxu0 %v2904
        %2972 = vmatmul.mubr.bf16.gmra.mrb[0].mxu0 %v2903
        %v2973 = vpop.f32.mrb[0].mxu0
        %v2974 = vadd.f32 0.0, %v2973
        %v2975 = vpop.f32.mrb[0].mxu0
        %v2976 = vadd.f32 0.0, %v2975
        %v2977 = vpop.f32.mrb[0].mxu0
        %v2978 = vadd.f32 0.0, %v2977
        %v2979 = vpop.f32.mrb[0].mxu0
        %v2980 = vadd.f32 0.0, %v2979
        %2981 = vmatprep.mubr.bf16.mxu0 %v2906
        %2982 = vmatmul.mubr.bf16.gmra.mrb[0].mxu0 %v2905
        %v2983 = vpop.f32.mrb[0].mxu0
        %v2984 = vadd.f32 0.0, %v2983
        %v2985 = vpop.f32.mrb[0].mxu0
        %v2986 = vadd.f32 0.0, %v2985
        %v2987 = vpop.f32.mrb[0].mxu0
        %v2988 = vadd.f32 0.0, %v2987
        %v2989 = vpop.f32.mrb[0].mxu0
        %v2990 = vadd.f32 0.0, %v2989
        %2991 = vmatprep.mubr.bf16.mxu0 %v2908
        %2992 = vmatmul.mubr.bf16.gmra.mrb[0].mxu0 %v2907
        %v2993 = vpop.f32.mrb[0].mxu0
        %v2994 = vadd.f32 0.0, %v2993
        %v2995 = vpop.f32.mrb[0].mxu0
        %v2996 = vadd.f32 0.0, %v2995
        %v2997 = vpop.f32.mrb[0].mxu0
        %v2998 = vadd.f32 0.0, %v2997
        %v2999 = vpop.f32.mrb[0].mxu0
        %v3000 = vadd.f32 0.0, %v2999
        %3001 = vmatprep.mubr.bf16.mxu0 %v2910
        %3002 = vmatmul.mubr.bf16.gmra.mrb[0].mxu0 %v2909
        %v3003 = vpop.f32.mrb[0].mxu0
        %v3004 = vadd.f32 0.0, %v3003
        %v3005 = vpop.f32.mrb[0].mxu0
        %v3006 = vadd.f32 0.0, %v3005
        %v3007 = vpop.f32.mrb[0].mxu0
        %v3008 = vadd.f32 0.0, %v3007
        %v3009 = vpop.f32.mrb[0].mxu0
        %v3010 = vadd.f32 0.0, %v3009
        %3011 = vmatprep.mubr.bf16.mxu0 %v2912
        %3012 = vmatmul.mubr.bf16.gmra.mrb[0].mxu0 %v2911
        %v3013 = vpop.f32.mrb[0].mxu0
        %v3014 = vadd.f32 0.0, %v3013
        %v3015 = vpop.f32.mrb[0].mxu0
        %v3016 = vadd.f32 0.0, %v3015
        %v3017 = vpop.f32.mrb[0].mxu0
        %v3018 = vadd.f32 0.0, %v3017
        %v3019 = vpop.f32.mrb[0].mxu0
        %v3020 = vadd.f32 0.0, %v3019
        %3021 = vmatprep.mubr.bf16.mxu0 %v2914
        %3022 = vmatmul.mubr.bf16.gmra.mrb[0].mxu0 %v2913
        %v3023 = vpop.f32.mrb[0].mxu0
        %v3024 = vadd.f32 0.0, %v3023
        %v3025 = vpop.f32.mrb[0].mxu0
        %v3026 = vadd.f32 0.0, %v3025
        %v3027 = vpop.f32.mrb[0].mxu0
        %v3028 = vadd.f32 0.0, %v3027
        %v3029 = vpop.f32.mrb[0].mxu0
        %v3030 = vadd.f32 0.0, %v3029
        %3031 = vmatprep.mubr.bf16.mxu0 %v2916
        %3032 = vmatmul.mubr.bf16.gmra.mrb[0].mxu0 %v2915
        %v3033 = vpop.f32.mrb[0].mxu0
        %v3034 = vadd.f32 0.0, %v3033
        %v3035 = vpop.f32.mrb[0].mxu0
        %v3036 = vadd.f32 0.0, %v3035
        %v3037 = vpop.f32.mrb[0].mxu0
        %v3038 = vadd.f32 0.0, %v3037
        %v3039 = vpop.f32.mrb[0].mxu0
        %v3040 = vadd.f32 0.0, %v3039
        %3041 = vmatprep.mubr.bf16.mxu0 %v2918
        %3042 = vmatmul.mubr.bf16.gmra.mrb[0].mxu0 %v2917
        %v3043 = vpop.f32.mrb[0].mxu0
        %v3044 = vadd.f32 0.0, %v3043
        %v3045 = vpop.f32.mrb[0].mxu0
        %v3046 = vadd.f32 0.0, %v3045
        %v3047 = vpop.f32.mrb[0].mxu0
        %v3048 = vadd.f32 0.0, %v3047
        %v3049 = vpop.f32.mrb[0].mxu0
        %v3050 = vadd.f32 0.0, %v3049
        %3051 = vmatprep.mubr.bf16.mxu0 %v2920
        %3052 = vmatmul.mubr.bf16.gmra.mrb[0].mxu0 %v2919
        %v3053 = vpop.f32.mrb[0].mxu0
        %v3054 = vadd.f32 0.0, %v3053
        %v3055 = vpop.f32.mrb[0].mxu0
        %v3056 = vadd.f32 0.0, %v3055
        %v3057 = vpop.f32.mrb[0].mxu0
        %v3058 = vpop.f32.mrb[0].mxu0
        %3059 = vdwg.mxu0
        %v3060 = vmax.f32 %v2748, %v2974
        %v3061 = vmax.f32 %v2750, %v2976
        %v3062 = vmax.f32 %v2752, %v2978
        %v3063 = vmax.f32 %v2754, %v2980
        %v3064 = vmax.f32 %v2758, %v2984
        %v3065 = vmax.f32 %v2760, %v2986
        %v3066 = vmax.f32 %v2762, %v2988
        %v3067 = vmax.f32 %v2764, %v2990
        %v3068 = vmax.f32 %v2768, %v2994
        %v3069 = vmax.f32 %v2770, %v2996
        %v3070 = vmax.f32 %v2772, %v2998
        %v3071 = vmax.f32 %v2774, %v3000
        %v3072 = vmax.f32 %v2778, %v3004
        %v3073 = vmax.f32 %v2780, %v3006
        %v3074 = vmax.f32 %v2782, %v3008
        %v3075 = vmax.f32 %v2784, %v3010
        %v3076 = vmax.f32 %v2788, %v3014
        %v3077 = vmax.f32 %v2790, %v3016
        %v3078 = vmax.f32 %v2792, %v3018
        %v3079 = vmax.f32 %v2794, %v3020
        %v3080 = vmax.f32 %v2798, %v3024
        %v3081 = vmax.f32 %v2800, %v3026
        %v3082 = vmax.f32 %v2802, %v3028
        %v3083 = vmax.f32 %v2804, %v3030
        %v3084 = vmax.f32 %v2808, %v3034
        %v3085 = vmax.f32 %v2810, %v3036
        %v3086 = vmax.f32 %v2812, %v3038
        %v3087 = vmax.f32 %v2814, %v3040
        %v3088 = vmax.f32 %v2818, %v3044
        %v3089 = vmax.f32 %v2820, %v3046
        %v3090 = vmax.f32 %v2822, %v3048
        %v3091 = vmax.f32 %v2824, %v3050
        %v3092 = vmax.f32 %v2828, %v3054
        %v3093 = vmax.f32 %v2830, %v3056
        %v3094 = vpack.c.bf16 %v3062, %v3060
        %v3095 = vpack.c.bf16 %v3063, %v3061
        %v3096 = vpack.c.bf16 %v3066, %v3064
        %v3097 = vpack.c.bf16 %v3067, %v3065
        %v3098 = vpack.c.bf16 %v3070, %v3068
        %v3099 = vpack.c.bf16 %v3071, %v3069
        %v3100 = vpack.c.bf16 %v3074, %v3072
        %v3101 = vpack.c.bf16 %v3075, %v3073
        %v3102 = vpack.c.bf16 %v3078, %v3076
        %v3103 = vpack.c.bf16 %v3079, %v3077
        %v3104 = vpack.c.bf16 %v3082, %v3080
        %v3105 = vpack.c.bf16 %v3083, %v3081
        %v3106 = vpack.c.bf16 %v3086, %v3084
        %v3107 = vpack.c.bf16 %v3087, %v3085
        %v3108 = vpack.c.bf16 %v3090, %v3088
        %v3109 = vpack.c.bf16 %v3091, %v3089
        %v3110 = vpack.c.bf16 %v3092, %v3092
        %v3111 = vpack.c.bf16 %v3093, %v3093
        %v3112 = vld [vmem:[%s4] sm:$0xf]
        %v3113 = vld [vmem:[%s4 + $0x4] sm:$0xf]
        %v3114 = vld [vmem:[%s4 + $0x8] sm:$0xf]
        %v3115 = vld [vmem:[%s4 + $0xc] sm:$0xf]
        %v3116 = vld [vmem:[%s4 + $0x10] sm:$0xf]
        %v3117 = vld [vmem:[%s4 + $0x14] sm:$0xf]
        %v3118 = vld [vmem:[%s4 + $0x18] sm:$0xf]
        %v3119 = vld [vmem:[%s4 + $0x1c] sm:$0xf]
        %v3120 = vld [vmem:[%s4 + $0x20] sm:$0xf]
        %v3121 = vld [vmem:[%s4 + $0x24] sm:$0xf]
        %v3122 = vld [vmem:[%s4 + $0x28] sm:$0xf]
        %v3123 = vld [vmem:[%s4 + $0x2c] sm:$0xf]
        %v3124 = vld [vmem:[%s4 + $0x30] sm:$0xf]
        %v3125 = vld [vmem:[%s4 + $0x34] sm:$0xf]
        %v3126 = vld [vmem:[%s4 + $0x38] sm:$0xf]
        %v3127 = vld [vmem:[%s4 + $0x3c] sm:$0xf]
        %v3128 = vld [vmem:[%s4 + $0x40] sm:$0xf]
        %v3129 = vld [vmem:[%s4 + $0x44] sm:$0xf]
        %v3130 = vld [vmem:[%s4 + $0x48] sm:$0xf]
        %v3131 = vld [vmem:[%s4 + $0x4c] sm:$0xf]
        %v3132 = vld [vmem:[%s4 + $0x50] sm:$0xf]
        %v3154 = vunpack.c.l.b16 %v3112
        %v3155 = vunpack.c.l.b16 %v3113
        %v3156 = vunpack.c.l.b16 %v3114
        %v3157 = vunpack.c.l.b16 %v3115
        %v3158 = vunpack.c.l.b16 %v3116
        %v3159 = vunpack.c.l.b16 %v3117
        %v3160 = vunpack.c.l.b16 %v3118
        %v3161 = vunpack.c.l.b16 %v3119
        %v3162 = vunpack.c.l.b16 %v3120
        %v3163 = vunpack.c.l.b16 %v3121
        %v3164 = vunpack.c.l.b16 %v3122
        %v3165 = vunpack.c.l.b16 %v3123
        %v3166 = vunpack.c.l.b16 %v3124
        %v3167 = vunpack.c.l.b16 %v3125
        %v3168 = vunpack.c.l.b16 %v3126
        %v3169 = vunpack.c.l.b16 %v3127
        %v3170 = vunpack.c.l.b16 %v3128
        %v3171 = vunpack.c.l.b16 %v3129
        %v3172 = vunpack.c.l.b16 %v3130
        %v3173 = vunpack.c.l.b16 %v3131
        %v3174 = vunpack.c.l.b16 %v3132
        %v3175 = vpack.c.b16 %v3155, %v3154
        %v3176 = vpack.c.b16 %v3157, %v3156
        %v3177 = vpack.c.b16 %v3159, %v3158
        %v3178 = vpack.c.b16 %v3161, %v3160
        %v3179 = vpack.c.b16 %v3163, %v3162
        %v3180 = vpack.c.b16 %v3165, %v3164
        %v3181 = vpack.c.b16 %v3167, %v3166
        %v3182 = vpack.c.b16 %v3169, %v3168
        %v3183 = vpack.c.b16 %v3171, %v3170
        %v3184 = vpack.c.b16 %v3173, %v3172
        %v3185 = vpack.c.b16 %v3174, %v3174
        %vm3196 = vcmask 326656
        %v3198 = vsel %vm3196, %v3095, 0
        %v3201 = vsel %vm3196, %v3097, 0
        %v3204 = vsel %vm3196, %v3099, 0
        %v3207 = vsel %vm3196, %v3101, 0
        %v3210 = vsel %vm3196, %v3103, 0
        %v3213 = vsel %vm3196, %v3105, 0
        %v3216 = vsel %vm3196, %v3107, 0
        %v3219 = vsel %vm3196, %v3109, 0
        %v3222 = vsel %vm3196, %v3111, 0
        %vm3224 = vcmask 1043456
        %v3226 = vsel %vm3224, %v3185, 0
        %3228 = vmatprep.subr.bf16.mxu0 0
        %3229 = vmatpush1.bf16.msra.mxu0 %v3175
        %3230 = vmatprep.subr.bf16.mxu0 0
        %3231 = vmatpush1.bf16.msra.mxu0 %v3176
        %3232 = vmatprep.subr.bf16.mxu0 0
        %3233 = vmatpush1.bf16.msra.mxu0 %v3177
        %3234 = vmatprep.subr.bf16.mxu0 0
        %3235 = vmatpush1.bf16.msra.mxu0 %v3178
        %3236 = vmatprep.subr.bf16.mxu0 0
        %3237 = vmatpush1.bf16.msra.mxu0 %v3179
        %3238 = vmatprep.subr.bf16.mxu0 0
        %3239 = vmatpush1.bf16.msra.mxu0 %v3180
        %3240 = vmatprep.subr.bf16.mxu0 0
        %3241 = vmatpush1.bf16.msra.mxu0 %v3181
        %3242 = vmatprep.subr.bf16.mxu0 0
        %3243 = vmatpush1.bf16.msra.mxu0 %v3182
        %3244 = vmatprep.subr.bf16.mxu0 0
        %3245 = vmatpush1.bf16.msra.mxu0 %v3183
        %3246 = vmatprep.subr.bf16.mxu0 0
        %3247 = vmatpush1.bf16.msra.mxu0 %v3184
        %3248 = vmatprep.subr.bf16.mxu0 0
        %3249 = vmatpush1.bf16.msra.mxu0 %v3226
        %3250 = vmatprep.subr.bf16.mxu0 0
        %3251 = vmatpush1.bf16.msra.mxu0 0
        %3252 = vmatprep.subr.bf16.mxu0 0
        %3253 = vmatpush1.bf16.msra.mxu0 0
        %3254 = vmatprep.subr.bf16.mxu0 0
        %3255 = vmatpush1.bf16.msra.mxu0 0
        %3256 = vmatprep.subr.bf16.mxu0 0
        %3257 = vmatpush1.bf16.msra.mxu0 0
        %3258 = vmatprep.subr.bf16.mxu0 0
        %3259 = vmatpush1.bf16.msra.mxu0 0
        %3260 = vmatprep.mubr.bf16.mxu0 %v3198
        %3261 = vmatmul.mubr.bf16.gmra.mrb[0].mxu0 %v3094
        %v3262 = vpop.f32.mrb[0].mxu0
        %v3263 = vadd.f32 0.0, %v3262
        %v3264 = vpop.f32.mrb[0].mxu0
        %v3265 = vpop.f32.mrb[0].mxu0
        %v3266 = vadd.f32 0.0, %v3265
        %v3267 = vpop.f32.mrb[0].mxu0
        %3268 = vmatprep.mubr.bf16.mxu0 %v3201
        %3269 = vmatmul.mubr.bf16.gmra.mrb[0].mxu0 %v3096
        %v3270 = vpop.f32.mrb[0].mxu0
        %v3271 = vadd.f32 0.0, %v3270
        %v3272 = vpop.f32.mrb[0].mxu0
        %v3273 = vpop.f32.mrb[0].mxu0
        %v3274 = vadd.f32 0.0, %v3273
        %v3275 = vpop.f32.mrb[0].mxu0
        %3276 = vmatprep.mubr.bf16.mxu0 %v3204
        %3277 = vmatmul.mubr.bf16.gmra.mrb[0].mxu0 %v3098
        %v3278 = vpop.f32.mrb[0].mxu0
        %v3279 = vadd.f32 0.0, %v3278
        %v3280 = vpop.f32.mrb[0].mxu0
        %v3281 = vpop.f32.mrb[0].mxu0
        %v3282 = vadd.f32 0.0, %v3281
        %v3283 = vpop.f32.mrb[0].mxu0
        %3284 = vmatprep.mubr.bf16.mxu0 %v3207
        %3285 = vmatmul.mubr.bf16.gmra.mrb[0].mxu0 %v3100
        %v3286 = vpop.f32.mrb[0].mxu0
        %v3287 = vadd.f32 0.0, %v3286
        %v3288 = vpop.f32.mrb[0].mxu0
        %v3289 = vpop.f32.mrb[0].mxu0
        %v3290 = vadd.f32 0.0, %v3289
        %v3291 = vpop.f32.mrb[0].mxu0
        %3292 = vmatprep.mubr.bf16.mxu0 %v3210
        %3293 = vmatmul.mubr.bf16.gmra.mrb[0].mxu0 %v3102
        %v3294 = vpop.f32.mrb[0].mxu0
        %v3295 = vadd.f32 0.0, %v3294
        %v3296 = vpop.f32.mrb[0].mxu0
        %v3297 = vpop.f32.mrb[0].mxu0
        %v3298 = vadd.f32 0.0, %v3297
        %v3299 = vpop.f32.mrb[0].mxu0
        %3300 = vmatprep.mubr.bf16.mxu0 %v3213
        %3301 = vmatmul.mubr.bf16.gmra.mrb[0].mxu0 %v3104
        %v3302 = vpop.f32.mrb[0].mxu0
        %v3303 = vadd.f32 0.0, %v3302
        %v3304 = vpop.f32.mrb[0].mxu0
        %v3305 = vpop.f32.mrb[0].mxu0
        %v3306 = vadd.f32 0.0, %v3305
        %v3307 = vpop.f32.mrb[0].mxu0
        %3308 = vmatprep.mubr.bf16.mxu0 %v3216
        %3309 = vmatmul.mubr.bf16.gmra.mrb[0].mxu0 %v3106
        %v3310 = vpop.f32.mrb[0].mxu0
        %v3311 = vadd.f32 0.0, %v3310
        %v3312 = vpop.f32.mrb[0].mxu0
        %v3313 = vpop.f32.mrb[0].mxu0
        %v3314 = vadd.f32 0.0, %v3313
        %v3315 = vpop.f32.mrb[0].mxu0
        %3316 = vmatprep.mubr.bf16.mxu0 %v3219
        %3317 = vmatmul.mubr.bf16.gmra.mrb[0].mxu0 %v3108
        %v3318 = vpop.f32.mrb[0].mxu0
        %v3319 = vadd.f32 0.0, %v3318
        %v3320 = vpop.f32.mrb[0].mxu0
        %v3321 = vpop.f32.mrb[0].mxu0
        %v3322 = vadd.f32 0.0, %v3321
        %v3323 = vpop.f32.mrb[0].mxu0
        %3324 = vmatprep.mubr.bf16.mxu0 %v3222
        %3325 = vmatmul.mubr.bf16.gmra.mrb[0].mxu0 %v3110
        %v3326 = vpop.f32.mrb[0].mxu0
        %v3327 = vadd.f32 0.0, %v3326
        %v3328 = vpop.f32.mrb[0].mxu0
        %v3329 = vpop.f32.mrb[0].mxu0
        %v3330 = vpop.f32.mrb[0].mxu0
        %3331 = vdwg.mxu0
        %s3332 = scalar_lea.vmem %s4, 84
        %v3333 = vld [vmem:[%s3332] sm:$0xf]
        %v3334 = vld [vmem:[%s3332 + $0x4] sm:$0xf]
        %v3335 = vld [vmem:[%s3332 + $0x8] sm:$0xf]
        %v3336 = vld [vmem:[%s3332 + $0xc] sm:$0xf]
        %v3337 = vld [vmem:[%s3332 + $0x10] sm:$0xf]
        %v3338 = vld [vmem:[%s3332 + $0x14] sm:$0xf]
        %v3339 = vld [vmem:[%s3332 + $0x18] sm:$0xf]
        %v3340 = vld [vmem:[%s3332 + $0x1c] sm:$0xf]
        %v3341 = vld [vmem:[%s3332 + $0x20] sm:$0xf]
        %v3342 = vld [vmem:[%s3332 + $0x24] sm:$0xf]
        %v3343 = vld [vmem:[%s3332 + $0x28] sm:$0xf]
        %v3344 = vld [vmem:[%s3332 + $0x2c] sm:$0xf]
        %v3345 = vld [vmem:[%s3332 + $0x30] sm:$0xf]
        %v3346 = vld [vmem:[%s3332 + $0x34] sm:$0xf]
        %v3347 = vld [vmem:[%s3332 + $0x38] sm:$0xf]
        %v3348 = vld [vmem:[%s3332 + $0x3c] sm:$0xf]
        %v3349 = vld [vmem:[%s3332 + $0x40] sm:$0xf]
        %v3350 = vld [vmem:[%s3332 + $0x44] sm:$0xf]
        %v3351 = vld [vmem:[%s3332 + $0x48] sm:$0xf]
        %v3352 = vld [vmem:[%s3332 + $0x4c] sm:$0xf]
        %v3353 = vld [vmem:[%s3332 + $0x50] sm:$0xf]
        %v3375 = vunpack.c.l.b16 %v3333
        %v3376 = vunpack.c.l.b16 %v3334
        %v3377 = vunpack.c.l.b16 %v3335
        %v3378 = vunpack.c.l.b16 %v3336
        %v3379 = vunpack.c.l.b16 %v3337
        %v3380 = vunpack.c.l.b16 %v3338
        %v3381 = vunpack.c.l.b16 %v3339
        %v3382 = vunpack.c.l.b16 %v3340
        %v3383 = vunpack.c.l.b16 %v3341
        %v3384 = vunpack.c.l.b16 %v3342
        %v3385 = vunpack.c.l.b16 %v3343
        %v3386 = vunpack.c.l.b16 %v3344
        %v3387 = vunpack.c.l.b16 %v3345
        %v3388 = vunpack.c.l.b16 %v3346
        %v3389 = vunpack.c.l.b16 %v3347
        %v3390 = vunpack.c.l.b16 %v3348
        %v3391 = vunpack.c.l.b16 %v3349
        %v3392 = vunpack.c.l.b16 %v3350
        %v3393 = vunpack.c.l.b16 %v3351
        %v3394 = vunpack.c.l.b16 %v3352
        %v3395 = vunpack.c.l.b16 %v3353
        %v3396 = vpack.c.b16 %v3376, %v3375
        %v3397 = vpack.c.b16 %v3378, %v3377
        %v3398 = vpack.c.b16 %v3380, %v3379
        %v3399 = vpack.c.b16 %v3382, %v3381
        %v3400 = vpack.c.b16 %v3384, %v3383
        %v3401 = vpack.c.b16 %v3386, %v3385
        %v3402 = vpack.c.b16 %v3388, %v3387
        %v3403 = vpack.c.b16 %v3390, %v3389
        %v3404 = vpack.c.b16 %v3392, %v3391
        %v3405 = vpack.c.b16 %v3394, %v3393
        %v3406 = vpack.c.b16 %v3395, %v3395
        %v3418 = vsel %vm3224, %v3406, 0
        %3420 = vmatprep.subr.bf16.mxu0 0
        %3421 = vmatpush1.bf16.msra.mxu0 %v3396
        %3422 = vmatprep.subr.bf16.mxu0 0
        %3423 = vmatpush1.bf16.msra.mxu0 %v3397
        %3424 = vmatprep.subr.bf16.mxu0 0
        %3425 = vmatpush1.bf16.msra.mxu0 %v3398
        %3426 = vmatprep.subr.bf16.mxu0 0
        %3427 = vmatpush1.bf16.msra.mxu0 %v3399
        %3428 = vmatprep.subr.bf16.mxu0 0
        %3429 = vmatpush1.bf16.msra.mxu0 %v3400
        %3430 = vmatprep.subr.bf16.mxu0 0
        %3431 = vmatpush1.bf16.msra.mxu0 %v3401
        %3432 = vmatprep.subr.bf16.mxu0 0
        %3433 = vmatpush1.bf16.msra.mxu0 %v3402
        %3434 = vmatprep.subr.bf16.mxu0 0
        %3435 = vmatpush1.bf16.msra.mxu0 %v3403
        %3436 = vmatprep.subr.bf16.mxu0 0
        %3437 = vmatpush1.bf16.msra.mxu0 %v3404
        %3438 = vmatprep.subr.bf16.mxu0 0
        %3439 = vmatpush1.bf16.msra.mxu0 %v3405
        %3440 = vmatprep.subr.bf16.mxu0 0
        %3441 = vmatpush1.bf16.msra.mxu0 %v3418
        %3442 = vmatprep.subr.bf16.mxu0 0
        %3443 = vmatpush1.bf16.msra.mxu0 0
        %3444 = vmatprep.subr.bf16.mxu0 0
        %3445 = vmatpush1.bf16.msra.mxu0 0
        %3446 = vmatprep.subr.bf16.mxu0 0
        %3447 = vmatpush1.bf16.msra.mxu0 0
        %3448 = vmatprep.subr.bf16.mxu0 0
        %3449 = vmatpush1.bf16.msra.mxu0 0
        %3450 = vmatprep.subr.bf16.mxu0 0
        %3451 = vmatpush1.bf16.msra.mxu0 0
        %3452 = vmatprep.mubr.bf16.mxu0 %v3198
        %3453 = vmatmul.mubr.bf16.gmra.mrb[0].mxu0 %v3094
        %v3454 = vpop.f32.mrb[0].mxu0
        %v3455 = vadd.f32 0.0, %v3454
        %v3456 = vpop.f32.mrb[0].mxu0
        %v3457 = vpop.f32.mrb[0].mxu0
        %v3458 = vadd.f32 0.0, %v3457
        %v3459 = vpop.f32.mrb[0].mxu0
        %3460 = vmatprep.mubr.bf16.mxu0 %v3201
        %3461 = vmatmul.mubr.bf16.gmra.mrb[0].mxu0 %v3096
        %v3462 = vpop.f32.mrb[0].mxu0
        %v3463 = vadd.f32 0.0, %v3462
        %v3464 = vpop.f32.mrb[0].mxu0
        %v3465 = vpop.f32.mrb[0].mxu0
        %v3466 = vadd.f32 0.0, %v3465
        %v3467 = vpop.f32.mrb[0].mxu0
        %3468 = vmatprep.mubr.bf16.mxu0 %v3204
        %3469 = vmatmul.mubr.bf16.gmra.mrb[0].mxu0 %v3098
        %v3470 = vpop.f32.mrb[0].mxu0
        %v3471 = vadd.f32 0.0, %v3470
        %v3472 = vpop.f32.mrb[0].mxu0
        %v3473 = vpop.f32.mrb[0].mxu0
        %v3474 = vadd.f32 0.0, %v3473
        %v3475 = vpop.f32.mrb[0].mxu0
        %3476 = vmatprep.mubr.bf16.mxu0 %v3207
        %3477 = vmatmul.mubr.bf16.gmra.mrb[0].mxu0 %v3100
        %v3478 = vpop.f32.mrb[0].mxu0
        %v3479 = vadd.f32 0.0, %v3478
        %v3480 = vpop.f32.mrb[0].mxu0
        %v3481 = vpop.f32.mrb[0].mxu0
        %v3482 = vadd.f32 0.0, %v3481
        %v3483 = vpop.f32.mrb[0].mxu0
        %3484 = vmatprep.mubr.bf16.mxu0 %v3210
        %3485 = vmatmul.mubr.bf16.gmra.mrb[0].mxu0 %v3102
        %v3486 = vpop.f32.mrb[0].mxu0
        %v3487 = vadd.f32 0.0, %v3486
        %v3488 = vpop.f32.mrb[0].mxu0
        %v3489 = vpop.f32.mrb[0].mxu0
        %v3490 = vadd.f32 0.0, %v3489
        %v3491 = vpop.f32.mrb[0].mxu0
        %3492 = vmatprep.mubr.bf16.mxu0 %v3213
        %3493 = vmatmul.mubr.bf16.gmra.mrb[0].mxu0 %v3104
        %v3494 = vpop.f32.mrb[0].mxu0
        %v3495 = vadd.f32 0.0, %v3494
        %v3496 = vpop.f32.mrb[0].mxu0
        %v3497 = vpop.f32.mrb[0].mxu0
        %v3498 = vadd.f32 0.0, %v3497
        %v3499 = vpop.f32.mrb[0].mxu0
        %3500 = vmatprep.mubr.bf16.mxu0 %v3216
        %3501 = vmatmul.mubr.bf16.gmra.mrb[0].mxu0 %v3106
        %v3502 = vpop.f32.mrb[0].mxu0
        %v3503 = vadd.f32 0.0, %v3502
        %v3504 = vpop.f32.mrb[0].mxu0
        %v3505 = vpop.f32.mrb[0].mxu0
        %v3506 = vadd.f32 0.0, %v3505
        %v3507 = vpop.f32.mrb[0].mxu0
        %3508 = vmatprep.mubr.bf16.mxu0 %v3219
        %3509 = vmatmul.mubr.bf16.gmra.mrb[0].mxu0 %v3108
        %v3510 = vpop.f32.mrb[0].mxu0
        %v3511 = vadd.f32 0.0, %v3510
        %v3512 = vpop.f32.mrb[0].mxu0
        %v3513 = vpop.f32.mrb[0].mxu0
        %v3514 = vadd.f32 0.0, %v3513
        %v3515 = vpop.f32.mrb[0].mxu0
        %3516 = vmatprep.mubr.bf16.mxu0 %v3222
        %3517 = vmatmul.mubr.bf16.gmra.mrb[0].mxu0 %v3110
        %v3518 = vpop.f32.mrb[0].mxu0
        %v3519 = vadd.f32 0.0, %v3518
        %v3520 = vpop.f32.mrb[0].mxu0
        %v3521 = vpop.f32.mrb[0].mxu0
        %v3522 = vpop.f32.mrb[0].mxu0
        %3523 = vdwg.mxu0
        %v3524 = vmax.f32 %v3263, %v3455
        %v3525 = vmax.f32 %v3266, %v3458
        %v3526 = vmax.f32 %v3271, %v3463
        %v3527 = vmax.f32 %v3274, %v3466
        %v3528 = vmax.f32 %v3279, %v3471
        %v3529 = vmax.f32 %v3282, %v3474
        %v3530 = vmax.f32 %v3287, %v3479
        %v3531 = vmax.f32 %v3290, %v3482
        %v3532 = vmax.f32 %v3295, %v3487
        %v3533 = vmax.f32 %v3298, %v3490
        %v3534 = vmax.f32 %v3303, %v3495
        %v3535 = vmax.f32 %v3306, %v3498
        %v3536 = vmax.f32 %v3311, %v3503
        %v3537 = vmax.f32 %v3314, %v3506
        %v3538 = vmax.f32 %v3319, %v3511
        %v3539 = vmax.f32 %v3322, %v3514
        %v3540 = vmax.f32 %v3327, %v3519
        %v3541 = vpack.c.bf16 %v3525, %v3524
        %v3542 = vpack.c.bf16 %v3527, %v3526
        %v3543 = vpack.c.bf16 %v3529, %v3528
        %v3544 = vpack.c.bf16 %v3531, %v3530
        %v3545 = vpack.c.bf16 %v3533, %v3532
        %v3546 = vpack.c.bf16 %v3535, %v3534
        %v3547 = vpack.c.bf16 %v3537, %v3536
        %v3548 = vpack.c.bf16 %v3539, %v3538
        %v3549 = vpack.c.bf16 %v3540, %v3540
        %v3550 = vld [vmem:[%s5] sm:$0xff]
        %v3551 = vld [vmem:[%s5 + $0x8] sm:$0xff]
        %v3552 = vld [vmem:[%s5 + $0x10] sm:$0xff]
        %v3553 = vld [vmem:[%s5 + $0x18] sm:$0xff]
        %v3554 = vld [vmem:[%s5 + $0x20] sm:$0xff]
        %v3555 = vld [vmem:[%s5 + $0x28] sm:$0xff]
        %v3556 = vld [vmem:[%s5 + $0x30] sm:$0xff]
        %v3557 = vld [vmem:[%s5 + $0x38] sm:$0xff]
        %v3558 = vld [vmem:[%s5 + $0x40] sm:$0xff]
        %v3559 = vld [vmem:[%s5 + $0x48] sm:$0xff]
        %v3560 = vld [vmem:[%s5 + $0x50] sm:$0x33]
        %s3561 = scalar_lea.vmem %s5, 88
        %v3562 = vld [vmem:[%s3561] sm:$0xff]
        %v3563 = vld [vmem:[%s3561 + $0x8] sm:$0xff]
        %v3564 = vld [vmem:[%s3561 + $0x10] sm:$0xff]
        %v3565 = vld [vmem:[%s3561 + $0x18] sm:$0xff]
        %v3566 = vld [vmem:[%s3561 + $0x20] sm:$0xff]
        %v3567 = vld [vmem:[%s3561 + $0x28] sm:$0xff]
        %v3568 = vld [vmem:[%s3561 + $0x30] sm:$0xff]
        %v3569 = vld [vmem:[%s3561 + $0x38] sm:$0xff]
        %v3570 = vld [vmem:[%s3561 + $0x40] sm:$0xff]
        %v3571 = vld [vmem:[%s3561 + $0x48] sm:$0xff]
        %v3572 = vld [vmem:[%s3561 + $0x50] sm:$0x33]
        %v3574 = vshrl.u32 %v3541, 16
        %v3576 = vshll.u32 %v3541, 16
        %v3578 = vrot.slane %v3576, 1
        %v3579 = vor.u32 %v3574, %v3578
        %v3581 = vshll.u32 %v3542, 16
        %v3583 = vrot.slane %v3581, 1
        %v3584 = vsel %vm648, %v3579, %v3583
        %v3585 = vshrl.u32 %v3542, 16
        %v3587 = vor.u32 %v3585, %v3583
        %v3589 = vshll.u32 %v3543, 16
        %v3591 = vrot.slane %v3589, 1
        %v3592 = vsel %vm648, %v3587, %v3591
        %v3593 = vshrl.u32 %v3543, 16
        %v3595 = vor.u32 %v3593, %v3591
        %v3597 = vshll.u32 %v3544, 16
        %v3599 = vrot.slane %v3597, 1
        %v3600 = vsel %vm648, %v3595, %v3599
        %v3601 = vshrl.u32 %v3544, 16
        %v3603 = vor.u32 %v3601, %v3599
        %v3605 = vshll.u32 %v3545, 16
        %v3607 = vrot.slane %v3605, 1
        %v3608 = vsel %vm648, %v3603, %v3607
        %v3609 = vshrl.u32 %v3545, 16
        %v3611 = vor.u32 %v3609, %v3607
        %v3613 = vshll.u32 %v3546, 16
        %v3615 = vrot.slane %v3613, 1
        %v3616 = vsel %vm648, %v3611, %v3615
        %v3617 = vshrl.u32 %v3546, 16
        %v3619 = vor.u32 %v3617, %v3615
        %v3621 = vshll.u32 %v3547, 16
        %v3623 = vrot.slane %v3621, 1
        %v3624 = vsel %vm648, %v3619, %v3623
        %v3625 = vshrl.u32 %v3547, 16
        %v3627 = vor.u32 %v3625, %v3623
        %v3629 = vshll.u32 %v3548, 16
        %v3631 = vrot.slane %v3629, 1
        %v3632 = vsel %vm648, %v3627, %v3631
        %v3633 = vshrl.u32 %v3548, 16
        %v3635 = vor.u32 %v3633, %v3631
        %v3637 = vshll.u32 %v3549, 16
        %v3639 = vrot.slane %v3637, 1
        %v3640 = vsel %vm648, %v3635, %v3639
        %v3652 = vunpack.c.l.b16 %v3562
        %v3653 = vunpack.c.h.b16 %v3562
        %v3654 = vunpack.c.l.b16 %v3563
        %v3655 = vunpack.c.h.b16 %v3563
        %v3656 = vunpack.c.l.b16 %v3564
        %v3657 = vunpack.c.h.b16 %v3564
        %v3658 = vunpack.c.l.b16 %v3565
        %v3659 = vunpack.c.h.b16 %v3565
        %v3660 = vunpack.c.l.b16 %v3566
        %v3661 = vunpack.c.h.b16 %v3566
        %v3662 = vunpack.c.l.b16 %v3567
        %v3663 = vunpack.c.h.b16 %v3567
        %v3664 = vunpack.c.l.b16 %v3568
        %v3665 = vunpack.c.h.b16 %v3568
        %v3666 = vunpack.c.l.b16 %v3569
        %v3667 = vunpack.c.h.b16 %v3569
        %v3668 = vunpack.c.l.b16 %v3570
        %v3669 = vunpack.c.h.b16 %v3570
        %v3670 = vunpack.c.l.b16 %v3571
        %v3671 = vunpack.c.h.b16 %v3571
        %v3672 = vunpack.c.l.b16 %v3572
        %v3673 = vunpack.c.h.b16 %v3572
        %v3674 = vpack.c.b16 %v3654, %v3652
        %v3675 = vpack.c.b16 %v3655, %v3653
        %v3676 = vpack.c.b16 %v3658, %v3656
        %v3677 = vpack.c.b16 %v3659, %v3657
        %v3678 = vpack.c.b16 %v3662, %v3660
        %v3679 = vpack.c.b16 %v3663, %v3661
        %v3680 = vpack.c.b16 %v3666, %v3664
        %v3681 = vpack.c.b16 %v3667, %v3665
        %v3682 = vpack.c.b16 %v3670, %v3668
        %v3683 = vpack.c.b16 %v3671, %v3669
        %v3684 = vpack.c.b16 %v3672, %v3672
        %v3685 = vpack.c.b16 %v3673, %v3673
        %vm3696 = vcmask 687104
        %v3698 = vsel %vm3696, %v3584, 0
        %v3701 = vsel %vm3696, %v3592, 0
        %v3704 = vsel %vm3696, %v3600, 0
        %v3707 = vsel %vm3696, %v3608, 0
        %v3710 = vsel %vm3696, %v3616, 0
        %v3713 = vsel %vm3696, %v3624, 0
        %v3716 = vsel %vm3696, %v3632, 0
        %v3719 = vsel %vm3696, %v3640, 0
        %vm3721 = vcmask 1041408
        %v3723 = vsel %vm3721, %v3684, 0
        %v3726 = vsel %vm3721, %v3685, 0
        %3728 = vmatprep.subr.bf16.mxu0 %v3675
        %3729 = vmatpush1.bf16.msra.mxu0 %v3674
        %3730 = vmatprep.subr.bf16.mxu0 %v3677
        %3731 = vmatpush1.bf16.msra.mxu0 %v3676
        %3732 = vmatprep.subr.bf16.mxu0 %v3679
        %3733 = vmatpush1.bf16.msra.mxu0 %v3678
        %3734 = vmatprep.subr.bf16.mxu0 %v3681
        %3735 = vmatpush1.bf16.msra.mxu0 %v3680
        %3736 = vmatprep.subr.bf16.mxu0 %v3683
        %3737 = vmatpush1.bf16.msra.mxu0 %v3682
        %3738 = vmatprep.subr.bf16.mxu0 %v3726
        %3739 = vmatpush1.bf16.msra.mxu0 %v3723
        %3740 = vmatprep.subr.bf16.mxu0 0
        %3741 = vmatpush1.bf16.msra.mxu0 0
        %3742 = vmatprep.subr.bf16.mxu0 0
        %3743 = vmatpush1.bf16.msra.mxu0 0
        %3744 = vmatprep.subr.bf16.mxu0 0
        %3745 = vmatpush1.bf16.msra.mxu0 0
        %3746 = vmatprep.subr.bf16.mxu0 0
        %3747 = vmatpush1.bf16.msra.mxu0 0
        %3748 = vmatprep.subr.bf16.mxu0 0
        %3749 = vmatpush1.bf16.msra.mxu0 0
        %3750 = vmatprep.subr.bf16.mxu0 0
        %3751 = vmatpush1.bf16.msra.mxu0 0
        %3752 = vmatprep.subr.bf16.mxu0 0
        %3753 = vmatpush1.bf16.msra.mxu0 0
        %3754 = vmatprep.subr.bf16.mxu0 0
        %3755 = vmatpush1.bf16.msra.mxu0 0
        %3756 = vmatprep.subr.bf16.mxu0 0
        %3757 = vmatpush1.bf16.msra.mxu0 0
        %3758 = vmatprep.subr.bf16.mxu0 0
        %3759 = vmatpush1.bf16.msra.mxu0 0
        %3760 = vmatprep.mubr.bf16.mxu0 0
        %3761 = vmatmul.mubr.bf16.gmra.mrb[0].mxu0 %v3698
        %v3762 = vpop.f32.mrb[0].mxu0
        %v3763 = vadd.f32 0.0, %v3762
        %v3764 = vpop.f32.mrb[0].mxu0
        %v3765 = vadd.f32 0.0, %v3764
        %v3766 = vpop.f32.mrb[0].mxu0
        %v3767 = vadd.f32 0.0, %v3766
        %v3768 = vpop.f32.mrb[0].mxu0
        %v3769 = vadd.f32 0.0, %v3768
        %3770 = vmatprep.mubr.bf16.mxu0 0
        %3771 = vmatmul.mubr.bf16.gmra.mrb[0].mxu0 %v3701
        %v3772 = vpop.f32.mrb[0].mxu0
        %v3773 = vadd.f32 0.0, %v3772
        %v3774 = vpop.f32.mrb[0].mxu0
        %v3775 = vadd.f32 0.0, %v3774
        %v3776 = vpop.f32.mrb[0].mxu0
        %v3777 = vadd.f32 0.0, %v3776
        %v3778 = vpop.f32.mrb[0].mxu0
        %v3779 = vadd.f32 0.0, %v3778
        %3780 = vmatprep.mubr.bf16.mxu0 0
        %3781 = vmatmul.mubr.bf16.gmra.mrb[0].mxu0 %v3704
        %v3782 = vpop.f32.mrb[0].mxu0
        %v3783 = vadd.f32 0.0, %v3782
        %v3784 = vpop.f32.mrb[0].mxu0
        %v3785 = vadd.f32 0.0, %v3784
        %v3786 = vpop.f32.mrb[0].mxu0
        %v3787 = vadd.f32 0.0, %v3786
        %v3788 = vpop.f32.mrb[0].mxu0
        %v3789 = vadd.f32 0.0, %v3788
        %3790 = vmatprep.mubr.bf16.mxu0 0
        %3791 = vmatmul.mubr.bf16.gmra.mrb[0].mxu0 %v3707
        %v3792 = vpop.f32.mrb[0].mxu0
        %v3793 = vadd.f32 0.0, %v3792
        %v3794 = vpop.f32.mrb[0].mxu0
        %v3795 = vadd.f32 0.0, %v3794
        %v3796 = vpop.f32.mrb[0].mxu0
        %v3797 = vadd.f32 0.0, %v3796
        %v3798 = vpop.f32.mrb[0].mxu0
        %v3799 = vadd.f32 0.0, %v3798
        %3800 = vmatprep.mubr.bf16.mxu0 0
        %3801 = vmatmul.mubr.bf16.gmra.mrb[0].mxu0 %v3710
        %v3802 = vpop.f32.mrb[0].mxu0
        %v3803 = vadd.f32 0.0, %v3802
        %v3804 = vpop.f32.mrb[0].mxu0
        %v3805 = vadd.f32 0.0, %v3804
        %v3806 = vpop.f32.mrb[0].mxu0
        %v3807 = vadd.f32 0.0, %v3806
        %v3808 = vpop.f32.mrb[0].mxu0
        %v3809 = vadd.f32 0.0, %v3808
        %3810 = vmatprep.mubr.bf16.mxu0 0
        %3811 = vmatmul.mubr.bf16.gmra.mrb[0].mxu0 %v3713
        %v3812 = vpop.f32.mrb[0].mxu0
        %v3813 = vadd.f32 0.0, %v3812
        %v3814 = vpop.f32.mrb[0].mxu0
        %v3815 = vadd.f32 0.0, %v3814
        %v3816 = vpop.f32.mrb[0].mxu0
        %v3817 = vadd.f32 0.0, %v3816
        %v3818 = vpop.f32.mrb[0].mxu0
        %v3819 = vadd.f32 0.0, %v3818
        %3820 = vmatprep.mubr.bf16.mxu0 0
        %3821 = vmatmul.mubr.bf16.gmra.mrb[0].mxu0 %v3716
        %v3822 = vpop.f32.mrb[0].mxu0
        %v3823 = vadd.f32 0.0, %v3822
        %v3824 = vpop.f32.mrb[0].mxu0
        %v3825 = vadd.f32 0.0, %v3824
        %v3826 = vpop.f32.mrb[0].mxu0
        %v3827 = vadd.f32 0.0, %v3826
        %v3828 = vpop.f32.mrb[0].mxu0
        %v3829 = vadd.f32 0.0, %v3828
        %3830 = vmatprep.mubr.bf16.mxu0 0
        %3831 = vmatmul.mubr.bf16.gmra.mrb[0].mxu0 %v3719
        %v3832 = vpop.f32.mrb[0].mxu0
        %v3833 = vadd.f32 0.0, %v3832
        %v3834 = vpop.f32.mrb[0].mxu0
        %v3835 = vadd.f32 0.0, %v3834
        %v3836 = vpop.f32.mrb[0].mxu0
        %v3837 = vadd.f32 0.0, %v3836
        %v3838 = vpop.f32.mrb[0].mxu0
        %v3839 = vadd.f32 0.0, %v3838
        %3840 = vdwg.mxu0
        %v3852 = vunpack.c.l.b16 %v3550
        %v3853 = vunpack.c.h.b16 %v3550
        %v3854 = vunpack.c.l.b16 %v3551
        %v3855 = vunpack.c.h.b16 %v3551
        %v3856 = vunpack.c.l.b16 %v3552
        %v3857 = vunpack.c.h.b16 %v3552
        %v3858 = vunpack.c.l.b16 %v3553
        %v3859 = vunpack.c.h.b16 %v3553
        %v3860 = vunpack.c.l.b16 %v3554
        %v3861 = vunpack.c.h.b16 %v3554
        %v3862 = vunpack.c.l.b16 %v3555
        %v3863 = vunpack.c.h.b16 %v3555
        %v3864 = vunpack.c.l.b16 %v3556
        %v3865 = vunpack.c.h.b16 %v3556
        %v3866 = vunpack.c.l.b16 %v3557
        %v3867 = vunpack.c.h.b16 %v3557
        %v3868 = vunpack.c.l.b16 %v3558
        %v3869 = vunpack.c.h.b16 %v3558
        %v3870 = vunpack.c.l.b16 %v3559
        %v3871 = vunpack.c.h.b16 %v3559
        %v3872 = vunpack.c.l.b16 %v3560
        %v3873 = vunpack.c.h.b16 %v3560
        %v3874 = vpack.c.b16 %v3854, %v3852
        %v3875 = vpack.c.b16 %v3855, %v3853
        %v3876 = vpack.c.b16 %v3858, %v3856
        %v3877 = vpack.c.b16 %v3859, %v3857
        %v3878 = vpack.c.b16 %v3862, %v3860
        %v3879 = vpack.c.b16 %v3863, %v3861
        %v3880 = vpack.c.b16 %v3866, %v3864
        %v3881 = vpack.c.b16 %v3867, %v3865
        %v3882 = vpack.c.b16 %v3870, %v3868
        %v3883 = vpack.c.b16 %v3871, %v3869
        %v3884 = vpack.c.b16 %v3872, %v3872
        %v3885 = vpack.c.b16 %v3873, %v3873
        %v3896 = vsel %vm3696, %v3541, 0
        %v3898 = vsel %vm3696, %v3542, 0
        %v3900 = vsel %vm3696, %v3543, 0
        %v3902 = vsel %vm3696, %v3544, 0
        %v3904 = vsel %vm3696, %v3545, 0
        %v3906 = vsel %vm3696, %v3546, 0
        %v3908 = vsel %vm3696, %v3547, 0
        %v3910 = vsel %vm3696, %v3548, 0
        %v3913 = vsel %vm3721, %v3884, 0
        %v3916 = vsel %vm3721, %v3885, 0
        %3918 = vmatprep.subr.bf16.mxu0 %v3875
        %3919 = vmatpush1.bf16.msra.mxu0 %v3874
        %3920 = vmatprep.subr.bf16.mxu0 %v3877
        %3921 = vmatpush1.bf16.msra.mxu0 %v3876
        %3922 = vmatprep.subr.bf16.mxu0 %v3879
        %3923 = vmatpush1.bf16.msra.mxu0 %v3878
        %3924 = vmatprep.subr.bf16.mxu0 %v3881
        %3925 = vmatpush1.bf16.msra.mxu0 %v3880
        %3926 = vmatprep.subr.bf16.mxu0 %v3883
        %3927 = vmatpush1.bf16.msra.mxu0 %v3882
        %3928 = vmatprep.subr.bf16.mxu0 %v3916
        %3929 = vmatpush1.bf16.msra.mxu0 %v3913
        %3930 = vmatprep.subr.bf16.mxu0 0
        %3931 = vmatpush1.bf16.msra.mxu0 0
        %3932 = vmatprep.subr.bf16.mxu0 0
        %3933 = vmatpush1.bf16.msra.mxu0 0
        %3934 = vmatprep.subr.bf16.mxu0 0
        %3935 = vmatpush1.bf16.msra.mxu0 0
        %3936 = vmatprep.subr.bf16.mxu0 0
        %3937 = vmatpush1.bf16.msra.mxu0 0
        %3938 = vmatprep.subr.bf16.mxu0 0
        %3939 = vmatpush1.bf16.msra.mxu0 0
        %3940 = vmatprep.subr.bf16.mxu0 0
        %3941 = vmatpush1.bf16.msra.mxu0 0
        %3942 = vmatprep.subr.bf16.mxu0 0
        %3943 = vmatpush1.bf16.msra.mxu0 0
        %3944 = vmatprep.subr.bf16.mxu0 0
        %3945 = vmatpush1.bf16.msra.mxu0 0
        %3946 = vmatprep.subr.bf16.mxu0 0
        %3947 = vmatpush1.bf16.msra.mxu0 0
        %3948 = vmatprep.subr.bf16.mxu0 0
        %3949 = vmatpush1.bf16.msra.mxu0 0
        %3950 = vmatprep.mubr.bf16.mxu0 0
        %3951 = vmatmul.mubr.bf16.gmra.mrb[0].mxu0 %v3896
        %v3952 = vpop.f32.mrb[0].mxu0
        %v3953 = vadd.f32 %v3763, %v3952
        %v3954 = vpop.f32.mrb[0].mxu0
        %v3955 = vadd.f32 %v3765, %v3954
        %v3956 = vpop.f32.mrb[0].mxu0
        %v3957 = vadd.f32 %v3767, %v3956
        %v3958 = vpop.f32.mrb[0].mxu0
        %v3959 = vadd.f32 %v3769, %v3958
        %3960 = vmatprep.mubr.bf16.mxu0 0
        %3961 = vmatmul.mubr.bf16.gmra.mrb[0].mxu0 %v3898
        %v3962 = vpop.f32.mrb[0].mxu0
        %v3963 = vadd.f32 %v3773, %v3962
        %v3964 = vpop.f32.mrb[0].mxu0
        %v3965 = vadd.f32 %v3775, %v3964
        %v3966 = vpop.f32.mrb[0].mxu0
        %v3967 = vadd.f32 %v3777, %v3966
        %v3968 = vpop.f32.mrb[0].mxu0
        %v3969 = vadd.f32 %v3779, %v3968
        %3970 = vmatprep.mubr.bf16.mxu0 0
        %3971 = vmatmul.mubr.bf16.gmra.mrb[0].mxu0 %v3900
        %v3972 = vpop.f32.mrb[0].mxu0
        %v3973 = vadd.f32 %v3783, %v3972
        %v3974 = vpop.f32.mrb[0].mxu0
        %v3975 = vadd.f32 %v3785, %v3974
        %v3976 = vpop.f32.mrb[0].mxu0
        %v3977 = vadd.f32 %v3787, %v3976
        %v3978 = vpop.f32.mrb[0].mxu0
        %v3979 = vadd.f32 %v3789, %v3978
        %3980 = vmatprep.mubr.bf16.mxu0 0
        %3981 = vmatmul.mubr.bf16.gmra.mrb[0].mxu0 %v3902
        %v3982 = vpop.f32.mrb[0].mxu0
        %v3983 = vadd.f32 %v3793, %v3982
        %v3984 = vpop.f32.mrb[0].mxu0
        %v3985 = vadd.f32 %v3795, %v3984
        %v3986 = vpop.f32.mrb[0].mxu0
        %v3987 = vadd.f32 %v3797, %v3986
        %v3988 = vpop.f32.mrb[0].mxu0
        %v3989 = vadd.f32 %v3799, %v3988
        %3990 = vmatprep.mubr.bf16.mxu0 0
        %3991 = vmatmul.mubr.bf16.gmra.mrb[0].mxu0 %v3904
        %v3992 = vpop.f32.mrb[0].mxu0
        %v3993 = vadd.f32 %v3803, %v3992
        %v3994 = vpop.f32.mrb[0].mxu0
        %v3995 = vadd.f32 %v3805, %v3994
        %v3996 = vpop.f32.mrb[0].mxu0
        %v3997 = vadd.f32 %v3807, %v3996
        %v3998 = vpop.f32.mrb[0].mxu0
        %v3999 = vadd.f32 %v3809, %v3998
        %4000 = vmatprep.mubr.bf16.mxu0 0
        %4001 = vmatmul.mubr.bf16.gmra.mrb[0].mxu0 %v3906
        %v4002 = vpop.f32.mrb[0].mxu0
        %v4003 = vadd.f32 %v3813, %v4002
        %v4004 = vpop.f32.mrb[0].mxu0
        %v4005 = vadd.f32 %v3815, %v4004
        %v4006 = vpop.f32.mrb[0].mxu0
        %v4007 = vadd.f32 %v3817, %v4006
        %v4008 = vpop.f32.mrb[0].mxu0
        %v4009 = vadd.f32 %v3819, %v4008
        %4010 = vmatprep.mubr.bf16.mxu0 0
        %4011 = vmatmul.mubr.bf16.gmra.mrb[0].mxu0 %v3908
        %v4012 = vpop.f32.mrb[0].mxu0
        %v4013 = vadd.f32 %v3823, %v4012
        %v4014 = vpop.f32.mrb[0].mxu0
        %v4015 = vadd.f32 %v3825, %v4014
        %v4016 = vpop.f32.mrb[0].mxu0
        %v4017 = vadd.f32 %v3827, %v4016
        %v4018 = vpop.f32.mrb[0].mxu0
        %v4019 = vadd.f32 %v3829, %v4018
        %4020 = vmatprep.mubr.bf16.mxu0 0
        %4021 = vmatmul.mubr.bf16.gmra.mrb[0].mxu0 %v3910
        %v4022 = vpop.f32.mrb[0].mxu0
        %v4023 = vadd.f32 %v3833, %v4022
        %v4024 = vpop.f32.mrb[0].mxu0
        %v4025 = vadd.f32 %v3835, %v4024
        %v4026 = vpop.f32.mrb[0].mxu0
        %v4027 = vadd.f32 %v3837, %v4026
        %v4028 = vpop.f32.mrb[0].mxu0
        %v4029 = vadd.f32 %v3839, %v4028
        %4030 = vdwg.mxu0
        %s4031 = scalar_lea.vmem %s5, 176
        %v4032 = vld [vmem:[%s4031] sm:$0xff]
        %v4033 = vld [vmem:[%s4031 + $0x8] sm:$0xff]
        %v4034 = vld [vmem:[%s4031 + $0x10] sm:$0xff]
        %v4035 = vld [vmem:[%s4031 + $0x18] sm:$0xff]
        %v4036 = vld [vmem:[%s4031 + $0x20] sm:$0xff]
        %v4037 = vld [vmem:[%s4031 + $0x28] sm:$0xff]
        %v4038 = vld [vmem:[%s4031 + $0x30] sm:$0xff]
        %v4039 = vld [vmem:[%s4031 + $0x38] sm:$0xff]
        %v4040 = vld [vmem:[%s4031 + $0x40] sm:$0xff]
        %v4041 = vld [vmem:[%s4031 + $0x48] sm:$0xff]
        %v4042 = vld [vmem:[%s4031 + $0x50] sm:$0x33]
        %v4052 = vrot.slane %v3541, 1
        %v4053 = vrot.slane %v3542, 1
        %v4054 = vsel %vm1302, %v4052, %v4053
        %v4055 = vrot.slane %v3543, 1
        %v4056 = vsel %vm1302, %v4053, %v4055
        %v4057 = vrot.slane %v3544, 1
        %v4058 = vsel %vm1302, %v4055, %v4057
        %v4059 = vrot.slane %v3545, 1
        %v4060 = vsel %vm1302, %v4057, %v4059
        %v4061 = vrot.slane %v3546, 1
        %v4062 = vsel %vm1302, %v4059, %v4061
        %v4063 = vrot.slane %v3547, 1
        %v4064 = vsel %vm1302, %v4061, %v4063
        %v4065 = vrot.slane %v3548, 1
        %v4066 = vsel %vm1302, %v4063, %v4065
        %v4067 = vrot.slane %v3549, 1
        %v4068 = vsel %vm1302, %v4065, %v4067
        %v4080 = vunpack.c.l.b16 %v4032
        %v4081 = vunpack.c.h.b16 %v4032
        %v4082 = vunpack.c.l.b16 %v4033
        %v4083 = vunpack.c.h.b16 %v4033
        %v4084 = vunpack.c.l.b16 %v4034
        %v4085 = vunpack.c.h.b16 %v4034
        %v4086 = vunpack.c.l.b16 %v4035
        %v4087 = vunpack.c.h.b16 %v4035
        %v4088 = vunpack.c.l.b16 %v4036
        %v4089 = vunpack.c.h.b16 %v4036
        %v4090 = vunpack.c.l.b16 %v4037
        %v4091 = vunpack.c.h.b16 %v4037
        %v4092 = vunpack.c.l.b16 %v4038
        %v4093 = vunpack.c.h.b16 %v4038
        %v4094 = vunpack.c.l.b16 %v4039
        %v4095 = vunpack.c.h.b16 %v4039
        %v4096 = vunpack.c.l.b16 %v4040
        %v4097 = vunpack.c.h.b16 %v4040
        %v4098 = vunpack.c.l.b16 %v4041
        %v4099 = vunpack.c.h.b16 %v4041
        %v4100 = vunpack.c.l.b16 %v4042
        %v4101 = vunpack.c.h.b16 %v4042
        %v4102 = vpack.c.b16 %v4082, %v4080
        %v4103 = vpack.c.b16 %v4083, %v4081
        %v4104 = vpack.c.b16 %v4086, %v4084
        %v4105 = vpack.c.b16 %v4087, %v4085
        %v4106 = vpack.c.b16 %v4090, %v4088
        %v4107 = vpack.c.b16 %v4091, %v4089
        %v4108 = vpack.c.b16 %v4094, %v4092
        %v4109 = vpack.c.b16 %v4095, %v4093
        %v4110 = vpack.c.b16 %v4098, %v4096
        %v4111 = vpack.c.b16 %v4099, %v4097
        %v4112 = vpack.c.b16 %v4100, %v4100
        %v4113 = vpack.c.b16 %v4101, %v4101
        %v4125 = vsel %vm3696, %v4054, 0
        %v4128 = vsel %vm3696, %v4056, 0
        %v4131 = vsel %vm3696, %v4058, 0
        %v4134 = vsel %vm3696, %v4060, 0
        %v4137 = vsel %vm3696, %v4062, 0
        %v4140 = vsel %vm3696, %v4064, 0
        %v4143 = vsel %vm3696, %v4066, 0
        %v4146 = vsel %vm3696, %v4068, 0
        %v4149 = vsel %vm3721, %v4112, 0
        %v4152 = vsel %vm3721, %v4113, 0
        %4154 = vmatprep.subr.bf16.mxu0 %v4103
        %4155 = vmatpush1.bf16.msra.mxu0 %v4102
        %4156 = vmatprep.subr.bf16.mxu0 %v4105
        %4157 = vmatpush1.bf16.msra.mxu0 %v4104
        %4158 = vmatprep.subr.bf16.mxu0 %v4107
        %4159 = vmatpush1.bf16.msra.mxu0 %v4106
        %4160 = vmatprep.subr.bf16.mxu0 %v4109
        %4161 = vmatpush1.bf16.msra.mxu0 %v4108
        %4162 = vmatprep.subr.bf16.mxu0 %v4111
        %4163 = vmatpush1.bf16.msra.mxu0 %v4110
        %4164 = vmatprep.subr.bf16.mxu0 %v4152
        %4165 = vmatpush1.bf16.msra.mxu0 %v4149
        %4166 = vmatprep.subr.bf16.mxu0 0
        %4167 = vmatpush1.bf16.msra.mxu0 0
        %4168 = vmatprep.subr.bf16.mxu0 0
        %4169 = vmatpush1.bf16.msra.mxu0 0
        %4170 = vmatprep.subr.bf16.mxu0 0
        %4171 = vmatpush1.bf16.msra.mxu0 0
        %4172 = vmatprep.subr.bf16.mxu0 0
        %4173 = vmatpush1.bf16.msra.mxu0 0
        %4174 = vmatprep.subr.bf16.mxu0 0
        %4175 = vmatpush1.bf16.msra.mxu0 0
        %4176 = vmatprep.subr.bf16.mxu0 0
        %4177 = vmatpush1.bf16.msra.mxu0 0
        %4178 = vmatprep.subr.bf16.mxu0 0
        %4179 = vmatpush1.bf16.msra.mxu0 0
        %4180 = vmatprep.subr.bf16.mxu0 0
        %4181 = vmatpush1.bf16.msra.mxu0 0
        %4182 = vmatprep.subr.bf16.mxu0 0
        %4183 = vmatpush1.bf16.msra.mxu0 0
        %4184 = vmatprep.subr.bf16.mxu0 0
        %4185 = vmatpush1.bf16.msra.mxu0 0
        %4186 = vmatprep.mubr.bf16.mxu0 0
        %4187 = vmatmul.mubr.bf16.gmra.mrb[0].mxu0 %v4125
        %v4188 = vpop.f32.mrb[0].mxu0
        %v4189 = vadd.f32 0.0, %v4188
        %v4190 = vpop.f32.mrb[0].mxu0
        %v4191 = vadd.f32 0.0, %v4190
        %v4192 = vpop.f32.mrb[0].mxu0
        %v4193 = vadd.f32 0.0, %v4192
        %v4194 = vpop.f32.mrb[0].mxu0
        %v4195 = vadd.f32 0.0, %v4194
        %4196 = vmatprep.mubr.bf16.mxu0 0
        %4197 = vmatmul.mubr.bf16.gmra.mrb[0].mxu0 %v4128
        %v4198 = vpop.f32.mrb[0].mxu0
        %v4199 = vadd.f32 0.0, %v4198
        %v4200 = vpop.f32.mrb[0].mxu0
        %v4201 = vadd.f32 0.0, %v4200
        %v4202 = vpop.f32.mrb[0].mxu0
        %v4203 = vadd.f32 0.0, %v4202
        %v4204 = vpop.f32.mrb[0].mxu0
        %v4205 = vadd.f32 0.0, %v4204
        %4206 = vmatprep.mubr.bf16.mxu0 0
        %4207 = vmatmul.mubr.bf16.gmra.mrb[0].mxu0 %v4131
        %v4208 = vpop.f32.mrb[0].mxu0
        %v4209 = vadd.f32 0.0, %v4208
        %v4210 = vpop.f32.mrb[0].mxu0
        %v4211 = vadd.f32 0.0, %v4210
        %v4212 = vpop.f32.mrb[0].mxu0
        %v4213 = vadd.f32 0.0, %v4212
        %v4214 = vpop.f32.mrb[0].mxu0
        %v4215 = vadd.f32 0.0, %v4214
        %4216 = vmatprep.mubr.bf16.mxu0 0
        %4217 = vmatmul.mubr.bf16.gmra.mrb[0].mxu0 %v4134
        %v4218 = vpop.f32.mrb[0].mxu0
        %v4219 = vadd.f32 0.0, %v4218
        %v4220 = vpop.f32.mrb[0].mxu0
        %v4221 = vadd.f32 0.0, %v4220
        %v4222 = vpop.f32.mrb[0].mxu0
        %v4223 = vadd.f32 0.0, %v4222
        %v4224 = vpop.f32.mrb[0].mxu0
        %v4225 = vadd.f32 0.0, %v4224
        %4226 = vmatprep.mubr.bf16.mxu0 0
        %4227 = vmatmul.mubr.bf16.gmra.mrb[0].mxu0 %v4137
        %v4228 = vpop.f32.mrb[0].mxu0
        %v4229 = vadd.f32 0.0, %v4228
        %v4230 = vpop.f32.mrb[0].mxu0
        %v4231 = vadd.f32 0.0, %v4230
        %v4232 = vpop.f32.mrb[0].mxu0
        %v4233 = vadd.f32 0.0, %v4232
        %v4234 = vpop.f32.mrb[0].mxu0
        %v4235 = vadd.f32 0.0, %v4234
        %4236 = vmatprep.mubr.bf16.mxu0 0
        %4237 = vmatmul.mubr.bf16.gmra.mrb[0].mxu0 %v4140
        %v4238 = vpop.f32.mrb[0].mxu0
        %v4239 = vadd.f32 0.0, %v4238
        %v4240 = vpop.f32.mrb[0].mxu0
        %v4241 = vadd.f32 0.0, %v4240
        %v4242 = vpop.f32.mrb[0].mxu0
        %v4243 = vadd.f32 0.0, %v4242
        %v4244 = vpop.f32.mrb[0].mxu0
        %v4245 = vadd.f32 0.0, %v4244
        %4246 = vmatprep.mubr.bf16.mxu0 0
        %4247 = vmatmul.mubr.bf16.gmra.mrb[0].mxu0 %v4143
        %v4248 = vpop.f32.mrb[0].mxu0
        %v4249 = vadd.f32 0.0, %v4248
        %v4250 = vpop.f32.mrb[0].mxu0
        %v4251 = vadd.f32 0.0, %v4250
        %v4252 = vpop.f32.mrb[0].mxu0
        %v4253 = vadd.f32 0.0, %v4252
        %v4254 = vpop.f32.mrb[0].mxu0
        %v4255 = vadd.f32 0.0, %v4254
        %4256 = vmatprep.mubr.bf16.mxu0 0
        %4257 = vmatmul.mubr.bf16.gmra.mrb[0].mxu0 %v4146
        %v4258 = vpop.f32.mrb[0].mxu0
        %v4259 = vadd.f32 0.0, %v4258
        %v4260 = vpop.f32.mrb[0].mxu0
        %v4261 = vadd.f32 0.0, %v4260
        %v4262 = vpop.f32.mrb[0].mxu0
        %v4263 = vadd.f32 0.0, %v4262
        %v4264 = vpop.f32.mrb[0].mxu0
        %v4265 = vadd.f32 0.0, %v4264
        %4266 = vdwg.mxu0
        %v4267 = vadd.f32 %v3953, %v4189
        %v4268 = vadd.f32 %v3955, %v4191
        %v4269 = vadd.f32 %v3957, %v4193
        %v4270 = vadd.f32 %v3959, %v4195
        %v4271 = vadd.f32 %v3963, %v4199
        %v4272 = vadd.f32 %v3965, %v4201
        %v4273 = vadd.f32 %v3967, %v4203
        %v4274 = vadd.f32 %v3969, %v4205
        %v4275 = vadd.f32 %v3973, %v4209
        %v4276 = vadd.f32 %v3975, %v4211
        %v4277 = vadd.f32 %v3977, %v4213
        %v4278 = vadd.f32 %v3979, %v4215
        %v4279 = vadd.f32 %v3983, %v4219
        %v4280 = vadd.f32 %v3985, %v4221
        %v4281 = vadd.f32 %v3987, %v4223
        %v4282 = vadd.f32 %v3989, %v4225
        %v4283 = vadd.f32 %v3993, %v4229
        %v4284 = vadd.f32 %v3995, %v4231
        %v4285 = vadd.f32 %v3997, %v4233
        %v4286 = vadd.f32 %v3999, %v4235
        %v4287 = vadd.f32 %v4003, %v4239
        %v4288 = vadd.f32 %v4005, %v4241
        %v4289 = vadd.f32 %v4007, %v4243
        %v4290 = vadd.f32 %v4009, %v4245
        %v4291 = vadd.f32 %v4013, %v4249
        %v4292 = vadd.f32 %v4015, %v4251
        %v4293 = vadd.f32 %v4017, %v4253
        %v4294 = vadd.f32 %v4019, %v4255
        %v4295 = vadd.f32 %v4023, %v4259
        %v4296 = vadd.f32 %v4025, %v4261
        %v4297 = vadd.f32 %v4027, %v4263
        %v4298 = vadd.f32 %v4029, %v4265
        %s4299 = scalar_lea.vmem %s5, 264
        %v4300 = vld [vmem:[%s4299] sm:$0xff]
        %v4301 = vld [vmem:[%s4299 + $0x8] sm:$0xff]
        %v4302 = vld [vmem:[%s4299 + $0x10] sm:$0xff]
        %v4303 = vld [vmem:[%s4299 + $0x18] sm:$0xff]
        %v4304 = vld [vmem:[%s4299 + $0x20] sm:$0xff]
        %v4305 = vld [vmem:[%s4299 + $0x28] sm:$0xff]
        %v4306 = vld [vmem:[%s4299 + $0x30] sm:$0xff]
        %v4307 = vld [vmem:[%s4299 + $0x38] sm:$0xff]
        %v4308 = vld [vmem:[%s4299 + $0x40] sm:$0xff]
        %v4309 = vld [vmem:[%s4299 + $0x48] sm:$0xff]
        %v4310 = vld [vmem:[%s4299 + $0x50] sm:$0x33]
        %v4311 = vrot.slane %v3574, 1
        %v4312 = vrot.slane %v3576, 2
        %v4313 = vor.u32 %v4311, %v4312
        %v4314 = vrot.slane %v3585, 1
        %v4315 = vrot.slane %v3581, 2
        %v4316 = vor.u32 %v4314, %v4315
        %v4317 = vsel %vm1670, %v4313, %v4316
        %v4318 = vrot.slane %v3593, 1
        %v4319 = vrot.slane %v3589, 2
        %v4320 = vor.u32 %v4318, %v4319
        %v4321 = vsel %vm1670, %v4316, %v4320
        %v4322 = vrot.slane %v3601, 1
        %v4323 = vrot.slane %v3597, 2
        %v4324 = vor.u32 %v4322, %v4323
        %v4325 = vsel %vm1670, %v4320, %v4324
        %v4326 = vrot.slane %v3609, 1
        %v4327 = vrot.slane %v3605, 2
        %v4328 = vor.u32 %v4326, %v4327
        %v4329 = vsel %vm1670, %v4324, %v4328
        %v4330 = vrot.slane %v3617, 1
        %v4331 = vrot.slane %v3613, 2
        %v4332 = vor.u32 %v4330, %v4331
        %v4333 = vsel %vm1670, %v4328, %v4332
        %v4334 = vrot.slane %v3625, 1
        %v4335 = vrot.slane %v3621, 2
        %v4336 = vor.u32 %v4334, %v4335
        %v4337 = vsel %vm1670, %v4332, %v4336
        %v4338 = vrot.slane %v3633, 1
        %v4339 = vrot.slane %v3629, 2
        %v4340 = vor.u32 %v4338, %v4339
        %v4341 = vsel %vm1670, %v4336, %v4340
        %v4342 = vshrl.u32 %v3549, 16
        %v4344 = vrot.slane %v4342, 1
        %v4345 = vrot.slane %v3637, 2
        %v4346 = vor.u32 %v4344, %v4345
        %v4347 = vsel %vm1670, %v4340, %v4346
        %v4359 = vunpack.c.l.b16 %v4300
        %v4360 = vunpack.c.h.b16 %v4300
        %v4361 = vunpack.c.l.b16 %v4301
        %v4362 = vunpack.c.h.b16 %v4301
        %v4363 = vunpack.c.l.b16 %v4302
        %v4364 = vunpack.c.h.b16 %v4302
        %v4365 = vunpack.c.l.b16 %v4303
        %v4366 = vunpack.c.h.b16 %v4303
        %v4367 = vunpack.c.l.b16 %v4304
        %v4368 = vunpack.c.h.b16 %v4304
        %v4369 = vunpack.c.l.b16 %v4305
        %v4370 = vunpack.c.h.b16 %v4305
        %v4371 = vunpack.c.l.b16 %v4306
        %v4372 = vunpack.c.h.b16 %v4306
        %v4373 = vunpack.c.l.b16 %v4307
        %v4374 = vunpack.c.h.b16 %v4307
        %v4375 = vunpack.c.l.b16 %v4308
        %v4376 = vunpack.c.h.b16 %v4308
        %v4377 = vunpack.c.l.b16 %v4309
        %v4378 = vunpack.c.h.b16 %v4309
        %v4379 = vunpack.c.l.b16 %v4310
        %v4380 = vunpack.c.h.b16 %v4310
        %v4381 = vpack.c.b16 %v4361, %v4359
        %v4382 = vpack.c.b16 %v4362, %v4360
        %v4383 = vpack.c.b16 %v4365, %v4363
        %v4384 = vpack.c.b16 %v4366, %v4364
        %v4385 = vpack.c.b16 %v4369, %v4367
        %v4386 = vpack.c.b16 %v4370, %v4368
        %v4387 = vpack.c.b16 %v4373, %v4371
        %v4388 = vpack.c.b16 %v4374, %v4372
        %v4389 = vpack.c.b16 %v4377, %v4375
        %v4390 = vpack.c.b16 %v4378, %v4376
        %v4391 = vpack.c.b16 %v4379, %v4379
        %v4392 = vpack.c.b16 %v4380, %v4380
        %v4404 = vsel %vm3696, %v4317, 0
        %v4407 = vsel %vm3696, %v4321, 0
        %v4410 = vsel %vm3696, %v4325, 0
        %v4413 = vsel %vm3696, %v4329, 0
        %v4416 = vsel %vm3696, %v4333, 0
        %v4419 = vsel %vm3696, %v4337, 0
        %v4422 = vsel %vm3696, %v4341, 0
        %v4425 = vsel %vm3696, %v4347, 0
        %v4428 = vsel %vm3721, %v4391, 0
        %v4431 = vsel %vm3721, %v4392, 0
        %4433 = vmatprep.subr.bf16.mxu0 %v4382
        %4434 = vmatpush1.bf16.msra.mxu0 %v4381
        %4435 = vmatprep.subr.bf16.mxu0 %v4384
        %4436 = vmatpush1.bf16.msra.mxu0 %v4383
        %4437 = vmatprep.subr.bf16.mxu0 %v4386
        %4438 = vmatpush1.bf16.msra.mxu0 %v4385
        %4439 = vmatprep.subr.bf16.mxu0 %v4388
        %4440 = vmatpush1.bf16.msra.mxu0 %v4387
        %4441 = vmatprep.subr.bf16.mxu0 %v4390
        %4442 = vmatpush1.bf16.msra.mxu0 %v4389
        %4443 = vmatprep.subr.bf16.mxu0 %v4431
        %4444 = vmatpush1.bf16.msra.mxu0 %v4428
        %4445 = vmatprep.subr.bf16.mxu0 0
        %4446 = vmatpush1.bf16.msra.mxu0 0
        %4447 = vmatprep.subr.bf16.mxu0 0
        %4448 = vmatpush1.bf16.msra.mxu0 0
        %4449 = vmatprep.subr.bf16.mxu0 0
        %4450 = vmatpush1.bf16.msra.mxu0 0
        %4451 = vmatprep.subr.bf16.mxu0 0
        %4452 = vmatpush1.bf16.msra.mxu0 0
        %4453 = vmatprep.subr.bf16.mxu0 0
        %4454 = vmatpush1.bf16.msra.mxu0 0
        %4455 = vmatprep.subr.bf16.mxu0 0
        %4456 = vmatpush1.bf16.msra.mxu0 0
        %4457 = vmatprep.subr.bf16.mxu0 0
        %4458 = vmatpush1.bf16.msra.mxu0 0
        %4459 = vmatprep.subr.bf16.mxu0 0
        %4460 = vmatpush1.bf16.msra.mxu0 0
        %4461 = vmatprep.subr.bf16.mxu0 0
        %4462 = vmatpush1.bf16.msra.mxu0 0
        %4463 = vmatprep.subr.bf16.mxu0 0
        %4464 = vmatpush1.bf16.msra.mxu0 0
        %4465 = vmatprep.mubr.bf16.mxu0 0
        %4466 = vmatmul.mubr.bf16.gmra.mrb[0].mxu0 %v4404
        %v4467 = vpop.f32.mrb[0].mxu0
        %v4468 = vadd.f32 0.0, %v4467
        %v4469 = vpop.f32.mrb[0].mxu0
        %v4470 = vadd.f32 0.0, %v4469
        %v4471 = vpop.f32.mrb[0].mxu0
        %v4472 = vadd.f32 0.0, %v4471
        %v4473 = vpop.f32.mrb[0].mxu0
        %v4474 = vadd.f32 0.0, %v4473
        %4475 = vmatprep.mubr.bf16.mxu0 0
        %4476 = vmatmul.mubr.bf16.gmra.mrb[0].mxu0 %v4407
        %v4477 = vpop.f32.mrb[0].mxu0
        %v4478 = vadd.f32 0.0, %v4477
        %v4479 = vpop.f32.mrb[0].mxu0
        %v4480 = vadd.f32 0.0, %v4479
        %v4481 = vpop.f32.mrb[0].mxu0
        %v4482 = vadd.f32 0.0, %v4481
        %v4483 = vpop.f32.mrb[0].mxu0
        %v4484 = vadd.f32 0.0, %v4483
        %4485 = vmatprep.mubr.bf16.mxu0 0
        %4486 = vmatmul.mubr.bf16.gmra.mrb[0].mxu0 %v4410
        %v4487 = vpop.f32.mrb[0].mxu0
        %v4488 = vadd.f32 0.0, %v4487
        %v4489 = vpop.f32.mrb[0].mxu0
        %v4490 = vadd.f32 0.0, %v4489
        %v4491 = vpop.f32.mrb[0].mxu0
        %v4492 = vadd.f32 0.0, %v4491
        %v4493 = vpop.f32.mrb[0].mxu0
        %v4494 = vadd.f32 0.0, %v4493
        %4495 = vmatprep.mubr.bf16.mxu0 0
        %4496 = vmatmul.mubr.bf16.gmra.mrb[0].mxu0 %v4413
        %v4497 = vpop.f32.mrb[0].mxu0
        %v4498 = vadd.f32 0.0, %v4497
        %v4499 = vpop.f32.mrb[0].mxu0
        %v4500 = vadd.f32 0.0, %v4499
        %v4501 = vpop.f32.mrb[0].mxu0
        %v4502 = vadd.f32 0.0, %v4501
        %v4503 = vpop.f32.mrb[0].mxu0
        %v4504 = vadd.f32 0.0, %v4503
        %4505 = vmatprep.mubr.bf16.mxu0 0
        %4506 = vmatmul.mubr.bf16.gmra.mrb[0].mxu0 %v4416
        %v4507 = vpop.f32.mrb[0].mxu0
        %v4508 = vadd.f32 0.0, %v4507
        %v4509 = vpop.f32.mrb[0].mxu0
        %v4510 = vadd.f32 0.0, %v4509
        %v4511 = vpop.f32.mrb[0].mxu0
        %v4512 = vadd.f32 0.0, %v4511
        %v4513 = vpop.f32.mrb[0].mxu0
        %v4514 = vadd.f32 0.0, %v4513
        %4515 = vmatprep.mubr.bf16.mxu0 0
        %4516 = vmatmul.mubr.bf16.gmra.mrb[0].mxu0 %v4419
        %v4517 = vpop.f32.mrb[0].mxu0
        %v4518 = vadd.f32 0.0, %v4517
        %v4519 = vpop.f32.mrb[0].mxu0
        %v4520 = vadd.f32 0.0, %v4519
        %v4521 = vpop.f32.mrb[0].mxu0
        %v4522 = vadd.f32 0.0, %v4521
        %v4523 = vpop.f32.mrb[0].mxu0
        %v4524 = vadd.f32 0.0, %v4523
        %4525 = vmatprep.mubr.bf16.mxu0 0
        %4526 = vmatmul.mubr.bf16.gmra.mrb[0].mxu0 %v4422
        %v4527 = vpop.f32.mrb[0].mxu0
        %v4528 = vadd.f32 0.0, %v4527
        %v4529 = vpop.f32.mrb[0].mxu0
        %v4530 = vadd.f32 0.0, %v4529
        %v4531 = vpop.f32.mrb[0].mxu0
        %v4532 = vadd.f32 0.0, %v4531
        %v4533 = vpop.f32.mrb[0].mxu0
        %v4534 = vadd.f32 0.0, %v4533
        %4535 = vmatprep.mubr.bf16.mxu0 0
        %4536 = vmatmul.mubr.bf16.gmra.mrb[0].mxu0 %v4425
        %v4537 = vpop.f32.mrb[0].mxu0
        %v4538 = vadd.f32 0.0, %v4537
        %v4539 = vpop.f32.mrb[0].mxu0
        %v4540 = vadd.f32 0.0, %v4539
        %v4541 = vpop.f32.mrb[0].mxu0
        %v4542 = vadd.f32 0.0, %v4541
        %v4543 = vpop.f32.mrb[0].mxu0
        %v4544 = vadd.f32 0.0, %v4543
        %4545 = vdwg.mxu0
        %v4546 = vadd.f32 %v4267, %v4468
        %v4547 = vadd.f32 %v4268, %v4470
        %v4548 = vadd.f32 %v4269, %v4472
        %v4549 = vadd.f32 %v4270, %v4474
        %v4550 = vadd.f32 %v4271, %v4478
        %v4551 = vadd.f32 %v4272, %v4480
        %v4552 = vadd.f32 %v4273, %v4482
        %v4553 = vadd.f32 %v4274, %v4484
        %v4554 = vadd.f32 %v4275, %v4488
        %v4555 = vadd.f32 %v4276, %v4490
        %v4556 = vadd.f32 %v4277, %v4492
        %v4557 = vadd.f32 %v4278, %v4494
        %v4558 = vadd.f32 %v4279, %v4498
        %v4559 = vadd.f32 %v4280, %v4500
        %v4560 = vadd.f32 %v4281, %v4502
        %v4561 = vadd.f32 %v4282, %v4504
        %v4562 = vadd.f32 %v4283, %v4508
        %v4563 = vadd.f32 %v4284, %v4510
        %v4564 = vadd.f32 %v4285, %v4512
        %v4565 = vadd.f32 %v4286, %v4514
        %v4566 = vadd.f32 %v4287, %v4518
        %v4567 = vadd.f32 %v4288, %v4520
        %v4568 = vadd.f32 %v4289, %v4522
        %v4569 = vadd.f32 %v4290, %v4524
        %v4570 = vadd.f32 %v4291, %v4528
        %v4571 = vadd.f32 %v4292, %v4530
        %v4572 = vadd.f32 %v4293, %v4532
        %v4573 = vadd.f32 %v4294, %v4534
        %v4574 = vadd.f32 %v4295, %v4538
        %v4575 = vadd.f32 %v4296, %v4540
        %v4576 = vadd.f32 %v4297, %v4542
        %v4577 = vadd.f32 %v4298, %v4544
        %s4578 = scalar_lea.vmem %s5, 352
        %v4579 = vld [vmem:[%s4578] sm:$0xff]
        %v4580 = vld [vmem:[%s4578 + $0x8] sm:$0xff]
        %v4581 = vld [vmem:[%s4578 + $0x10] sm:$0xff]
        %v4582 = vld [vmem:[%s4578 + $0x18] sm:$0xff]
        %v4583 = vld [vmem:[%s4578 + $0x20] sm:$0xff]
        %v4584 = vld [vmem:[%s4578 + $0x28] sm:$0xff]
        %v4585 = vld [vmem:[%s4578 + $0x30] sm:$0xff]
        %v4586 = vld [vmem:[%s4578 + $0x38] sm:$0xff]
        %v4587 = vld [vmem:[%s4578 + $0x40] sm:$0xff]
        %v4588 = vld [vmem:[%s4578 + $0x48] sm:$0xff]
        %v4589 = vld [vmem:[%s4578 + $0x50] sm:$0x33]
        %v4590 = vrot.slane %v3541, 2
        %v4591 = vrot.slane %v3542, 2
        %v4592 = vsel %vm2074, %v4590, %v4591
        %v4593 = vrot.slane %v3543, 2
        %v4594 = vsel %vm2074, %v4591, %v4593
        %v4595 = vrot.slane %v3544, 2
        %v4596 = vsel %vm2074, %v4593, %v4595
        %v4597 = vrot.slane %v3545, 2
        %v4598 = vsel %vm2074, %v4595, %v4597
        %v4599 = vrot.slane %v3546, 2
        %v4600 = vsel %vm2074, %v4597, %v4599
        %v4601 = vrot.slane %v3547, 2
        %v4602 = vsel %vm2074, %v4599, %v4601
        %v4603 = vrot.slane %v3548, 2
        %v4604 = vsel %vm2074, %v4601, %v4603
        %v4605 = vrot.slane %v3549, 2
        %v4606 = vsel %vm2074, %v4603, %v4605
        %v4618 = vunpack.c.l.b16 %v4579
        %v4619 = vunpack.c.h.b16 %v4579
        %v4620 = vunpack.c.l.b16 %v4580
        %v4621 = vunpack.c.h.b16 %v4580
        %v4622 = vunpack.c.l.b16 %v4581
        %v4623 = vunpack.c.h.b16 %v4581
        %v4624 = vunpack.c.l.b16 %v4582
        %v4625 = vunpack.c.h.b16 %v4582
        %v4626 = vunpack.c.l.b16 %v4583
        %v4627 = vunpack.c.h.b16 %v4583
        %v4628 = vunpack.c.l.b16 %v4584
        %v4629 = vunpack.c.h.b16 %v4584
        %v4630 = vunpack.c.l.b16 %v4585
        %v4631 = vunpack.c.h.b16 %v4585
        %v4632 = vunpack.c.l.b16 %v4586
        %v4633 = vunpack.c.h.b16 %v4586
        %v4634 = vunpack.c.l.b16 %v4587
        %v4635 = vunpack.c.h.b16 %v4587
        %v4636 = vunpack.c.l.b16 %v4588
        %v4637 = vunpack.c.h.b16 %v4588
        %v4638 = vunpack.c.l.b16 %v4589
        %v4639 = vunpack.c.h.b16 %v4589
        %v4640 = vpack.c.b16 %v4620, %v4618
        %v4641 = vpack.c.b16 %v4621, %v4619
        %v4642 = vpack.c.b16 %v4624, %v4622
        %v4643 = vpack.c.b16 %v4625, %v4623
        %v4644 = vpack.c.b16 %v4628, %v4626
        %v4645 = vpack.c.b16 %v4629, %v4627
        %v4646 = vpack.c.b16 %v4632, %v4630
        %v4647 = vpack.c.b16 %v4633, %v4631
        %v4648 = vpack.c.b16 %v4636, %v4634
        %v4649 = vpack.c.b16 %v4637, %v4635
        %v4650 = vpack.c.b16 %v4638, %v4638
        %v4651 = vpack.c.b16 %v4639, %v4639
        %v4663 = vsel %vm3696, %v4592, 0
        %v4666 = vsel %vm3696, %v4594, 0
        %v4669 = vsel %vm3696, %v4596, 0
        %v4672 = vsel %vm3696, %v4598, 0
        %v4675 = vsel %vm3696, %v4600, 0
        %v4678 = vsel %vm3696, %v4602, 0
        %v4681 = vsel %vm3696, %v4604, 0
        %v4684 = vsel %vm3696, %v4606, 0
        %v4687 = vsel %vm3721, %v4650, 0
        %v4690 = vsel %vm3721, %v4651, 0
        %4692 = vmatprep.subr.bf16.mxu0 %v4641
        %4693 = vmatpush1.bf16.msra.mxu0 %v4640
        %4694 = vmatprep.subr.bf16.mxu0 %v4643
        %4695 = vmatpush1.bf16.msra.mxu0 %v4642
        %4696 = vmatprep.subr.bf16.mxu0 %v4645
        %4697 = vmatpush1.bf16.msra.mxu0 %v4644
        %4698 = vmatprep.subr.bf16.mxu0 %v4647
        %4699 = vmatpush1.bf16.msra.mxu0 %v4646
        %4700 = vmatprep.subr.bf16.mxu0 %v4649
        %4701 = vmatpush1.bf16.msra.mxu0 %v4648
        %4702 = vmatprep.subr.bf16.mxu0 %v4690
        %4703 = vmatpush1.bf16.msra.mxu0 %v4687
        %4704 = vmatprep.subr.bf16.mxu0 0
        %4705 = vmatpush1.bf16.msra.mxu0 0
        %4706 = vmatprep.subr.bf16.mxu0 0
        %4707 = vmatpush1.bf16.msra.mxu0 0
        %4708 = vmatprep.subr.bf16.mxu0 0
        %4709 = vmatpush1.bf16.msra.mxu0 0
        %4710 = vmatprep.subr.bf16.mxu0 0
        %4711 = vmatpush1.bf16.msra.mxu0 0
        %4712 = vmatprep.subr.bf16.mxu0 0
        %4713 = vmatpush1.bf16.msra.mxu0 0
        %4714 = vmatprep.subr.bf16.mxu0 0
        %4715 = vmatpush1.bf16.msra.mxu0 0
        %4716 = vmatprep.subr.bf16.mxu0 0
        %4717 = vmatpush1.bf16.msra.mxu0 0
        %4718 = vmatprep.subr.bf16.mxu0 0
        %4719 = vmatpush1.bf16.msra.mxu0 0
        %4720 = vmatprep.subr.bf16.mxu0 0
        %4721 = vmatpush1.bf16.msra.mxu0 0
        %4722 = vmatprep.subr.bf16.mxu0 0
        %4723 = vmatpush1.bf16.msra.mxu0 0
        %4724 = vmatprep.mubr.bf16.mxu0 0
        %4725 = vmatmul.mubr.bf16.gmra.mrb[0].mxu0 %v4663
        %v4726 = vpop.f32.mrb[0].mxu0
        %v4727 = vadd.f32 0.0, %v4726
        %v4728 = vpop.f32.mrb[0].mxu0
        %v4729 = vadd.f32 0.0, %v4728
        %v4730 = vpop.f32.mrb[0].mxu0
        %v4731 = vadd.f32 0.0, %v4730
        %v4732 = vpop.f32.mrb[0].mxu0
        %v4733 = vadd.f32 0.0, %v4732
        %4734 = vmatprep.mubr.bf16.mxu0 0
        %4735 = vmatmul.mubr.bf16.gmra.mrb[0].mxu0 %v4666
        %v4736 = vpop.f32.mrb[0].mxu0
        %v4737 = vadd.f32 0.0, %v4736
        %v4738 = vpop.f32.mrb[0].mxu0
        %v4739 = vadd.f32 0.0, %v4738
        %v4740 = vpop.f32.mrb[0].mxu0
        %v4741 = vadd.f32 0.0, %v4740
        %v4742 = vpop.f32.mrb[0].mxu0
        %v4743 = vadd.f32 0.0, %v4742
        %4744 = vmatprep.mubr.bf16.mxu0 0
        %4745 = vmatmul.mubr.bf16.gmra.mrb[0].mxu0 %v4669
        %v4746 = vpop.f32.mrb[0].mxu0
        %v4747 = vadd.f32 0.0, %v4746
        %v4748 = vpop.f32.mrb[0].mxu0
        %v4749 = vadd.f32 0.0, %v4748
        %v4750 = vpop.f32.mrb[0].mxu0
        %v4751 = vadd.f32 0.0, %v4750
        %v4752 = vpop.f32.mrb[0].mxu0
        %v4753 = vadd.f32 0.0, %v4752
        %4754 = vmatprep.mubr.bf16.mxu0 0
        %4755 = vmatmul.mubr.bf16.gmra.mrb[0].mxu0 %v4672
        %v4756 = vpop.f32.mrb[0].mxu0
        %v4757 = vadd.f32 0.0, %v4756
        %v4758 = vpop.f32.mrb[0].mxu0
        %v4759 = vadd.f32 0.0, %v4758
        %v4760 = vpop.f32.mrb[0].mxu0
        %v4761 = vadd.f32 0.0, %v4760
        %v4762 = vpop.f32.mrb[0].mxu0
        %v4763 = vadd.f32 0.0, %v4762
        %4764 = vmatprep.mubr.bf16.mxu0 0
        %4765 = vmatmul.mubr.bf16.gmra.mrb[0].mxu0 %v4675
        %v4766 = vpop.f32.mrb[0].mxu0
        %v4767 = vadd.f32 0.0, %v4766
        %v4768 = vpop.f32.mrb[0].mxu0
        %v4769 = vadd.f32 0.0, %v4768
        %v4770 = vpop.f32.mrb[0].mxu0
        %v4771 = vadd.f32 0.0, %v4770
        %v4772 = vpop.f32.mrb[0].mxu0
        %v4773 = vadd.f32 0.0, %v4772
        %4774 = vmatprep.mubr.bf16.mxu0 0
        %4775 = vmatmul.mubr.bf16.gmra.mrb[0].mxu0 %v4678
        %v4776 = vpop.f32.mrb[0].mxu0
        %v4777 = vadd.f32 0.0, %v4776
        %v4778 = vpop.f32.mrb[0].mxu0
        %v4779 = vadd.f32 0.0, %v4778
        %v4780 = vpop.f32.mrb[0].mxu0
        %v4781 = vadd.f32 0.0, %v4780
        %v4782 = vpop.f32.mrb[0].mxu0
        %v4783 = vadd.f32 0.0, %v4782
        %4784 = vmatprep.mubr.bf16.mxu0 0
        %4785 = vmatmul.mubr.bf16.gmra.mrb[0].mxu0 %v4681
        %v4786 = vpop.f32.mrb[0].mxu0
        %v4787 = vadd.f32 0.0, %v4786
        %v4788 = vpop.f32.mrb[0].mxu0
        %v4789 = vadd.f32 0.0, %v4788
        %v4790 = vpop.f32.mrb[0].mxu0
        %v4791 = vadd.f32 0.0, %v4790
        %v4792 = vpop.f32.mrb[0].mxu0
        %v4793 = vadd.f32 0.0, %v4792
        %4794 = vmatprep.mubr.bf16.mxu0 0
        %4795 = vmatmul.mubr.bf16.gmra.mrb[0].mxu0 %v4684
        %v4796 = vpop.f32.mrb[0].mxu0
        %v4797 = vadd.f32 0.0, %v4796
        %v4798 = vpop.f32.mrb[0].mxu0
        %v4799 = vadd.f32 0.0, %v4798
        %v4800 = vpop.f32.mrb[0].mxu0
        %v4801 = vadd.f32 0.0, %v4800
        %v4802 = vpop.f32.mrb[0].mxu0
        %v4803 = vadd.f32 0.0, %v4802
        %4804 = vdwg.mxu0
        %v4805 = vadd.f32 %v4546, %v4727
        %v4806 = vadd.f32 %v4547, %v4729
        %v4807 = vadd.f32 %v4548, %v4731
        %v4808 = vadd.f32 %v4549, %v4733
        %v4809 = vadd.f32 %v4550, %v4737
        %v4810 = vadd.f32 %v4551, %v4739
        %v4811 = vadd.f32 %v4552, %v4741
        %v4812 = vadd.f32 %v4553, %v4743
        %v4813 = vadd.f32 %v4554, %v4747
        %v4814 = vadd.f32 %v4555, %v4749
        %v4815 = vadd.f32 %v4556, %v4751
        %v4816 = vadd.f32 %v4557, %v4753
        %v4817 = vadd.f32 %v4558, %v4757
        %v4818 = vadd.f32 %v4559, %v4759
        %v4819 = vadd.f32 %v4560, %v4761
        %v4820 = vadd.f32 %v4561, %v4763
        %v4821 = vadd.f32 %v4562, %v4767
        %v4822 = vadd.f32 %v4563, %v4769
        %v4823 = vadd.f32 %v4564, %v4771
        %v4824 = vadd.f32 %v4565, %v4773
        %v4825 = vadd.f32 %v4566, %v4777
        %v4826 = vadd.f32 %v4567, %v4779
        %v4827 = vadd.f32 %v4568, %v4781
        %v4828 = vadd.f32 %v4569, %v4783
        %v4829 = vadd.f32 %v4570, %v4787
        %v4830 = vadd.f32 %v4571, %v4789
        %v4831 = vadd.f32 %v4572, %v4791
        %v4832 = vadd.f32 %v4573, %v4793
        %v4833 = vadd.f32 %v4574, %v4797
        %v4834 = vadd.f32 %v4575, %v4799
        %v4835 = vadd.f32 %v4576, %v4801
        %v4836 = vadd.f32 %v4577, %v4803
        %v4837 = vld [vmem:[%s6] sm:$0x3]
        %v4839 = vlaneseq
        %v4840 = vshrl.u32 %v4839, 7
        %v4841 = vsub.s32 0, %v4840
        %v4842 = vrot.slane %v4837, %v4841
        %v4843 = vlaneseq
        %v4844 = vshrl.u32 %v4843, 7
        %v4845 = vsub.s32 1, %v4844
        %v4846 = vrot.slane %v4837, %v4845
        %v4849 = vadd.f32 %v4805, %v4842
        %v4850 = vadd.f32 %v4806, %v4846
        %v4851 = vadd.f32 %v4807, %v4842
        %v4852 = vadd.f32 %v4808, %v4846
        %v4853 = vadd.f32 %v4809, %v4842
        %v4854 = vadd.f32 %v4810, %v4846
        %v4855 = vadd.f32 %v4811, %v4842
        %v4856 = vadd.f32 %v4812, %v4846
        %v4857 = vadd.f32 %v4813, %v4842
        %v4858 = vadd.f32 %v4814, %v4846
        %v4859 = vadd.f32 %v4815, %v4842
        %v4860 = vadd.f32 %v4816, %v4846
        %v4861 = vadd.f32 %v4817, %v4842
        %v4862 = vadd.f32 %v4818, %v4846
        %v4863 = vadd.f32 %v4819, %v4842
        %v4864 = vadd.f32 %v4820, %v4846
        %v4865 = vadd.f32 %v4821, %v4842
        %v4866 = vadd.f32 %v4822, %v4846
        %v4867 = vadd.f32 %v4823, %v4842
        %v4868 = vadd.f32 %v4824, %v4846
        %v4869 = vadd.f32 %v4825, %v4842
        %v4870 = vadd.f32 %v4826, %v4846
        %v4871 = vadd.f32 %v4827, %v4842
        %v4872 = vadd.f32 %v4828, %v4846
        %v4873 = vadd.f32 %v4829, %v4842
        %v4874 = vadd.f32 %v4830, %v4846
        %v4875 = vadd.f32 %v4831, %v4842
        %v4876 = vadd.f32 %v4832, %v4846
        %v4877 = vadd.f32 %v4833, %v4842
        %v4878 = vadd.f32 %v4834, %v4846
        %v4879 = vadd.f32 %v4835, %v4842
        %v4880 = vadd.f32 %v4836, %v4846
        %v4881 = vmax.f32 %v4849, 0.0
        %v4882 = vmax.f32 %v4850, 0.0
        %v4883 = vmax.f32 %v4851, 0.0
        %v4884 = vmax.f32 %v4852, 0.0
        %v4885 = vmax.f32 %v4853, 0.0
        %v4886 = vmax.f32 %v4854, 0.0
        %v4887 = vmax.f32 %v4855, 0.0
        %v4888 = vmax.f32 %v4856, 0.0
        %v4889 = vmax.f32 %v4857, 0.0
        %v4890 = vmax.f32 %v4858, 0.0
        %v4891 = vmax.f32 %v4859, 0.0
        %v4892 = vmax.f32 %v4860, 0.0
        %v4893 = vmax.f32 %v4861, 0.0
        %v4894 = vmax.f32 %v4862, 0.0
        %v4895 = vmax.f32 %v4863, 0.0
        %v4896 = vmax.f32 %v4864, 0.0
        %v4897 = vmax.f32 %v4865, 0.0
        %v4898 = vmax.f32 %v4866, 0.0
        %v4899 = vmax.f32 %v4867, 0.0
        %v4900 = vmax.f32 %v4868, 0.0
        %v4901 = vmax.f32 %v4869, 0.0
        %v4902 = vmax.f32 %v4870, 0.0
        %v4903 = vmax.f32 %v4871, 0.0
        %v4904 = vmax.f32 %v4872, 0.0
        %v4905 = vmax.f32 %v4873, 0.0
        %v4906 = vmax.f32 %v4874, 0.0
        %v4907 = vmax.f32 %v4875, 0.0
        %v4908 = vmax.f32 %v4876, 0.0
        %v4909 = vmax.f32 %v4877, 0.0
        %v4910 = vmax.f32 %v4878, 0.0
        %v4911 = vmax.f32 %v4879, 0.0
        %v4912 = vmax.f32 %v4880, 0.0
        %v4913 = vpack.c.bf16 %v4883, %v4881
        %v4914 = vpack.c.bf16 %v4884, %v4882
        %v4915 = vpack.c.bf16 %v4887, %v4885
        %v4916 = vpack.c.bf16 %v4888, %v4886
        %v4917 = vpack.c.bf16 %v4891, %v4889
        %v4918 = vpack.c.bf16 %v4892, %v4890
        %v4919 = vpack.c.bf16 %v4895, %v4893
        %v4920 = vpack.c.bf16 %v4896, %v4894
        %v4921 = vpack.c.bf16 %v4899, %v4897
        %v4922 = vpack.c.bf16 %v4900, %v4898
        %v4923 = vpack.c.bf16 %v4903, %v4901
        %v4924 = vpack.c.bf16 %v4904, %v4902
        %v4925 = vpack.c.bf16 %v4907, %v4905
        %v4926 = vpack.c.bf16 %v4908, %v4906
        %v4927 = vpack.c.bf16 %v4911, %v4909
        %v4928 = vpack.c.bf16 %v4912, %v4910
        %v4929 = vld [vmem:[%s7] sm:$0xf]
        %v4930 = vld [vmem:[%s7 + $0x4] sm:$0xf]
        %v4931 = vld [vmem:[%s7 + $0x8] sm:$0xf]
        %v4932 = vld [vmem:[%s7 + $0xc] sm:$0xf]
        %v4933 = vld [vmem:[%s7 + $0x10] sm:$0xf]
        %v4934 = vld [vmem:[%s7 + $0x14] sm:$0xf]
        %v4935 = vld [vmem:[%s7 + $0x18] sm:$0xf]
        %v4936 = vld [vmem:[%s7 + $0x1c] sm:$0xf]
        %v4945 = vunpack.c.l.b16 %v4929
        %v4946 = vunpack.c.l.b16 %v4930
        %v4947 = vunpack.c.l.b16 %v4931
        %v4948 = vunpack.c.l.b16 %v4932
        %v4949 = vunpack.c.l.b16 %v4933
        %v4950 = vunpack.c.l.b16 %v4934
        %v4951 = vunpack.c.l.b16 %v4935
        %v4952 = vunpack.c.l.b16 %v4936
        %v4953 = vpack.c.b16 %v4946, %v4945
        %v4954 = vpack.c.b16 %v4948, %v4947
        %v4955 = vpack.c.b16 %v4950, %v4949
        %v4956 = vpack.c.b16 %v4952, %v4951
        %4961 = vmatprep.subr.bf16.mxu0 %v4914
        %4962 = vmatpush1.bf16.msra.mxu0 %v4913
        %4963 = vmatprep.subr.bf16.mxu0 %v4916
        %4964 = vmatpush1.bf16.msra.mxu0 %v4915
        %4965 = vmatprep.subr.bf16.mxu0 %v4918
        %4966 = vmatpush1.bf16.msra.mxu0 %v4917
        %4967 = vmatprep.subr.bf16.mxu0 %v4920
        %4968 = vmatpush1.bf16.msra.mxu0 %v4919
        %4969 = vmatprep.subr.bf16.mxu0 %v4922
        %4970 = vmatpush1.bf16.msra.mxu0 %v4921
        %4971 = vmatprep.subr.bf16.mxu0 %v4924
        %4972 = vmatpush1.bf16.msra.mxu0 %v4923
        %4973 = vmatprep.subr.bf16.mxu0 %v4926
        %4974 = vmatpush1.bf16.msra.mxu0 %v4925
        %4975 = vmatprep.subr.bf16.mxu0 %v4928
        %4976 = vmatpush1.bf16.msra.mxu0 %v4927
        %4977 = vmatprep.subr.bf16.mxu0 0
        %4978 = vmatpush1.bf16.msra.mxu0 0
        %4979 = vmatprep.subr.bf16.mxu0 0
        %4980 = vmatpush1.bf16.msra.mxu0 0
        %4981 = vmatprep.subr.bf16.mxu0 0
        %4982 = vmatpush1.bf16.msra.mxu0 0
        %4983 = vmatprep.subr.bf16.mxu0 0
        %4984 = vmatpush1.bf16.msra.mxu0 0
        %4985 = vmatprep.subr.bf16.mxu0 0
        %4986 = vmatpush1.bf16.msra.mxu0 0
        %4987 = vmatprep.subr.bf16.mxu0 0
        %4988 = vmatpush1.bf16.msra.mxu0 0
        %4989 = vmatprep.subr.bf16.mxu0 0
        %4990 = vmatpush1.bf16.msra.mxu0 0
        %4991 = vmatprep.subr.bf16.mxu0 0
        %4992 = vmatpush1.bf16.msra.mxu0 0
        %4993 = vmatprep.mubr.bf16.mxu0 0
        %4994 = vmatmul.mubr.bf16.gmra.mrb[0].mxu0 %v4953
        %v4995 = vpop.f32.mrb[0].mxu0
        %v4996 = vadd.f32 0.0, %v4995
        %v4997 = vpop.f32.mrb[0].mxu0
        %v4998 = vadd.f32 0.0, %v4997
        %v4999 = vpop.f32.mrb[0].mxu0
        %v5000 = vadd.f32 0.0, %v4999
        %v5001 = vpop.f32.mrb[0].mxu0
        %v5002 = vadd.f32 0.0, %v5001
        %5003 = vmatprep.mubr.bf16.mxu0 0
        %5004 = vmatmul.mubr.bf16.gmra.mrb[0].mxu0 %v4954
        %v5005 = vpop.f32.mrb[0].mxu0
        %v5006 = vadd.f32 0.0, %v5005
        %v5007 = vpop.f32.mrb[0].mxu0
        %v5008 = vadd.f32 0.0, %v5007
        %v5009 = vpop.f32.mrb[0].mxu0
        %v5010 = vadd.f32 0.0, %v5009
        %v5011 = vpop.f32.mrb[0].mxu0
        %v5012 = vadd.f32 0.0, %v5011
        %5013 = vmatprep.mubr.bf16.mxu0 0
        %5014 = vmatmul.mubr.bf16.gmra.mrb[0].mxu0 %v4955
        %v5015 = vpop.f32.mrb[0].mxu0
        %v5016 = vadd.f32 0.0, %v5015
        %v5017 = vpop.f32.mrb[0].mxu0
        %v5018 = vadd.f32 0.0, %v5017
        %v5019 = vpop.f32.mrb[0].mxu0
        %v5020 = vadd.f32 0.0, %v5019
        %v5021 = vpop.f32.mrb[0].mxu0
        %v5022 = vadd.f32 0.0, %v5021
        %5023 = vmatprep.mubr.bf16.mxu0 0
        %5024 = vmatmul.mubr.bf16.gmra.mrb[0].mxu0 %v4956
        %v5025 = vpop.f32.mrb[0].mxu0
        %v5026 = vadd.f32 0.0, %v5025
        %v5027 = vpop.f32.mrb[0].mxu0
        %v5028 = vadd.f32 0.0, %v5027
        %v5029 = vpop.f32.mrb[0].mxu0
        %v5030 = vadd.f32 0.0, %v5029
        %v5031 = vpop.f32.mrb[0].mxu0
        %v5032 = vadd.f32 0.0, %v5031
        %5033 = vdwg.mxu0
        %s5034 = scalar_lea.vmem %s7, 32
        %v5035 = vld [vmem:[%s5034] sm:$0xf]
        %v5036 = vld [vmem:[%s5034 + $0x4] sm:$0xf]
        %v5037 = vld [vmem:[%s5034 + $0x8] sm:$0xf]
        %v5038 = vld [vmem:[%s5034 + $0xc] sm:$0xf]
        %v5039 = vld [vmem:[%s5034 + $0x10] sm:$0xf]
        %v5040 = vld [vmem:[%s5034 + $0x14] sm:$0xf]
        %v5041 = vld [vmem:[%s5034 + $0x18] sm:$0xf]
        %v5042 = vld [vmem:[%s5034 + $0x1c] sm:$0xf]
        %v5051 = vunpack.c.l.b16 %v5035
        %v5052 = vunpack.c.l.b16 %v5036
        %v5053 = vunpack.c.l.b16 %v5037
        %v5054 = vunpack.c.l.b16 %v5038
        %v5055 = vunpack.c.l.b16 %v5039
        %v5056 = vunpack.c.l.b16 %v5040
        %v5057 = vunpack.c.l.b16 %v5041
        %v5058 = vunpack.c.l.b16 %v5042
        %v5059 = vpack.c.b16 %v5052, %v5051
        %v5060 = vpack.c.b16 %v5054, %v5053
        %v5061 = vpack.c.b16 %v5056, %v5055
        %v5062 = vpack.c.b16 %v5058, %v5057
        %5067 = vmatprep.subr.bf16.mxu0 %v4914
        %5068 = vmatpush1.bf16.msra.mxu0 %v4913
        %5069 = vmatprep.subr.bf16.mxu0 %v4916
        %5070 = vmatpush1.bf16.msra.mxu0 %v4915
        %5071 = vmatprep.subr.bf16.mxu0 %v4918
        %5072 = vmatpush1.bf16.msra.mxu0 %v4917
        %5073 = vmatprep.subr.bf16.mxu0 %v4920
        %5074 = vmatpush1.bf16.msra.mxu0 %v4919
        %5075 = vmatprep.subr.bf16.mxu0 %v4922
        %5076 = vmatpush1.bf16.msra.mxu0 %v4921
        %5077 = vmatprep.subr.bf16.mxu0 %v4924
        %5078 = vmatpush1.bf16.msra.mxu0 %v4923
        %5079 = vmatprep.subr.bf16.mxu0 %v4926
        %5080 = vmatpush1.bf16.msra.mxu0 %v4925
        %5081 = vmatprep.subr.bf16.mxu0 %v4928
        %5082 = vmatpush1.bf16.msra.mxu0 %v4927
        %5083 = vmatprep.subr.bf16.mxu0 0
        %5084 = vmatpush1.bf16.msra.mxu0 0
        %5085 = vmatprep.subr.bf16.mxu0 0
        %5086 = vmatpush1.bf16.msra.mxu0 0
        %5087 = vmatprep.subr.bf16.mxu0 0
        %5088 = vmatpush1.bf16.msra.mxu0 0
        %5089 = vmatprep.subr.bf16.mxu0 0
        %5090 = vmatpush1.bf16.msra.mxu0 0
        %5091 = vmatprep.subr.bf16.mxu0 0
        %5092 = vmatpush1.bf16.msra.mxu0 0
        %5093 = vmatprep.subr.bf16.mxu0 0
        %5094 = vmatpush1.bf16.msra.mxu0 0
        %5095 = vmatprep.subr.bf16.mxu0 0
        %5096 = vmatpush1.bf16.msra.mxu0 0
        %5097 = vmatprep.subr.bf16.mxu0 0
        %5098 = vmatpush1.bf16.msra.mxu0 0
        %5099 = vmatprep.mubr.bf16.mxu0 0
        %5100 = vmatmul.mubr.bf16.gmra.mrb[0].mxu0 %v5059
        %v5101 = vpop.f32.mrb[0].mxu0
        %v5102 = vadd.f32 0.0, %v5101
        %v5103 = vpop.f32.mrb[0].mxu0
        %v5104 = vadd.f32 0.0, %v5103
        %v5105 = vpop.f32.mrb[0].mxu0
        %v5106 = vadd.f32 0.0, %v5105
        %v5107 = vpop.f32.mrb[0].mxu0
        %v5108 = vadd.f32 0.0, %v5107
        %5109 = vmatprep.mubr.bf16.mxu0 0
        %5110 = vmatmul.mubr.bf16.gmra.mrb[0].mxu0 %v5060
        %v5111 = vpop.f32.mrb[0].mxu0
        %v5112 = vadd.f32 0.0, %v5111
        %v5113 = vpop.f32.mrb[0].mxu0
        %v5114 = vadd.f32 0.0, %v5113
        %v5115 = vpop.f32.mrb[0].mxu0
        %v5116 = vadd.f32 0.0, %v5115
        %v5117 = vpop.f32.mrb[0].mxu0
        %v5118 = vadd.f32 0.0, %v5117
        %5119 = vmatprep.mubr.bf16.mxu0 0
        %5120 = vmatmul.mubr.bf16.gmra.mrb[0].mxu0 %v5061
        %v5121 = vpop.f32.mrb[0].mxu0
        %v5122 = vadd.f32 0.0, %v5121
        %v5123 = vpop.f32.mrb[0].mxu0
        %v5124 = vadd.f32 0.0, %v5123
        %v5125 = vpop.f32.mrb[0].mxu0
        %v5126 = vadd.f32 0.0, %v5125
        %v5127 = vpop.f32.mrb[0].mxu0
        %v5128 = vadd.f32 0.0, %v5127
        %5129 = vmatprep.mubr.bf16.mxu0 0
        %5130 = vmatmul.mubr.bf16.gmra.mrb[0].mxu0 %v5062
        %v5131 = vpop.f32.mrb[0].mxu0
        %v5132 = vadd.f32 0.0, %v5131
        %v5133 = vpop.f32.mrb[0].mxu0
        %v5134 = vadd.f32 0.0, %v5133
        %v5135 = vpop.f32.mrb[0].mxu0
        %v5136 = vadd.f32 0.0, %v5135
        %v5137 = vpop.f32.mrb[0].mxu0
        %v5138 = vadd.f32 0.0, %v5137
        %5139 = vdwg.mxu0
        %v5140 = vmax.f32 %v4996, %v5102
        %v5141 = vmax.f32 %v4998, %v5104
        %v5142 = vmax.f32 %v5000, %v5106
        %v5143 = vmax.f32 %v5002, %v5108
        %v5144 = vmax.f32 %v5006, %v5112
        %v5145 = vmax.f32 %v5008, %v5114
        %v5146 = vmax.f32 %v5010, %v5116
        %v5147 = vmax.f32 %v5012, %v5118
        %v5148 = vmax.f32 %v5016, %v5122
        %v5149 = vmax.f32 %v5018, %v5124
        %v5150 = vmax.f32 %v5020, %v5126
        %v5151 = vmax.f32 %v5022, %v5128
        %v5152 = vmax.f32 %v5026, %v5132
        %v5153 = vmax.f32 %v5028, %v5134
        %v5154 = vmax.f32 %v5030, %v5136
        %v5155 = vmax.f32 %v5032, %v5138
        %v5156 = vpack.c.bf16 %v5142, %v5140
        %v5157 = vpack.c.bf16 %v5143, %v5141
        %v5158 = vpack.c.bf16 %v5146, %v5144
        %v5159 = vpack.c.bf16 %v5147, %v5145
        %v5160 = vpack.c.bf16 %v5150, %v5148
        %v5161 = vpack.c.bf16 %v5151, %v5149
        %v5162 = vpack.c.bf16 %v5154, %v5152
        %v5163 = vpack.c.bf16 %v5155, %v5153
        %v5164 = vld [vmem:[%s8] sm:$0xf]
        %v5165 = vld [vmem:[%s8 + $0x4] sm:$0xf]
        %v5166 = vld [vmem:[%s8 + $0x8] sm:$0xf]
        %v5167 = vld [vmem:[%s8 + $0xc] sm:$0xf]
        %v5168 = vld [vmem:[%s8 + $0x10] sm:$0xf]
        %v5169 = vld [vmem:[%s8 + $0x14] sm:$0xf]
        %v5170 = vld [vmem:[%s8 + $0x18] sm:$0xf]
        %v5171 = vld [vmem:[%s8 + $0x1c] sm:$0xf]
        %v5172 = vld [vmem:[%s8 + $0x20] sm:$0xf]
        %v5173 = vld [vmem:[%s8 + $0x24] sm:$0xf]
        %v5174 = vld [vmem:[%s8 + $0x28] sm:$0xf]
        %v5175 = vld [vmem:[%s8 + $0x2c] sm:$0xf]
        %v5176 = vld [vmem:[%s8 + $0x30] sm:$0xf]
        %v5177 = vld [vmem:[%s8 + $0x34] sm:$0xf]
        %v5178 = vld [vmem:[%s8 + $0x38] sm:$0xf]
        %v5179 = vld [vmem:[%s8 + $0x3c] sm:$0xf]
        %v5180 = vld [vmem:[%s8 + $0x40] sm:$0xf]
        %v5181 = vld [vmem:[%s8 + $0x44] sm:$0xf]
        %v5182 = vld [vmem:[%s8 + $0x48] sm:$0xf]
        %v5183 = vld [vmem:[%s8 + $0x4c] sm:$0xf]
        %v5204 = vunpack.c.l.b16 %v5164
        %v5205 = vunpack.c.l.b16 %v5165
        %v5206 = vunpack.c.l.b16 %v5166
        %v5207 = vunpack.c.l.b16 %v5167
        %v5208 = vunpack.c.l.b16 %v5168
        %v5209 = vunpack.c.l.b16 %v5169
        %v5210 = vunpack.c.l.b16 %v5170
        %v5211 = vunpack.c.l.b16 %v5171
        %v5212 = vunpack.c.l.b16 %v5172
        %v5213 = vunpack.c.l.b16 %v5173
        %v5214 = vunpack.c.l.b16 %v5174
        %v5215 = vunpack.c.l.b16 %v5175
        %v5216 = vunpack.c.l.b16 %v5176
        %v5217 = vunpack.c.l.b16 %v5177
        %v5218 = vunpack.c.l.b16 %v5178
        %v5219 = vunpack.c.l.b16 %v5179
        %v5220 = vunpack.c.l.b16 %v5180
        %v5221 = vunpack.c.l.b16 %v5181
        %v5222 = vunpack.c.l.b16 %v5182
        %v5223 = vunpack.c.l.b16 %v5183
        %v5224 = vpack.c.b16 %v5205, %v5204
        %v5225 = vpack.c.b16 %v5207, %v5206
        %v5226 = vpack.c.b16 %v5209, %v5208
        %v5227 = vpack.c.b16 %v5211, %v5210
        %v5228 = vpack.c.b16 %v5213, %v5212
        %v5229 = vpack.c.b16 %v5215, %v5214
        %v5230 = vpack.c.b16 %v5217, %v5216
        %v5231 = vpack.c.b16 %v5219, %v5218
        %v5232 = vpack.c.b16 %v5221, %v5220
        %v5233 = vpack.c.b16 %v5223, %v5222
        %vm5244 = vcmask 261120
        %v5246 = vsel %vm5244, %v5157, 0
        %v5249 = vsel %vm5244, %v5159, 0
        %v5252 = vsel %vm5244, %v5161, 0
        %v5255 = vsel %vm5244, %v5163, 0
        %5257 = vmatprep.subr.bf16.mxu0 0
        %5258 = vmatpush1.bf16.msra.mxu0 %v5224
        %5259 = vmatprep.subr.bf16.mxu0 0
        %5260 = vmatpush1.bf16.msra.mxu0 %v5225
        %5261 = vmatprep.subr.bf16.mxu0 0
        %5262 = vmatpush1.bf16.msra.mxu0 %v5226
        %5263 = vmatprep.subr.bf16.mxu0 0
        %5264 = vmatpush1.bf16.msra.mxu0 %v5227
        %5265 = vmatprep.subr.bf16.mxu0 0
        %5266 = vmatpush1.bf16.msra.mxu0 %v5228
        %5267 = vmatprep.subr.bf16.mxu0 0
        %5268 = vmatpush1.bf16.msra.mxu0 %v5229
        %5269 = vmatprep.subr.bf16.mxu0 0
        %5270 = vmatpush1.bf16.msra.mxu0 %v5230
        %5271 = vmatprep.subr.bf16.mxu0 0
        %5272 = vmatpush1.bf16.msra.mxu0 %v5231
        %5273 = vmatprep.subr.bf16.mxu0 0
        %5274 = vmatpush1.bf16.msra.mxu0 %v5232
        %5275 = vmatprep.subr.bf16.mxu0 0
        %5276 = vmatpush1.bf16.msra.mxu0 %v5233
        %5277 = vmatprep.subr.bf16.mxu0 0
        %5278 = vmatpush1.bf16.msra.mxu0 0
        %5279 = vmatprep.subr.bf16.mxu0 0
        %5280 = vmatpush1.bf16.msra.mxu0 0
        %5281 = vmatprep.subr.bf16.mxu0 0
        %5282 = vmatpush1.bf16.msra.mxu0 0
        %5283 = vmatprep.subr.bf16.mxu0 0
        %5284 = vmatpush1.bf16.msra.mxu0 0
        %5285 = vmatprep.subr.bf16.mxu0 0
        %5286 = vmatpush1.bf16.msra.mxu0 0
        %5287 = vmatprep.subr.bf16.mxu0 0
        %5288 = vmatpush1.bf16.msra.mxu0 0
        %5289 = vmatprep.mubr.bf16.mxu0 %v5246
        %5290 = vmatmul.mubr.bf16.gmra.mrb[0].mxu0 %v5156
        %v5291 = vpop.f32.mrb[0].mxu0
        %v5292 = vadd.f32 0.0, %v5291
        %v5293 = vpop.f32.mrb[0].mxu0
        %v5294 = vpop.f32.mrb[0].mxu0
        %v5295 = vadd.f32 0.0, %v5294
        %v5296 = vpop.f32.mrb[0].mxu0
        %5297 = vmatprep.mubr.bf16.mxu0 %v5249
        %5298 = vmatmul.mubr.bf16.gmra.mrb[0].mxu0 %v5158
        %v5299 = vpop.f32.mrb[0].mxu0
        %v5300 = vadd.f32 0.0, %v5299
        %v5301 = vpop.f32.mrb[0].mxu0
        %v5302 = vpop.f32.mrb[0].mxu0
        %v5303 = vadd.f32 0.0, %v5302
        %v5304 = vpop.f32.mrb[0].mxu0
        %5305 = vmatprep.mubr.bf16.mxu0 %v5252
        %5306 = vmatmul.mubr.bf16.gmra.mrb[0].mxu0 %v5160
        %v5307 = vpop.f32.mrb[0].mxu0
        %v5308 = vadd.f32 0.0, %v5307
        %v5309 = vpop.f32.mrb[0].mxu0
        %v5310 = vpop.f32.mrb[0].mxu0
        %v5311 = vadd.f32 0.0, %v5310
        %v5312 = vpop.f32.mrb[0].mxu0
        %5313 = vmatprep.mubr.bf16.mxu0 %v5255
        %5314 = vmatmul.mubr.bf16.gmra.mrb[0].mxu0 %v5162
        %v5315 = vpop.f32.mrb[0].mxu0
        %v5316 = vadd.f32 0.0, %v5315
        %v5317 = vpop.f32.mrb[0].mxu0
        %v5318 = vpop.f32.mrb[0].mxu0
        %v5319 = vadd.f32 0.0, %v5318
        %v5320 = vpop.f32.mrb[0].mxu0
        %5321 = vdwg.mxu0
        %s5322 = scalar_lea.vmem %s8, 80
        %v5323 = vld [vmem:[%s5322] sm:$0xf]
        %v5324 = vld [vmem:[%s5322 + $0x4] sm:$0xf]
        %v5325 = vld [vmem:[%s5322 + $0x8] sm:$0xf]
        %v5326 = vld [vmem:[%s5322 + $0xc] sm:$0xf]
        %v5327 = vld [vmem:[%s5322 + $0x10] sm:$0xf]
        %v5328 = vld [vmem:[%s5322 + $0x14] sm:$0xf]
        %v5329 = vld [vmem:[%s5322 + $0x18] sm:$0xf]
        %v5330 = vld [vmem:[%s5322 + $0x1c] sm:$0xf]
        %v5331 = vld [vmem:[%s5322 + $0x20] sm:$0xf]
        %v5332 = vld [vmem:[%s5322 + $0x24] sm:$0xf]
        %v5333 = vld [vmem:[%s5322 + $0x28] sm:$0xf]
        %v5334 = vld [vmem:[%s5322 + $0x2c] sm:$0xf]
        %v5335 = vld [vmem:[%s5322 + $0x30] sm:$0xf]
        %v5336 = vld [vmem:[%s5322 + $0x34] sm:$0xf]
        %v5337 = vld [vmem:[%s5322 + $0x38] sm:$0xf]
        %v5338 = vld [vmem:[%s5322 + $0x3c] sm:$0xf]
        %v5339 = vld [vmem:[%s5322 + $0x40] sm:$0xf]
        %v5340 = vld [vmem:[%s5322 + $0x44] sm:$0xf]
        %v5341 = vld [vmem:[%s5322 + $0x48] sm:$0xf]
        %v5342 = vld [vmem:[%s5322 + $0x4c] sm:$0xf]
        %v5363 = vunpack.c.l.b16 %v5323
        %v5364 = vunpack.c.l.b16 %v5324
        %v5365 = vunpack.c.l.b16 %v5325
        %v5366 = vunpack.c.l.b16 %v5326
        %v5367 = vunpack.c.l.b16 %v5327
        %v5368 = vunpack.c.l.b16 %v5328
        %v5369 = vunpack.c.l.b16 %v5329
        %v5370 = vunpack.c.l.b16 %v5330
        %v5371 = vunpack.c.l.b16 %v5331
        %v5372 = vunpack.c.l.b16 %v5332
        %v5373 = vunpack.c.l.b16 %v5333
        %v5374 = vunpack.c.l.b16 %v5334
        %v5375 = vunpack.c.l.b16 %v5335
        %v5376 = vunpack.c.l.b16 %v5336
        %v5377 = vunpack.c.l.b16 %v5337
        %v5378 = vunpack.c.l.b16 %v5338
        %v5379 = vunpack.c.l.b16 %v5339
        %v5380 = vunpack.c.l.b16 %v5340
        %v5381 = vunpack.c.l.b16 %v5341
        %v5382 = vunpack.c.l.b16 %v5342
        %v5383 = vpack.c.b16 %v5364, %v5363
        %v5384 = vpack.c.b16 %v5366, %v5365
        %v5385 = vpack.c.b16 %v5368, %v5367
        %v5386 = vpack.c.b16 %v5370, %v5369
        %v5387 = vpack.c.b16 %v5372, %v5371
        %v5388 = vpack.c.b16 %v5374, %v5373
        %v5389 = vpack.c.b16 %v5376, %v5375
        %v5390 = vpack.c.b16 %v5378, %v5377
        %v5391 = vpack.c.b16 %v5380, %v5379
        %v5392 = vpack.c.b16 %v5382, %v5381
        %5403 = vmatprep.subr.bf16.mxu0 0
        %5404 = vmatpush1.bf16.msra.mxu0 %v5383
        %5405 = vmatprep.subr.bf16.mxu0 0
        %5406 = vmatpush1.bf16.msra.mxu0 %v5384
        %5407 = vmatprep.subr.bf16.mxu0 0
        %5408 = vmatpush1.bf16.msra.mxu0 %v5385
        %5409 = vmatprep.subr.bf16.mxu0 0
        %5410 = vmatpush1.bf16.msra.mxu0 %v5386
        %5411 = vmatprep.subr.bf16.mxu0 0
        %5412 = vmatpush1.bf16.msra.mxu0 %v5387
        %5413 = vmatprep.subr.bf16.mxu0 0
        %5414 = vmatpush1.bf16.msra.mxu0 %v5388
        %5415 = vmatprep.subr.bf16.mxu0 0
        %5416 = vmatpush1.bf16.msra.mxu0 %v5389
        %5417 = vmatprep.subr.bf16.mxu0 0
        %5418 = vmatpush1.bf16.msra.mxu0 %v5390
        %5419 = vmatprep.subr.bf16.mxu0 0
        %5420 = vmatpush1.bf16.msra.mxu0 %v5391
        %5421 = vmatprep.subr.bf16.mxu0 0
        %5422 = vmatpush1.bf16.msra.mxu0 %v5392
        %5423 = vmatprep.subr.bf16.mxu0 0
        %5424 = vmatpush1.bf16.msra.mxu0 0
        %5425 = vmatprep.subr.bf16.mxu0 0
        %5426 = vmatpush1.bf16.msra.mxu0 0
        %5427 = vmatprep.subr.bf16.mxu0 0
        %5428 = vmatpush1.bf16.msra.mxu0 0
        %5429 = vmatprep.subr.bf16.mxu0 0
        %5430 = vmatpush1.bf16.msra.mxu0 0
        %5431 = vmatprep.subr.bf16.mxu0 0
        %5432 = vmatpush1.bf16.msra.mxu0 0
        %5433 = vmatprep.subr.bf16.mxu0 0
        %5434 = vmatpush1.bf16.msra.mxu0 0
        %5435 = vmatprep.mubr.bf16.mxu0 %v5246
        %5436 = vmatmul.mubr.bf16.gmra.mrb[0].mxu0 %v5156
        %v5437 = vpop.f32.mrb[0].mxu0
        %v5438 = vadd.f32 0.0, %v5437
        %v5439 = vpop.f32.mrb[0].mxu0
        %v5440 = vpop.f32.mrb[0].mxu0
        %v5441 = vadd.f32 0.0, %v5440
        %v5442 = vpop.f32.mrb[0].mxu0
        %5443 = vmatprep.mubr.bf16.mxu0 %v5249
        %5444 = vmatmul.mubr.bf16.gmra.mrb[0].mxu0 %v5158
        %v5445 = vpop.f32.mrb[0].mxu0
        %v5446 = vadd.f32 0.0, %v5445
        %v5447 = vpop.f32.mrb[0].mxu0
        %v5448 = vpop.f32.mrb[0].mxu0
        %v5449 = vadd.f32 0.0, %v5448
        %v5450 = vpop.f32.mrb[0].mxu0
        %5451 = vmatprep.mubr.bf16.mxu0 %v5252
        %5452 = vmatmul.mubr.bf16.gmra.mrb[0].mxu0 %v5160
        %v5453 = vpop.f32.mrb[0].mxu0
        %v5454 = vadd.f32 0.0, %v5453
        %v5455 = vpop.f32.mrb[0].mxu0
        %v5456 = vpop.f32.mrb[0].mxu0
        %v5457 = vadd.f32 0.0, %v5456
        %v5458 = vpop.f32.mrb[0].mxu0
        %5459 = vmatprep.mubr.bf16.mxu0 %v5255
        %5460 = vmatmul.mubr.bf16.gmra.mrb[0].mxu0 %v5162
        %v5461 = vpop.f32.mrb[0].mxu0
        %v5462 = vadd.f32 0.0, %v5461
        %v5463 = vpop.f32.mrb[0].mxu0
        %v5464 = vpop.f32.mrb[0].mxu0
        %v5465 = vadd.f32 0.0, %v5464
        %v5466 = vpop.f32.mrb[0].mxu0
        %5467 = vdwg.mxu0
        %v5468 = vmax.f32 %v5292, %v5438
        %v5469 = vmax.f32 %v5295, %v5441
        %v5470 = vmax.f32 %v5300, %v5446
        %v5471 = vmax.f32 %v5303, %v5449
        %v5472 = vmax.f32 %v5308, %v5454
        %v5473 = vmax.f32 %v5311, %v5457
        %v5474 = vmax.f32 %v5316, %v5462
        %v5475 = vmax.f32 %v5319, %v5465
        %v5476 = vpack.c.bf16 %v5469, %v5468
        %v5477 = vpack.c.bf16 %v5471, %v5470
        %v5478 = vpack.c.bf16 %v5473, %v5472
        %v5479 = vpack.c.bf16 %v5475, %v5474
        %v5480 = vld [vmem:[%s9] sm:$0xf]
        %vm5481 = vcmask 523264
        %v5483 = vsel %vm5481, %v5480, 0
        %5485 = vmatprep.subr.bf16.mxu0 0
        %5486 = vmatpush1.bf16.msra.mxu0 %v5476
        %5487 = vmatprep.subr.bf16.mxu0 0
        %5488 = vmatpush1.bf16.msra.mxu0 %v5477
        %5489 = vmatprep.subr.bf16.mxu0 0
        %5490 = vmatpush1.bf16.msra.mxu0 %v5478
        %5491 = vmatprep.subr.bf16.mxu0 0
        %5492 = vmatpush1.bf16.msra.mxu0 %v5479
        %5493 = vmatprep.subr.bf16.mxu0 0
        %5494 = vmatpush1.bf16.msra.mxu0 0
        %5495 = vmatprep.subr.bf16.mxu0 0
        %5496 = vmatpush1.bf16.msra.mxu0 0
        %5497 = vmatprep.subr.bf16.mxu0 0
        %5498 = vmatpush1.bf16.msra.mxu0 0
        %5499 = vmatprep.subr.bf16.mxu0 0
        %5500 = vmatpush1.bf16.msra.mxu0 0
        %5501 = vmatprep.subr.bf16.mxu0 0
        %5502 = vmatpush1.bf16.msra.mxu0 0
        %5503 = vmatprep.subr.bf16.mxu0 0
        %5504 = vmatpush1.bf16.msra.mxu0 0
        %5505 = vmatprep.subr.bf16.mxu0 0
        %5506 = vmatpush1.bf16.msra.mxu0 0
        %5507 = vmatprep.subr.bf16.mxu0 0
        %5508 = vmatpush1.bf16.msra.mxu0 0
        %5509 = vmatprep.subr.bf16.mxu0 0
        %5510 = vmatpush1.bf16.msra.mxu0 0
        %5511 = vmatprep.subr.bf16.mxu0 0
        %5512 = vmatpush1.bf16.msra.mxu0 0
        %5513 = vmatprep.subr.bf16.mxu0 0
        %5514 = vmatpush1.bf16.msra.mxu0 0
        %5515 = vmatprep.subr.bf16.mxu0 0
        %5516 = vmatpush1.bf16.msra.mxu0 0
        %5517 = vmatprep.mubr.bf16.mxu0 0
        %5518 = vmatmul.mubr.bf16.gmra.mrb[0].mxu0 %v5483
        %v5519 = vpop.f32.mrb[0].mxu0
        %v5520 = vadd.f32 0.0, %v5519
        %v5521 = vpop.f32.mrb[0].mxu0
        %v5522 = vpop.f32.mrb[0].mxu0
        %v5523 = vpop.f32.mrb[0].mxu0
        %5524 = vdwg.mxu0
        %v5525 = vpack.c.bf16 %v5520, %v5520
        %v5526 = vld [vmem:[%s10] sm:$0xf]
        %v5527 = vld [vmem:[%s10 + $0x4] sm:$0xf]
        %v5528 = vld [vmem:[%s10 + $0x8] sm:$0xf]
        %v5529 = vld [vmem:[%s10 + $0xc] sm:$0xf]
        %v5530 = vld [vmem:[%s10 + $0x10] sm:$0xf]
        %v5531 = vld [vmem:[%s10 + $0x14] sm:$0xf]
        %v5532 = vld [vmem:[%s10 + $0x18] sm:$0xf]
        %v5533 = vld [vmem:[%s10 + $0x1c] sm:$0xf]
        %v5534 = vld [vmem:[%s10 + $0x20] sm:$0xf]
        %v5535 = vld [vmem:[%s10 + $0x24] sm:$0xf]
        %s5536 = scalar_lea.vmem %s9, 4
        %v5537 = vld [vmem:[%s5536] sm:$0xf]
        %v5539 = vsel %vm5481, %v5537, 0
        %5541 = vmatprep.subr.bf16.mxu0 0
        %5542 = vmatpush1.bf16.msra.mxu0 %v5476
        %5543 = vmatprep.subr.bf16.mxu0 0
        %5544 = vmatpush1.bf16.msra.mxu0 %v5477
        %5545 = vmatprep.subr.bf16.mxu0 0
        %5546 = vmatpush1.bf16.msra.mxu0 %v5478
        %5547 = vmatprep.subr.bf16.mxu0 0
        %5548 = vmatpush1.bf16.msra.mxu0 %v5479
        %5549 = vmatprep.subr.bf16.mxu0 0
        %5550 = vmatpush1.bf16.msra.mxu0 0
        %5551 = vmatprep.subr.bf16.mxu0 0
        %5552 = vmatpush1.bf16.msra.mxu0 0
        %5553 = vmatprep.subr.bf16.mxu0 0
        %5554 = vmatpush1.bf16.msra.mxu0 0
        %5555 = vmatprep.subr.bf16.mxu0 0
        %5556 = vmatpush1.bf16.msra.mxu0 0
        %5557 = vmatprep.subr.bf16.mxu0 0
        %5558 = vmatpush1.bf16.msra.mxu0 0
        %5559 = vmatprep.subr.bf16.mxu0 0
        %5560 = vmatpush1.bf16.msra.mxu0 0
        %5561 = vmatprep.subr.bf16.mxu0 0
        %5562 = vmatpush1.bf16.msra.mxu0 0
        %5563 = vmatprep.subr.bf16.mxu0 0
        %5564 = vmatpush1.bf16.msra.mxu0 0
        %5565 = vmatprep.subr.bf16.mxu0 0
        %5566 = vmatpush1.bf16.msra.mxu0 0
        %5567 = vmatprep.subr.bf16.mxu0 0
        %5568 = vmatpush1.bf16.msra.mxu0 0
        %5569 = vmatprep.subr.bf16.mxu0 0
        %5570 = vmatpush1.bf16.msra.mxu0 0
        %5571 = vmatprep.subr.bf16.mxu0 0
        %5572 = vmatpush1.bf16.msra.mxu0 0
        %5573 = vmatprep.mubr.bf16.mxu0 0
        %5574 = vmatmul.mubr.bf16.gmra.mrb[0].mxu0 %v5539
        %v5575 = vpop.f32.mrb[0].mxu0
        %v5576 = vadd.f32 0.0, %v5575
        %v5577 = vpop.f32.mrb[0].mxu0
        %v5578 = vpop.f32.mrb[0].mxu0
        %v5579 = vpop.f32.mrb[0].mxu0
        %5580 = vdwg.mxu0
        %v5581 = vpack.c.bf16 %v5576, %v5576
        %v5582 = vld [vmem:[%s10 + $0x28] sm:$0xf]
        %v5583 = vld [vmem:[%s10 + $0x2c] sm:$0xf]
        %v5584 = vld [vmem:[%s10 + $0x30] sm:$0xf]
        %v5585 = vld [vmem:[%s10 + $0x34] sm:$0xf]
        %v5586 = vld [vmem:[%s10 + $0x38] sm:$0xf]
        %v5587 = vld [vmem:[%s10 + $0x3c] sm:$0xf]
        %v5588 = vld [vmem:[%s10 + $0x40] sm:$0xf]
        %v5589 = vld [vmem:[%s10 + $0x44] sm:$0xf]
        %v5590 = vld [vmem:[%s10 + $0x48] sm:$0xf]
        %v5591 = vld [vmem:[%s10 + $0x4c] sm:$0xf]
        %v5602 = vunpack.c.l.b16 %v5582
        %v5603 = vunpack.c.l.b16 %v5583
        %v5604 = vunpack.c.l.b16 %v5584
        %v5605 = vunpack.c.l.b16 %v5585
        %v5606 = vunpack.c.l.b16 %v5586
        %v5607 = vunpack.c.l.b16 %v5587
        %v5608 = vunpack.c.l.b16 %v5588
        %v5609 = vunpack.c.l.b16 %v5589
        %v5610 = vunpack.c.l.b16 %v5590
        %v5611 = vunpack.c.l.b16 %v5591
        %v5612 = vpack.c.b16 %v5603, %v5602
        %v5613 = vpack.c.b16 %v5605, %v5604
        %v5614 = vpack.c.b16 %v5607, %v5606
        %v5615 = vpack.c.b16 %v5609, %v5608
        %v5616 = vpack.c.b16 %v5611, %v5610
        %vm5622 = vcmask 654336
        %v5624 = vsel %vm5622, %v5581, 0
        %5626 = vmatprep.subr.bf16.mxu0 0
        %5627 = vmatpush1.bf16.msra.mxu0 %v5612
        %5628 = vmatprep.subr.bf16.mxu0 0
        %5629 = vmatpush1.bf16.msra.mxu0 %v5613
        %5630 = vmatprep.subr.bf16.mxu0 0
        %5631 = vmatpush1.bf16.msra.mxu0 %v5614
        %5632 = vmatprep.subr.bf16.mxu0 0
        %5633 = vmatpush1.bf16.msra.mxu0 %v5615
        %5634 = vmatprep.subr.bf16.mxu0 0
        %5635 = vmatpush1.bf16.msra.mxu0 %v5616
        %5636 = vmatprep.subr.bf16.mxu0 0
        %5637 = vmatpush1.bf16.msra.mxu0 0
        %5638 = vmatprep.subr.bf16.mxu0 0
        %5639 = vmatpush1.bf16.msra.mxu0 0
        %5640 = vmatprep.subr.bf16.mxu0 0
        %5641 = vmatpush1.bf16.msra.mxu0 0
        %5642 = vmatprep.subr.bf16.mxu0 0
        %5643 = vmatpush1.bf16.msra.mxu0 0
        %5644 = vmatprep.subr.bf16.mxu0 0
        %5645 = vmatpush1.bf16.msra.mxu0 0
        %5646 = vmatprep.subr.bf16.mxu0 0
        %5647 = vmatpush1.bf16.msra.mxu0 0
        %5648 = vmatprep.subr.bf16.mxu0 0
        %5649 = vmatpush1.bf16.msra.mxu0 0
        %5650 = vmatprep.subr.bf16.mxu0 0
        %5651 = vmatpush1.bf16.msra.mxu0 0
        %5652 = vmatprep.subr.bf16.mxu0 0
        %5653 = vmatpush1.bf16.msra.mxu0 0
        %5654 = vmatprep.subr.bf16.mxu0 0
        %5655 = vmatpush1.bf16.msra.mxu0 0
        %5656 = vmatprep.subr.bf16.mxu0 0
        %5657 = vmatpush1.bf16.msra.mxu0 0
        %5658 = vmatprep.mubr.bf16.mxu0 0
        %5659 = vmatmul.mubr.bf16.gmra.mrb[0].mxu0 %v5624
        %v5660 = vpop.f32.mrb[0].mxu0
        %v5661 = vadd.f32 0.0, %v5660
        %v5662 = vpop.f32.mrb[0].mxu0
        %v5663 = vpop.f32.mrb[0].mxu0
        %v5664 = vpop.f32.mrb[0].mxu0
        %5665 = vdwg.mxu0
        %v5676 = vunpack.c.l.b16 %v5526
        %v5677 = vunpack.c.l.b16 %v5527
        %v5678 = vunpack.c.l.b16 %v5528
        %v5679 = vunpack.c.l.b16 %v5529
        %v5680 = vunpack.c.l.b16 %v5530
        %v5681 = vunpack.c.l.b16 %v5531
        %v5682 = vunpack.c.l.b16 %v5532
        %v5683 = vunpack.c.l.b16 %v5533
        %v5684 = vunpack.c.l.b16 %v5534
        %v5685 = vunpack.c.l.b16 %v5535
        %v5686 = vpack.c.b16 %v5677, %v5676
        %v5687 = vpack.c.b16 %v5679, %v5678
        %v5688 = vpack.c.b16 %v5681, %v5680
        %v5689 = vpack.c.b16 %v5683, %v5682
        %v5690 = vpack.c.b16 %v5685, %v5684
        %v5697 = vsel %vm5622, %v5525, 0
        %5699 = vmatprep.subr.bf16.mxu0 0
        %5700 = vmatpush1.bf16.msra.mxu0 %v5686
        %5701 = vmatprep.subr.bf16.mxu0 0
        %5702 = vmatpush1.bf16.msra.mxu0 %v5687
        %5703 = vmatprep.subr.bf16.mxu0 0
        %5704 = vmatpush1.bf16.msra.mxu0 %v5688
        %5705 = vmatprep.subr.bf16.mxu0 0
        %5706 = vmatpush1.bf16.msra.mxu0 %v5689
        %5707 = vmatprep.subr.bf16.mxu0 0
        %5708 = vmatpush1.bf16.msra.mxu0 %v5690
        %5709 = vmatprep.subr.bf16.mxu0 0
        %5710 = vmatpush1.bf16.msra.mxu0 0
        %5711 = vmatprep.subr.bf16.mxu0 0
        %5712 = vmatpush1.bf16.msra.mxu0 0
        %5713 = vmatprep.subr.bf16.mxu0 0
        %5714 = vmatpush1.bf16.msra.mxu0 0
        %5715 = vmatprep.subr.bf16.mxu0 0
        %5716 = vmatpush1.bf16.msra.mxu0 0
        %5717 = vmatprep.subr.bf16.mxu0 0
        %5718 = vmatpush1.bf16.msra.mxu0 0
        %5719 = vmatprep.subr.bf16.mxu0 0
        %5720 = vmatpush1.bf16.msra.mxu0 0
        %5721 = vmatprep.subr.bf16.mxu0 0
        %5722 = vmatpush1.bf16.msra.mxu0 0
        %5723 = vmatprep.subr.bf16.mxu0 0
        %5724 = vmatpush1.bf16.msra.mxu0 0
        %5725 = vmatprep.subr.bf16.mxu0 0
        %5726 = vmatpush1.bf16.msra.mxu0 0
        %5727 = vmatprep.subr.bf16.mxu0 0
        %5728 = vmatpush1.bf16.msra.mxu0 0
        %5729 = vmatprep.subr.bf16.mxu0 0
        %5730 = vmatpush1.bf16.msra.mxu0 0
        %5731 = vmatprep.mubr.bf16.mxu0 0
        %5732 = vmatmul.mubr.bf16.gmra.mrb[0].mxu0 %v5697
        %v5733 = vpop.f32.mrb[0].mxu0
        %v5734 = vadd.f32 %v5661, %v5733
        %v5735 = vpop.f32.mrb[0].mxu0
        %v5736 = vpop.f32.mrb[0].mxu0
        %v5737 = vpop.f32.mrb[0].mxu0
        %5738 = vdwg.mxu0
        %s5739 = scalar_lea.vmem %s9, 8
        %v5740 = vld [vmem:[%s5739] sm:$0xf]
        %v5742 = vsel %vm5481, %v5740, 0
        %5744 = vmatprep.subr.bf16.mxu0 0
        %5745 = vmatpush1.bf16.msra.mxu0 %v5476
        %5746 = vmatprep.subr.bf16.mxu0 0
        %5747 = vmatpush1.bf16.msra.mxu0 %v5477
        %5748 = vmatprep.subr.bf16.mxu0 0
        %5749 = vmatpush1.bf16.msra.mxu0 %v5478
        %5750 = vmatprep.subr.bf16.mxu0 0
        %5751 = vmatpush1.bf16.msra.mxu0 %v5479
        %5752 = vmatprep.subr.bf16.mxu0 0
        %5753 = vmatpush1.bf16.msra.mxu0 0
        %5754 = vmatprep.subr.bf16.mxu0 0
        %5755 = vmatpush1.bf16.msra.mxu0 0
        %5756 = vmatprep.subr.bf16.mxu0 0
        %5757 = vmatpush1.bf16.msra.mxu0 0
        %5758 = vmatprep.subr.bf16.mxu0 0
        %5759 = vmatpush1.bf16.msra.mxu0 0
        %5760 = vmatprep.subr.bf16.mxu0 0
        %5761 = vmatpush1.bf16.msra.mxu0 0
        %5762 = vmatprep.subr.bf16.mxu0 0
        %5763 = vmatpush1.bf16.msra.mxu0 0
        %5764 = vmatprep.subr.bf16.mxu0 0
        %5765 = vmatpush1.bf16.msra.mxu0 0
        %5766 = vmatprep.subr.bf16.mxu0 0
        %5767 = vmatpush1.bf16.msra.mxu0 0
        %5768 = vmatprep.subr.bf16.mxu0 0
        %5769 = vmatpush1.bf16.msra.mxu0 0
        %5770 = vmatprep.subr.bf16.mxu0 0
        %5771 = vmatpush1.bf16.msra.mxu0 0
        %5772 = vmatprep.subr.bf16.mxu0 0
        %5773 = vmatpush1.bf16.msra.mxu0 0
        %5774 = vmatprep.subr.bf16.mxu0 0
        %5775 = vmatpush1.bf16.msra.mxu0 0
        %5776 = vmatprep.mubr.bf16.mxu0 0
        %5777 = vmatmul.mubr.bf16.gmra.mrb[0].mxu0 %v5742
        %v5778 = vpop.f32.mrb[0].mxu0
        %v5779 = vadd.f32 0.0, %v5778
        %v5780 = vpop.f32.mrb[0].mxu0
        %v5781 = vpop.f32.mrb[0].mxu0
        %v5782 = vpop.f32.mrb[0].mxu0
        %5783 = vdwg.mxu0
        %v5784 = vpack.c.bf16 %v5779, %v5779
        %v5785 = vld [vmem:[%s10 + $0x50] sm:$0xf]
        %v5786 = vld [vmem:[%s10 + $0x54] sm:$0xf]
        %v5787 = vld [vmem:[%s10 + $0x58] sm:$0xf]
        %v5788 = vld [vmem:[%s10 + $0x5c] sm:$0xf]
        %v5789 = vld [vmem:[%s10 + $0x60] sm:$0xf]
        %v5790 = vld [vmem:[%s10 + $0x64] sm:$0xf]
        %v5791 = vld [vmem:[%s10 + $0x68] sm:$0xf]
        %v5792 = vld [vmem:[%s10 + $0x6c] sm:$0xf]
        %v5793 = vld [vmem:[%s10 + $0x70] sm:$0xf]
        %v5794 = vld [vmem:[%s10 + $0x74] sm:$0xf]
        %v5805 = vunpack.c.l.b16 %v5785
        %v5806 = vunpack.c.l.b16 %v5786
        %v5807 = vunpack.c.l.b16 %v5787
        %v5808 = vunpack.c.l.b16 %v5788
        %v5809 = vunpack.c.l.b16 %v5789
        %v5810 = vunpack.c.l.b16 %v5790
        %v5811 = vunpack.c.l.b16 %v5791
        %v5812 = vunpack.c.l.b16 %v5792
        %v5813 = vunpack.c.l.b16 %v5793
        %v5814 = vunpack.c.l.b16 %v5794
        %v5815 = vpack.c.b16 %v5806, %v5805
        %v5816 = vpack.c.b16 %v5808, %v5807
        %v5817 = vpack.c.b16 %v5810, %v5809
        %v5818 = vpack.c.b16 %v5812, %v5811
        %v5819 = vpack.c.b16 %v5814, %v5813
        %v5826 = vsel %vm5622, %v5784, 0
        %5828 = vmatprep.subr.bf16.mxu0 0
        %5829 = vmatpush1.bf16.msra.mxu0 %v5815
        %5830 = vmatprep.subr.bf16.mxu0 0
        %5831 = vmatpush1.bf16.msra.mxu0 %v5816
        %5832 = vmatprep.subr.bf16.mxu0 0
        %5833 = vmatpush1.bf16.msra.mxu0 %v5817
        %5834 = vmatprep.subr.bf16.mxu0 0
        %5835 = vmatpush1.bf16.msra.mxu0 %v5818
        %5836 = vmatprep.subr.bf16.mxu0 0
        %5837 = vmatpush1.bf16.msra.mxu0 %v5819
        %5838 = vmatprep.subr.bf16.mxu0 0
        %5839 = vmatpush1.bf16.msra.mxu0 0
        %5840 = vmatprep.subr.bf16.mxu0 0
        %5841 = vmatpush1.bf16.msra.mxu0 0
        %5842 = vmatprep.subr.bf16.mxu0 0
        %5843 = vmatpush1.bf16.msra.mxu0 0
        %5844 = vmatprep.subr.bf16.mxu0 0
        %5845 = vmatpush1.bf16.msra.mxu0 0
        %5846 = vmatprep.subr.bf16.mxu0 0
        %5847 = vmatpush1.bf16.msra.mxu0 0
        %5848 = vmatprep.subr.bf16.mxu0 0
        %5849 = vmatpush1.bf16.msra.mxu0 0
        %5850 = vmatprep.subr.bf16.mxu0 0
        %5851 = vmatpush1.bf16.msra.mxu0 0
        %5852 = vmatprep.subr.bf16.mxu0 0
        %5853 = vmatpush1.bf16.msra.mxu0 0
        %5854 = vmatprep.subr.bf16.mxu0 0
        %5855 = vmatpush1.bf16.msra.mxu0 0
        %5856 = vmatprep.subr.bf16.mxu0 0
        %5857 = vmatpush1.bf16.msra.mxu0 0
        %5858 = vmatprep.subr.bf16.mxu0 0
        %5859 = vmatpush1.bf16.msra.mxu0 0
        %5860 = vmatprep.mubr.bf16.mxu0 0
        %5861 = vmatmul.mubr.bf16.gmra.mrb[0].mxu0 %v5826
        %v5862 = vpop.f32.mrb[0].mxu0
        %v5863 = vadd.f32 0.0, %v5862
        %v5864 = vpop.f32.mrb[0].mxu0
        %v5865 = vpop.f32.mrb[0].mxu0
        %v5866 = vpop.f32.mrb[0].mxu0
        %5867 = vdwg.mxu0
        %v5868 = vadd.f32 %v5734, %v5863
        %s5869 = scalar_lea.vmem %s9, 12
        %v5870 = vld [vmem:[%s5869] sm:$0xf]
        %v5872 = vsel %vm5481, %v5870, 0
        %5874 = vmatprep.subr.bf16.mxu0 0
        %5875 = vmatpush1.bf16.msra.mxu0 %v5476
        %5876 = vmatprep.subr.bf16.mxu0 0
        %5877 = vmatpush1.bf16.msra.mxu0 %v5477
        %5878 = vmatprep.subr.bf16.mxu0 0
        %5879 = vmatpush1.bf16.msra.mxu0 %v5478
        %5880 = vmatprep.subr.bf16.mxu0 0
        %5881 = vmatpush1.bf16.msra.mxu0 %v5479
        %5882 = vmatprep.subr.bf16.mxu0 0
        %5883 = vmatpush1.bf16.msra.mxu0 0
        %5884 = vmatprep.subr.bf16.mxu0 0
        %5885 = vmatpush1.bf16.msra.mxu0 0
        %5886 = vmatprep.subr.bf16.mxu0 0
        %5887 = vmatpush1.bf16.msra.mxu0 0
        %5888 = vmatprep.subr.bf16.mxu0 0
        %5889 = vmatpush1.bf16.msra.mxu0 0
        %5890 = vmatprep.subr.bf16.mxu0 0
        %5891 = vmatpush1.bf16.msra.mxu0 0
        %5892 = vmatprep.subr.bf16.mxu0 0
        %5893 = vmatpush1.bf16.msra.mxu0 0
        %5894 = vmatprep.subr.bf16.mxu0 0
        %5895 = vmatpush1.bf16.msra.mxu0 0
        %5896 = vmatprep.subr.bf16.mxu0 0
        %5897 = vmatpush1.bf16.msra.mxu0 0
        %5898 = vmatprep.subr.bf16.mxu0 0
        %5899 = vmatpush1.bf16.msra.mxu0 0
        %5900 = vmatprep.subr.bf16.mxu0 0
        %5901 = vmatpush1.bf16.msra.mxu0 0
        %5902 = vmatprep.subr.bf16.mxu0 0
        %5903 = vmatpush1.bf16.msra.mxu0 0
        %5904 = vmatprep.subr.bf16.mxu0 0
        %5905 = vmatpush1.bf16.msra.mxu0 0
        %5906 = vmatprep.mubr.bf16.mxu0 0
        %5907 = vmatmul.mubr.bf16.gmra.mrb[0].mxu0 %v5872
        %v5908 = vpop.f32.mrb[0].mxu0
        %v5909 = vadd.f32 0.0, %v5908
        %v5910 = vpop.f32.mrb[0].mxu0
        %v5911 = vpop.f32.mrb[0].mxu0
        %v5912 = vpop.f32.mrb[0].mxu0
        %5913 = vdwg.mxu0
        %v5914 = vpack.c.bf16 %v5909, %v5909
        %v5915 = vld [vmem:[%s10 + $0x78] sm:$0xf]
        %v5916 = vld [vmem:[%s10 + $0x7c] sm:$0xf]
        %v5917 = vld [vmem:[%s10 + $0x80] sm:$0xf]
        %v5918 = vld [vmem:[%s10 + $0x84] sm:$0xf]
        %v5919 = vld [vmem:[%s10 + $0x88] sm:$0xf]
        %v5920 = vld [vmem:[%s10 + $0x8c] sm:$0xf]
        %v5921 = vld [vmem:[%s10 + $0x90] sm:$0xf]
        %v5922 = vld [vmem:[%s10 + $0x94] sm:$0xf]
        %v5923 = vld [vmem:[%s10 + $0x98] sm:$0xf]
        %v5924 = vld [vmem:[%s10 + $0x9c] sm:$0xf]
        %v5935 = vunpack.c.l.b16 %v5915
        %v5936 = vunpack.c.l.b16 %v5916
        %v5937 = vunpack.c.l.b16 %v5917
        %v5938 = vunpack.c.l.b16 %v5918
        %v5939 = vunpack.c.l.b16 %v5919
        %v5940 = vunpack.c.l.b16 %v5920
        %v5941 = vunpack.c.l.b16 %v5921
        %v5942 = vunpack.c.l.b16 %v5922
        %v5943 = vunpack.c.l.b16 %v5923
        %v5944 = vunpack.c.l.b16 %v5924
        %v5945 = vpack.c.b16 %v5936, %v5935
        %v5946 = vpack.c.b16 %v5938, %v5937
        %v5947 = vpack.c.b16 %v5940, %v5939
        %v5948 = vpack.c.b16 %v5942, %v5941
        %v5949 = vpack.c.b16 %v5944, %v5943
        %v5956 = vsel %vm5622, %v5914, 0
        %5958 = vmatprep.subr.bf16.mxu0 0
        %5959 = vmatpush1.bf16.msra.mxu0 %v5945
        %5960 = vmatprep.subr.bf16.mxu0 0
        %5961 = vmatpush1.bf16.msra.mxu0 %v5946
        %5962 = vmatprep.subr.bf16.mxu0 0
        %5963 = vmatpush1.bf16.msra.mxu0 %v5947
        %5964 = vmatprep.subr.bf16.mxu0 0
        %5965 = vmatpush1.bf16.msra.mxu0 %v5948
        %5966 = vmatprep.subr.bf16.mxu0 0
        %5967 = vmatpush1.bf16.msra.mxu0 %v5949
        %5968 = vmatprep.subr.bf16.mxu0 0
        %5969 = vmatpush1.bf16.msra.mxu0 0
        %5970 = vmatprep.subr.bf16.mxu0 0
        %5971 = vmatpush1.bf16.msra.mxu0 0
        %5972 = vmatprep.subr.bf16.mxu0 0
        %5973 = vmatpush1.bf16.msra.mxu0 0
        %5974 = vmatprep.subr.bf16.mxu0 0
        %5975 = vmatpush1.bf16.msra.mxu0 0
        %5976 = vmatprep.subr.bf16.mxu0 0
        %5977 = vmatpush1.bf16.msra.mxu0 0
        %5978 = vmatprep.subr.bf16.mxu0 0
        %5979 = vmatpush1.bf16.msra.mxu0 0
        %5980 = vmatprep.subr.bf16.mxu0 0
        %5981 = vmatpush1.bf16.msra.mxu0 0
        %5982 = vmatprep.subr.bf16.mxu0 0
        %5983 = vmatpush1.bf16.msra.mxu0 0
        %5984 = vmatprep.subr.bf16.mxu0 0
        %5985 = vmatpush1.bf16.msra.mxu0 0
        %5986 = vmatprep.subr.bf16.mxu0 0
        %5987 = vmatpush1.bf16.msra.mxu0 0
        %5988 = vmatprep.subr.bf16.mxu0 0
        %5989 = vmatpush1.bf16.msra.mxu0 0
        %5990 = vmatprep.mubr.bf16.mxu0 0
        %5991 = vmatmul.mubr.bf16.gmra.mrb[0].mxu0 %v5956
        %v5992 = vpop.f32.mrb[0].mxu0
        %v5993 = vadd.f32 0.0, %v5992
        %v5994 = vpop.f32.mrb[0].mxu0
        %v5995 = vpop.f32.mrb[0].mxu0
        %v5996 = vpop.f32.mrb[0].mxu0
        %5997 = vdwg.mxu0
        %v5998 = vadd.f32 %v5868, %v5993
        %s5999 = scalar_lea.vmem %s9, 16
        %v6000 = vld [vmem:[%s5999] sm:$0xf]
        %v6002 = vsel %vm5481, %v6000, 0
        %6004 = vmatprep.subr.bf16.mxu0 0
        %6005 = vmatpush1.bf16.msra.mxu0 %v5476
        %6006 = vmatprep.subr.bf16.mxu0 0
        %6007 = vmatpush1.bf16.msra.mxu0 %v5477
        %6008 = vmatprep.subr.bf16.mxu0 0
        %6009 = vmatpush1.bf16.msra.mxu0 %v5478
        %6010 = vmatprep.subr.bf16.mxu0 0
        %6011 = vmatpush1.bf16.msra.mxu0 %v5479
        %6012 = vmatprep.subr.bf16.mxu0 0
        %6013 = vmatpush1.bf16.msra.mxu0 0
        %6014 = vmatprep.subr.bf16.mxu0 0
        %6015 = vmatpush1.bf16.msra.mxu0 0
        %6016 = vmatprep.subr.bf16.mxu0 0
        %6017 = vmatpush1.bf16.msra.mxu0 0
        %6018 = vmatprep.subr.bf16.mxu0 0
        %6019 = vmatpush1.bf16.msra.mxu0 0
        %6020 = vmatprep.subr.bf16.mxu0 0
        %6021 = vmatpush1.bf16.msra.mxu0 0
        %6022 = vmatprep.subr.bf16.mxu0 0
        %6023 = vmatpush1.bf16.msra.mxu0 0
        %6024 = vmatprep.subr.bf16.mxu0 0
        %6025 = vmatpush1.bf16.msra.mxu0 0
        %6026 = vmatprep.subr.bf16.mxu0 0
        %6027 = vmatpush1.bf16.msra.mxu0 0
        %6028 = vmatprep.subr.bf16.mxu0 0
        %6029 = vmatpush1.bf16.msra.mxu0 0
        %6030 = vmatprep.subr.bf16.mxu0 0
        %6031 = vmatpush1.bf16.msra.mxu0 0
        %6032 = vmatprep.subr.bf16.mxu0 0
        %6033 = vmatpush1.bf16.msra.mxu0 0
        %6034 = vmatprep.subr.bf16.mxu0 0
        %6035 = vmatpush1.bf16.msra.mxu0 0
        %6036 = vmatprep.mubr.bf16.mxu0 0
        %6037 = vmatmul.mubr.bf16.gmra.mrb[0].mxu0 %v6002
        %v6038 = vpop.f32.mrb[0].mxu0
        %v6039 = vadd.f32 0.0, %v6038
        %v6040 = vpop.f32.mrb[0].mxu0
        %v6041 = vpop.f32.mrb[0].mxu0
        %v6042 = vpop.f32.mrb[0].mxu0
        %6043 = vdwg.mxu0
        %v6044 = vpack.c.bf16 %v6039, %v6039
        %v6045 = vld [vmem:[%s10 + $0xa0] sm:$0xf]
        %v6046 = vld [vmem:[%s10 + $0xa4] sm:$0xf]
        %v6047 = vld [vmem:[%s10 + $0xa8] sm:$0xf]
        %v6048 = vld [vmem:[%s10 + $0xac] sm:$0xf]
        %v6049 = vld [vmem:[%s10 + $0xb0] sm:$0xf]
        %v6050 = vld [vmem:[%s10 + $0xb4] sm:$0xf]
        %v6051 = vld [vmem:[%s10 + $0xb8] sm:$0xf]
        %v6052 = vld [vmem:[%s10 + $0xbc] sm:$0xf]
        %v6053 = vld [vmem:[%s10 + $0xc0] sm:$0xf]
        %v6054 = vld [vmem:[%s10 + $0xc4] sm:$0xf]
        %v6065 = vunpack.c.l.b16 %v6045
        %v6066 = vunpack.c.l.b16 %v6046
        %v6067 = vunpack.c.l.b16 %v6047
        %v6068 = vunpack.c.l.b16 %v6048
        %v6069 = vunpack.c.l.b16 %v6049
        %v6070 = vunpack.c.l.b16 %v6050
        %v6071 = vunpack.c.l.b16 %v6051
        %v6072 = vunpack.c.l.b16 %v6052
        %v6073 = vunpack.c.l.b16 %v6053
        %v6074 = vunpack.c.l.b16 %v6054
        %v6075 = vpack.c.b16 %v6066, %v6065
        %v6076 = vpack.c.b16 %v6068, %v6067
        %v6077 = vpack.c.b16 %v6070, %v6069
        %v6078 = vpack.c.b16 %v6072, %v6071
        %v6079 = vpack.c.b16 %v6074, %v6073
        %v6086 = vsel %vm5622, %v6044, 0
        %6088 = vmatprep.subr.bf16.mxu0 0
        %6089 = vmatpush1.bf16.msra.mxu0 %v6075
        %6090 = vmatprep.subr.bf16.mxu0 0
        %6091 = vmatpush1.bf16.msra.mxu0 %v6076
        %6092 = vmatprep.subr.bf16.mxu0 0
        %6093 = vmatpush1.bf16.msra.mxu0 %v6077
        %6094 = vmatprep.subr.bf16.mxu0 0
        %6095 = vmatpush1.bf16.msra.mxu0 %v6078
        %6096 = vmatprep.subr.bf16.mxu0 0
        %6097 = vmatpush1.bf16.msra.mxu0 %v6079
        %6098 = vmatprep.subr.bf16.mxu0 0
        %6099 = vmatpush1.bf16.msra.mxu0 0
        %6100 = vmatprep.subr.bf16.mxu0 0
        %6101 = vmatpush1.bf16.msra.mxu0 0
        %6102 = vmatprep.subr.bf16.mxu0 0
        %6103 = vmatpush1.bf16.msra.mxu0 0
        %6104 = vmatprep.subr.bf16.mxu0 0
        %6105 = vmatpush1.bf16.msra.mxu0 0
        %6106 = vmatprep.subr.bf16.mxu0 0
        %6107 = vmatpush1.bf16.msra.mxu0 0
        %6108 = vmatprep.subr.bf16.mxu0 0
        %6109 = vmatpush1.bf16.msra.mxu0 0
        %6110 = vmatprep.subr.bf16.mxu0 0
        %6111 = vmatpush1.bf16.msra.mxu0 0
        %6112 = vmatprep.subr.bf16.mxu0 0
        %6113 = vmatpush1.bf16.msra.mxu0 0
        %6114 = vmatprep.subr.bf16.mxu0 0
        %6115 = vmatpush1.bf16.msra.mxu0 0
        %6116 = vmatprep.subr.bf16.mxu0 0
        %6117 = vmatpush1.bf16.msra.mxu0 0
        %6118 = vmatprep.subr.bf16.mxu0 0
        %6119 = vmatpush1.bf16.msra.mxu0 0
        %6120 = vmatprep.mubr.bf16.mxu0 0
        %6121 = vmatmul.mubr.bf16.gmra.mrb[0].mxu0 %v6086
        %v6122 = vpop.f32.mrb[0].mxu0
        %v6123 = vadd.f32 0.0, %v6122
        %v6124 = vpop.f32.mrb[0].mxu0
        %v6125 = vpop.f32.mrb[0].mxu0
        %v6126 = vpop.f32.mrb[0].mxu0
        %6127 = vdwg.mxu0
        %v6128 = vadd.f32 %v5998, %v6123
        %v6129 = vld [vmem:[%s11] sm:$0x1]
        %v6131 = vlaneseq
        %v6132 = vshrl.u32 %v6131, 7
        %v6133 = vsub.s32 0, %v6132
        %v6134 = vrot.slane %v6129, %v6133
        %v6136 = vadd.f32 %v6128, %v6134
        %v6137 = vmax.f32 %v6136, 0.0
        %v6138 = vpack.c.bf16 %v6137, %v6137
        %v6139 = vld [vmem:[%s12] sm:$0xf]
        %v6140 = vld [vmem:[%s12 + $0x4] sm:$0xf]
        %v6141 = vld [vmem:[%s12 + $0x8] sm:$0xf]
        %v6142 = vld [vmem:[%s12 + $0xc] sm:$0xf]
        %v6143 = vld [vmem:[%s12 + $0x10] sm:$0xf]
        %v6144 = vld [vmem:[%s12 + $0x14] sm:$0xf]
        %v6145 = vld [vmem:[%s12 + $0x18] sm:$0xf]
        %v6146 = vld [vmem:[%s12 + $0x1c] sm:$0xf]
        %v6147 = vld [vmem:[%s12 + $0x20] sm:$0xf]
        %v6148 = vld [vmem:[%s12 + $0x24] sm:$0xf]
        %v6149 = vld [vmem:[%s12 + $0x28] sm:$0xf]
        %v6150 = vld [vmem:[%s12 + $0x2c] sm:$0xf]
        %v6151 = vld [vmem:[%s12 + $0x30] sm:$0xf]
        %v6152 = vld [vmem:[%s12 + $0x34] sm:$0xf]
        %v6153 = vld [vmem:[%s12 + $0x38] sm:$0xf]
        %v6154 = vld [vmem:[%s12 + $0x3c] sm:$0xf]
        %v6155 = vld [vmem:[%s13] sm:$0x1]
        %v6157 = vlaneseq
        %v6158 = vshrl.u32 %v6157, 7
        %v6159 = vsub.s32 0, %v6158
        %v6160 = vrot.slane %v6155, %v6159
        %v6178 = vunpack.c.l.b16 %v6139
        %v6179 = vunpack.c.l.b16 %v6140
        %v6180 = vunpack.c.l.b16 %v6141
        %v6181 = vunpack.c.l.b16 %v6142
        %v6182 = vunpack.c.l.b16 %v6143
        %v6183 = vunpack.c.l.b16 %v6144
        %v6184 = vunpack.c.l.b16 %v6145
        %v6185 = vunpack.c.l.b16 %v6146
        %v6186 = vunpack.c.l.b16 %v6147
        %v6187 = vunpack.c.l.b16 %v6148
        %v6188 = vunpack.c.l.b16 %v6149
        %v6189 = vunpack.c.l.b16 %v6150
        %v6190 = vunpack.c.l.b16 %v6151
        %v6191 = vunpack.c.l.b16 %v6152
        %v6192 = vunpack.c.l.b16 %v6153
        %v6193 = vunpack.c.l.b16 %v6154
        %v6194 = vpack.c.b16 %v6179, %v6178
        %v6195 = vpack.c.b16 %v6181, %v6180
        %v6196 = vpack.c.b16 %v6183, %v6182
        %v6197 = vpack.c.b16 %v6185, %v6184
        %v6198 = vpack.c.b16 %v6187, %v6186
        %v6199 = vpack.c.b16 %v6189, %v6188
        %v6200 = vpack.c.b16 %v6191, %v6190
        %v6201 = vpack.c.b16 %v6193, %v6192
        %6210 = vmatprep.subr.bf16.mxu0 0
        %6211 = vmatpush1.bf16.msra.mxu0 %v6194
        %6212 = vmatprep.subr.bf16.mxu0 0
        %6213 = vmatpush1.bf16.msra.mxu0 %v6195
        %6214 = vmatprep.subr.bf16.mxu0 0
        %6215 = vmatpush1.bf16.msra.mxu0 %v6196
        %6216 = vmatprep.subr.bf16.mxu0 0
        %6217 = vmatpush1.bf16.msra.mxu0 %v6197
        %6218 = vmatprep.subr.bf16.mxu0 0
        %6219 = vmatpush1.bf16.msra.mxu0 %v6198
        %6220 = vmatprep.subr.bf16.mxu0 0
        %6221 = vmatpush1.bf16.msra.mxu0 %v6199
        %6222 = vmatprep.subr.bf16.mxu0 0
        %6223 = vmatpush1.bf16.msra.mxu0 %v6200
        %6224 = vmatprep.subr.bf16.mxu0 0
        %6225 = vmatpush1.bf16.msra.mxu0 %v6201
        %6226 = vmatprep.subr.bf16.mxu0 0
        %6227 = vmatpush1.bf16.msra.mxu0 0
        %6228 = vmatprep.subr.bf16.mxu0 0
        %6229 = vmatpush1.bf16.msra.mxu0 0
        %6230 = vmatprep.subr.bf16.mxu0 0
        %6231 = vmatpush1.bf16.msra.mxu0 0
        %6232 = vmatprep.subr.bf16.mxu0 0
        %6233 = vmatpush1.bf16.msra.mxu0 0
        %6234 = vmatprep.subr.bf16.mxu0 0
        %6235 = vmatpush1.bf16.msra.mxu0 0
        %6236 = vmatprep.subr.bf16.mxu0 0
        %6237 = vmatpush1.bf16.msra.mxu0 0
        %6238 = vmatprep.subr.bf16.mxu0 0
        %6239 = vmatpush1.bf16.msra.mxu0 0
        %6240 = vmatprep.subr.bf16.mxu0 0
        %6241 = vmatpush1.bf16.msra.mxu0 0
        %6242 = vmatprep.mubr.bf16.mxu0 0
        %6243 = vmatmul.mubr.bf16.gmra.mrb[0].mxu0 %v6138
        %v6244 = vpop.f32.mrb[0].mxu0
        %v6245 = vadd.f32 %v6160, %v6244
        %v6246 = vpop.f32.mrb[0].mxu0
        %v6247 = vpop.f32.mrb[0].mxu0
        %v6248 = vpop.f32.mrb[0].mxu0
        %6249 = vdwg.mxu0
        %v6250 = vmax.f32 %v6245, 0.0
        %v6251 = vpack.c.bf16 %v6250, %v6250
        %v6252 = vld [vmem:[%s14] sm:$0xf]
        %v6253 = vld [vmem:[%s14 + $0x4] sm:$0xf]
        %v6254 = vld [vmem:[%s14 + $0x8] sm:$0xf]
        %v6255 = vld [vmem:[%s14 + $0xc] sm:$0xf]
        %v6256 = vld [vmem:[%s14 + $0x10] sm:$0xf]
        %v6257 = vld [vmem:[%s14 + $0x14] sm:$0xf]
        %v6258 = vld [vmem:[%s14 + $0x18] sm:$0xf]
        %v6259 = vld [vmem:[%s14 + $0x1c] sm:$0xf]
        %v6260 = vld [vmem:[%s14 + $0x20] sm:$0xf]
        %v6261 = vld [vmem:[%s14 + $0x24] sm:$0xf]
        %v6262 = vld [vmem:[%s14 + $0x28] sm:$0xf]
        %v6263 = vld [vmem:[%s14 + $0x2c] sm:$0xf]
        %v6264 = vld [vmem:[%s14 + $0x30] sm:$0xf]
        %v6265 = vld [vmem:[%s14 + $0x34] sm:$0xf]
        %v6266 = vld [vmem:[%s14 + $0x38] sm:$0xf]
        %v6267 = vld [vmem:[%s14 + $0x3c] sm:$0xf]
        %v6268 = vld [vmem:[%s15] sm:$0x1]
        %v6270 = vlaneseq
        %v6271 = vshrl.u32 %v6270, 7
        %v6272 = vsub.s32 0, %v6271
        %v6273 = vrot.slane %v6268, %v6272
        %v6291 = vunpack.c.l.b16 %v6252
        %v6292 = vunpack.c.l.b16 %v6253
        %v6293 = vunpack.c.l.b16 %v6254
        %v6294 = vunpack.c.l.b16 %v6255
        %v6295 = vunpack.c.l.b16 %v6256
        %v6296 = vunpack.c.l.b16 %v6257
        %v6297 = vunpack.c.l.b16 %v6258
        %v6298 = vunpack.c.l.b16 %v6259
        %v6299 = vunpack.c.l.b16 %v6260
        %v6300 = vunpack.c.l.b16 %v6261
        %v6301 = vunpack.c.l.b16 %v6262
        %v6302 = vunpack.c.l.b16 %v6263
        %v6303 = vunpack.c.l.b16 %v6264
        %v6304 = vunpack.c.l.b16 %v6265
        %v6305 = vunpack.c.l.b16 %v6266
        %v6306 = vunpack.c.l.b16 %v6267
        %v6307 = vpack.c.b16 %v6292, %v6291
        %v6308 = vpack.c.b16 %v6294, %v6293
        %v6309 = vpack.c.b16 %v6296, %v6295
        %v6310 = vpack.c.b16 %v6298, %v6297
        %v6311 = vpack.c.b16 %v6300, %v6299
        %v6312 = vpack.c.b16 %v6302, %v6301
        %v6313 = vpack.c.b16 %v6304, %v6303
        %v6314 = vpack.c.b16 %v6306, %v6305
        %6323 = vmatprep.subr.bf16.mxu0 0
        %6324 = vmatpush1.bf16.msra.mxu0 %v6307
        %6325 = vmatprep.subr.bf16.mxu0 0
        %6326 = vmatpush1.bf16.msra.mxu0 %v6308
        %6327 = vmatprep.subr.bf16.mxu0 0
        %6328 = vmatpush1.bf16.msra.mxu0 %v6309
        %6329 = vmatprep.subr.bf16.mxu0 0
        %6330 = vmatpush1.bf16.msra.mxu0 %v6310
        %6331 = vmatprep.subr.bf16.mxu0 0
        %6332 = vmatpush1.bf16.msra.mxu0 %v6311
        %6333 = vmatprep.subr.bf16.mxu0 0
        %6334 = vmatpush1.bf16.msra.mxu0 %v6312
        %6335 = vmatprep.subr.bf16.mxu0 0
        %6336 = vmatpush1.bf16.msra.mxu0 %v6313
        %6337 = vmatprep.subr.bf16.mxu0 0
        %6338 = vmatpush1.bf16.msra.mxu0 %v6314
        %6339 = vmatprep.subr.bf16.mxu0 0
        %6340 = vmatpush1.bf16.msra.mxu0 0
        %6341 = vmatprep.subr.bf16.mxu0 0
        %6342 = vmatpush1.bf16.msra.mxu0 0
        %6343 = vmatprep.subr.bf16.mxu0 0
        %6344 = vmatpush1.bf16.msra.mxu0 0
        %6345 = vmatprep.subr.bf16.mxu0 0
        %6346 = vmatpush1.bf16.msra.mxu0 0
        %6347 = vmatprep.subr.bf16.mxu0 0
        %6348 = vmatpush1.bf16.msra.mxu0 0
        %6349 = vmatprep.subr.bf16.mxu0 0
        %6350 = vmatpush1.bf16.msra.mxu0 0
        %6351 = vmatprep.subr.bf16.mxu0 0
        %6352 = vmatpush1.bf16.msra.mxu0 0
        %6353 = vmatprep.subr.bf16.mxu0 0
        %6354 = vmatpush1.bf16.msra.mxu0 0
        %6355 = vmatprep.mubr.bf16.mxu0 0
        %6356 = vmatmul.mubr.bf16.gmra.mrb[0].mxu0 %v6251
        %v6357 = vpop.f32.mrb[0].mxu0
        %v6358 = vadd.f32 %v6273, %v6357
        %v6359 = vpop.f32.mrb[0].mxu0
        %v6360 = vpop.f32.mrb[0].mxu0
        %v6361 = vpop.f32.mrb[0].mxu0
        %6362 = vdwg.mxu0
        %6363 = vmax.xlane.f32.xlu0 %v6358
        %v6364 = vpop.xlane.xlu0 %6363
        %v6365 = vsub.f32 %v6358, %v6364
        %v6366 = vmul.f32 %v6365, 1.442695
        %v6367 = vpow.pop %v6366
        %6368 = vadd.xlane.f32.xlu0 %v6367
        %v6369 = vpop.xlane.xlu0 %6368
        %v6370 = vrcp.pop %v6369
        %v6371 = vmul.f32 %v6367, %v6370
        %6372 = vst [vmem:[%s515] sm:$0xff] %v6371
        %s6373 = sand.u32 %s379, 1
        %s6374 = scalar_lea.sflag [#allocation3], %s6373
        %s6375 = sand.u32 %s379, 1
        %s6376 = smul.addr %s6375, 8
        %s6377 = scalar_lea.vmem [#allocation2], %s6376
        // Predicated region
        $region85: #{lenet5_predict.1} parent=83 // pred_check
          %p6378 = pneg %p389
        $region86: #{lenet5_predict.1} parent=83 // pred_check_branch
          %6380 = sbr.rel (%p6378) target = $region88
        $region87: #{lenet5_predict.1} parent=83 // pred_region
          %s6382 = ssub.s32 128, 128
          %6383 = vsyncadd %s6374, %s6382
          %s6384 = smul.addr %s30, 128
          %s6385 = scalar_lea.hbm %s16, %s6384
          %s6387 = sshll.u32 %s6377, 4
          %s6388 = int_to_ptr.vmem [resolvable:$true] %s6387
          %6390 = dma.vmem_to_hbm [thread:$0]  %s6388, 128, %s6385, %s6374
        $region88: #{lenet5_predict.1} parent=83 // pred_fallthru
          _
      $region84: #{lenet5_predict.1} parent=5 // pred_fallthru
        _
      %p6391 = scmp.le.s32.totalorder 2, %s25
      // Predicated region
      $region89: #{lenet5_predict.1} parent=5 // pred_check
        %p6392 = pneg %p6391
      $region90: #{lenet5_predict.1} parent=5 // pred_check_branch
        %6394 = sbr.rel (%p6392) target = $region92
      $region91: #{lenet5_predict.1} parent=5 // pred_region
        %s6395 = ssub.s32 %s25, 2
        // Predicated region
        $region93: #{lenet5_predict.1} parent=91 // pred_check
          %p6396 = pneg %p395
        $region94: #{lenet5_predict.1} parent=91 // pred_check_branch
          %6398 = sbr.rel (%p6396) target = $region96
        $region95: #{lenet5_predict.1} parent=91 // pred_region
          %s6399 = sand.u32 %s380, 1
          %s6400 = scalar_lea.sflag [#allocation3], %s6399
          %s6401 = sand.u32 %s380, 1
          %s6402 = smul.addr %s6401, 8
          %s6403 = scalar_lea.vmem [#allocation2], %s6402
          %6404 = dma.done %s6400, 128
        $region96: #{lenet5_predict.1} parent=91 // pred_fallthru
          _
      $region92: #{lenet5_predict.1} parent=5 // pred_fallthru
        _
    $region6: #{lenet5_predict.1} parent=1 // loop_footer
      %s29 = sadd.s32 1, %s25
    $region7: #{lenet5_predict.1} parent=1 // loop_footer_branch
      %24 = sbr.rel target = $region3
    $region8: #{lenet5_predict.1} parent=1 // loop_exit
      _
    %6405 = vsyncpa [#allocation3], 1
    %s6406 = scalar_lea.sflag [#allocation3], 1
    %6407 = vsyncpa %s6406, 1

</llo_original>
